<compile_context>
chip_gen: v5e
topology: v5e:2x2
jax: 0.10.0
libtpu: 0.0.40
codegen_flags: <defaults>
</compile_context>

<pallas_src>
import functools

import jax
import jax.numpy as jnp
from jax import lax
from jax.experimental import pallas as pl
from jax.experimental.pallas import tpu as pltpu


def _cdiv(a, b):
    return -(-a // b)


def _round_up(a, b):
    return _cdiv(a, b) * b


# ---------------------------------------------------------------------------
# Fused kernel: depth stride-1 gated residual layers + strided down-conv,
# all on one VMEM-resident, phase-packed activation tile.
# ---------------------------------------------------------------------------
def _fused_block_kernel(x_ref, xh_ref, w1_ref, b1_ref, wd_ref, bd_ref,
                        sc_ref, out_ref, *,
                        depth, e1, e_dc, scp, cp, u_tile, halo):
    # x_ref  : (1, s*Cp, U_TILE)          phase-packed input tile (packed time in lanes)
    # xh_ref : (1, s*Cp, 128)             aligned right-halo view of the same array
    # w1_ref : (depth*e1, 3*s*Cp, s*Cp)   per-layer per-shift weights
    #                                     rows = [filter | gate | identity one-hot]
    # b1_ref : (depth, 3*s*Cp, 1)
    # wd_ref : (e_dc, 3*Cp, s*Cp)         down-conv weights (identity folded in)
    # bd_ref : (3*Cp, 1)
    # sc_ref : (1, s*Cp, U_TILE)          phase-packed shortcut tile (output)
    # out_ref: (1, Cp, U_TILE)            down-conv output tile (lane = output time)
    f32 = jnp.float32
    prec = lax.Precision.HIGHEST   # fp32 contract precision: one-hot identity stays exact

    xh = xh_ref[0]
    cur = jnp.concatenate(
        [x_ref[0].astype(f32), xh[:, :halo].astype(f32)], axis=-1)   # (s*Cp, U+halo)

    # ---- depth x stride-1 gated residual layers (phase-packed form) ----
    for d in range(depth):
        width = cur.shape[1] - (e1 - 1)
        acc = None
        for e in range(e1):                    # accumulate lane-shifted MXU matmuls
            part = jnp.dot(w1_ref[d * e1 + e], cur[:, e:e + width],
                           preferred_element_type=f32, precision=prec)
            acc = part if acc is None else acc + part
        acc = acc + b1_ref[d]                                       # (3*s*Cp, width)
        cur = (jnp.tanh(acc[:scp]) * jax.nn.sigmoid(acc[scp:2 * scp])
               + acc[2 * scp:])                                     # (s*Cp, width)

    # cur is now the phase-packed shortcut; width == u_tile + e_dc - 1
    sc_ref[0] = cur[:, :u_tile].astype(sc_ref.dtype)

    # ---- strided down-conv (stride absorbed by the phase packing) ----
    acc = None
    for e in range(e_dc):
        part = jnp.dot(wd_ref[e], cur[:, e:e + u_tile],
                       preferred_element_type=f32, precision=prec)
        acc = part if acc is None else acc + part
    acc = acc + bd_ref[...]                                         # (3*Cp, U_TILE)
    out_ref[0] = (jnp.tanh(acc[:cp]) * jax.nn.sigmoid(acc[cp:2 * cp])
                  + acc[2 * cp:]).astype(out_ref.dtype)


# ---------------------------------------------------------------------------
# Wrapper-side, one-time weight packing (identity folded in as one-hot rows).
# ---------------------------------------------------------------------------
def _pack_stride1_weights(conv_params, c, cp, s, k, e1):
    depth = len(conv_params)
    scp = s * cp
    w = jnp.zeros((depth * e1, 3 * scp, scp), jnp.float32)
    b = jnp.zeros((depth, 3 * scp, 1), jnp.float32)
    eye = jnp.eye(cp, dtype=jnp.float32)
    for d, (wf, bf, wg, bg) in enumerate(conv_params):
        wf = jnp.pad(wf.astype(jnp.float32), ((0, cp - c), (0, cp - c), (0, 0)))
        wg = jnp.pad(wg.astype(jnp.float32), ((0, cp - c), (0, cp - c), (0, 0)))
        bf = jnp.pad(bf.astype(jnp.float32), (0, cp - c))
        bg = jnp.pad(bg.astype(jnp.float32), (0, cp - c))
        for p in range(s):                       # output phase
            for kk in range(k):                  # conv tap
                e, q = divmod(p + kk, s)         # packed shift / input phase
                w = w.at[d * e1 + e, p * cp:(p + 1) * cp,
                         q * cp:(q + 1) * cp].set(wf[:, :, kk])
                w = w.at[d * e1 + e, scp + p * cp:scp + (p + 1) * cp,
                         q * cp:(q + 1) * cp].set(wg[:, :, kk])
            e, q = divmod(p + k - 1, s)          # identity = x[:, :, K-1:] (crop front)
            w = w.at[d * e1 + e, 2 * scp + p * cp:2 * scp + (p + 1) * cp,
                     q * cp:(q + 1) * cp].set(eye)
            b = b.at[d, p * cp:(p + 1) * cp, 0].set(bf)
            b = b.at[d, scp + p * cp:scp + (p + 1) * cp, 0].set(bg)
    return w, b


def _pack_downconv_weights(down_params, c, cp, s, k, e_dc, p_id, q_id):
    scp = s * cp
    wf, bf, wg, bg = down_params
    wf = jnp.pad(wf.astype(jnp.float32), ((0, cp - c), (0, cp - c), (0, 0)))
    wg = jnp.pad(wg.astype(jnp.float32), ((0, cp - c), (0, cp - c), (0, 0)))
    bf = jnp.pad(bf.astype(jnp.float32), (0, cp - c))
    bg = jnp.pad(bg.astype(jnp.float32), (0, cp - c))
    w = jnp.zeros((e_dc, 3 * cp, scp), jnp.float32)
    for kk in range(k):
        e, q = divmod(kk, s)
        w = w.at[e, 0:cp, q * cp:(q + 1) * cp].set(wf[:, :, kk])
        w = w.at[e, cp:2 * cp, q * cp:(q + 1) * cp].set(wg[:, :, kk])
    # strided + front-cropped identity: identity[j] = shortcut[off_id + j*s]
    w = w.at[q_id, 2 * cp:3 * cp,
             p_id * cp:(p_id + 1) * cp].set(jnp.eye(cp, dtype=jnp.float32))
    b = jnp.zeros((3 * cp, 1), jnp.float32)
    b = b.at[0:cp, 0].set(bf)
    b = b.at[cp:2 * cp, 0].set(bg)
    return w, b


# ---------------------------------------------------------------------------
# Tile selection: largest 128-multiple packed-time tile under a VMEM budget
# (conservative so it also fits v7x's 32 MiB scoped / 64 MiB physical VMEM).
# ---------------------------------------------------------------------------
def _pick_u_tile(scp, cp, depth, e1, e_dc, halo, u_need, n_batch, *,
                 target=2048, vmem_budget_bytes=24 * 1024 * 1024):
    u_tile = 128
    for cand in (2048, 1024, 512, 256, 128):
        if cand > target:
            continue
        w0 = cand + halo
        words = (2 * scp * cand            # x main block (double buffered)
                 + 2 * scp * 128           # halo slab (double buffered)
                 + 2 * scp * cand          # shortcut output block (double buffered)
                 + 2 * cp * cand           # out block (double buffered)
                 + 4 * scp * w0            # live activations (cur + 3x acc rows)
                 + 3 * cp * cand           # down-conv accumulator
                 + depth * e1 * 3 * scp * scp
                 + e_dc * 3 * cp * scp)    # resident weights
        if words * 4 <= vmem_budget_bytes:
            u_tile = cand
            break
    u_tile = min(u_tile, _round_up(u_need, 128))
    num_tiles = _cdiv(u_need, u_tile)
    if n_batch == 1 and num_tiles == 1:
        # v7x has two TensorCores sharded over the "parallel" grid axes:
        # try to provide at least two work items.
        half = _round_up(_cdiv(u_need, 2), 128)
        if half < u_tile:
            u_tile = half
            num_tiles = _cdiv(u_need, u_tile)
    return u_tile, num_tiles


# ---------------------------------------------------------------------------
# DownsamplingBlock forward (standard mode, prev_features=None) -- one kernel.
# ---------------------------------------------------------------------------
def downsampling_block_forward(x_nct, conv_params, down_params, *,
                               kernel_size, stride, t_tile_target=2048):
    n, c, t = x_nct.shape
    k, s = kernel_size, stride
    depth = len(conv_params)
    assert s > 1 and k >= 2 and depth >= 1
    assert t >= depth * (k - 1) + k, "input too short for this block"

    cp = _round_up(c, 8)                 # sublane-granular channel padding
    scp = s * cp
    t_s = t - depth * (k - 1)            # shortcut length
    t_out = (t_s - k) // s + 1           # down-conv output length

    # down-conv identity: shortcut[:, :, (T_s-1) % 2 :: s], then Crop1d('front')
    off0 = (t_s - 1) % 2                 # module quirk: always % 2
    l_id = (t_s - 1 - off0) // s + 1
    crop_front = l_id - t_out
    assert crop_front >= 0
    off_id = off0 + crop_front * s       # identity[j] = shortcut[off_id + j*s]
    q_id, p_id = divmod(off_id, s)

    # phase-packed tap counts and right halo (in packed columns)
    e1 = (s + k - 2) // s + 1            # shifts per stride-1 layer
    e_dc = max((k - 1) // s, q_id) + 1   # shifts for the down-conv
    halo = depth * (e1 - 1) + (e_dc - 1)
    assert halo <= 128, "halo exceeds one 128-lane slab; enlarge the halo view"

    u_need = _cdiv(t_s, s)               # packed shortcut columns to produce
    u_tile, num_tiles = _pick_u_tile(scp, cp, depth, e1, e_dc, halo, u_need, n,
                                     target=t_tile_target)
    u_total = num_tiles * u_tile
    l_total = u_total + 128              # + one aligned 128-column halo slab

    # ---- one-time input prep: channel pad + phase pack (zero-padded tail) ----
    xp = jnp.pad(x_nct, ((0, 0), (0, cp - c), (0, l_total * s - t)))
    x_pp = (xp.reshape(n, cp, l_total, s)
              .transpose(0, 3, 1, 2)
              .reshape(n, scp, l_total))

    # ---- one-time weight prep (identity folded in as one-hot rows) ----
    w1, b1 = _pack_stride1_weights(conv_params, c, cp, s, k, e1)
    wd, bd = _pack_downconv_weights(down_params, c, cp, s, k, e_dc, p_id, q_id)

    kernel = functools.partial(_fused_block_kernel, depth=depth, e1=e1,
                               e_dc=e_dc, scp=scp, cp=cp, u_tile=u_tile,
                               halo=halo)
    r = u_tile // 128

    sc_pp, out_pad = pl.pallas_call(
        kernel,
        out_shape=(jax.ShapeDtypeStruct((n, scp, u_total), x_nct.dtype),
                   jax.ShapeDtypeStruct((n, cp, u_total), x_nct.dtype)),
        grid_spec=pltpu.PrefetchScalarGridSpec(
            num_scalar_prefetch=0,
            grid=(n, num_tiles),
            in_specs=[
                pl.BlockSpec((1, scp, u_tile), lambda b, i: (b, 0, i)),
                pl.BlockSpec((1, scp, 128), lambda b, i: (b, 0, (i + 1) * r)),
                pl.BlockSpec((depth * e1, 3 * scp, scp), lambda b, i: (0, 0, 0)),
                pl.BlockSpec((depth, 3 * scp, 1), lambda b, i: (0, 0, 0)),
                pl.BlockSpec((e_dc, 3 * cp, scp), lambda b, i: (0, 0, 0)),
                pl.BlockSpec((3 * cp, 1), lambda b, i: (0, 0)),
            ],
            out_specs=(
                pl.BlockSpec((1, scp, u_tile), lambda b, i: (b, 0, i)),
                pl.BlockSpec((1, cp, u_tile), lambda b, i: (b, 0, i)),
            ),
        ),
        compiler_params=pltpu.CompilerParams(
            dimension_semantics=("parallel", "parallel"),
            vmem_limit_bytes=32 * 1024 * 1024),
    )(x_pp, x_pp, w1, b1, wd, bd)

    # ---- single un-pack + crop at the very end of the block ----
    shortcut = (sc_pp.reshape(n, s, cp, u_total)
                     .transpose(0, 2, 3, 1)
                     .reshape(n, cp, u_total * s))[:, :c, :t_s]
    out = out_pad[:, :c, :t_out]
    return out, shortcut


# ---------------------------------------------------------------------------
# Pure-JAX reference (matches the torch module semantics).
# ---------------------------------------------------------------------------
def _residual_ref(x, wf, bf, wg, bg, stride):
    dn = ("NCH", "OIH", "NCH")
    prec = lax.Precision.HIGHEST
    f = lax.conv_general_dilated(x, wf, (stride,), "VALID",
                                 dimension_numbers=dn, precision=prec)
    g = lax.conv_general_dilated(x, wg, (stride,), "VALID",
                                 dimension_numbers=dn, precision=prec)
    residual = (jnp.tanh(f + bf[None, :, None])
                * jax.nn.sigmoid(g + bg[None, :, None]))
    if stride > 1:
        identity = x[:, :, (x.shape[2] - 1) % 2::stride]
    else:
        identity = x
    identity = identity[:, :, identity.shape[2] - residual.shape[2]:]  # Crop1d('front')
    return identity + residual


def _downsampling_block_ref(x, conv_params, down_params, stride):
    shortcut = x
    for (wf, bf, wg, bg) in conv_params:
        shortcut = _residual_ref(shortcut, wf, bf, wg, bg, 1)
    out = _residual_ref(shortcut, *down_params, stride)
    return out, shortcut


if __name__ == "__main__":
    N, C, T, K, STRIDE, DEPTH = 2, 4, 16, 3, 2, 2
    key = jax.random.PRNGKey(0)
    keys = jax.random.split(key, 1 + 4 * (DEPTH + 1))
    x = jax.random.normal(keys[0], (N, C, T), dtype=jnp.float32)

    def make_params(ks):
        wf = 0.3 * jax.random.normal(ks[0], (C, C, K), dtype=jnp.float32)
        bf = 0.1 * jax.random.normal(ks[1], (C,), dtype=jnp.float32)
        wg = 0.3 * jax.random.normal(ks[2], (C, C, K), dtype=jnp.float32)
        bg = 0.1 * jax.random.normal(ks[3], (C,), dtype=jnp.float32)
        return (wf, bf, wg, bg)

    conv_params = [make_params(keys[1 + 4 * d: 1 + 4 * (d + 1)]) for d in range(DEPTH)]
    down_params = make_params(keys[1 + 4 * DEPTH: 1 + 4 * (DEPTH + 1)])

    out, shortcut = downsampling_block_forward(
        x, conv_params, down_params, kernel_size=K, stride=STRIDE)
    out = jax.block_until_ready(out)
    shortcut = jax.block_until_ready(shortcut)

    ref_out, ref_short = _downsampling_block_ref(x, conv_params, down_params, STRIDE)
    ref_out = jax.block_until_ready(ref_out)
    ref_short = jax.block_until_ready(ref_short)

    # shortcut: two stride-1 layers -> T = 16 - 2*(K-1) = 12
    # out     : strided downconv    -> T = (12 - K)//STRIDE + 1 = 5
    assert shortcut.shape == (N, C, T - DEPTH * (K - 1)), shortcut.shape
    assert out.shape == (N, C, (T - DEPTH * (K - 1) - K) // STRIDE + 1), out.shape
    assert jnp.allclose(shortcut, ref_short, atol=1e-3, rtol=1e-3), "shortcut mismatch"
    assert jnp.allclose(out, ref_out, atol=1e-3, rtol=1e-3), "out mismatch"

    print("KERNEL_OK")
</pallas_src>

<mosaic_0001>
module attributes {stable_mosaic.version = 11 : i64} {
  func.func @_fused_block_kernel(%arg0: i32, %arg1: i32, %arg2: memref<1x16x128xf32, #tpu.memory_space<vmem>>, %arg3: memref<1x16x128xf32, #tpu.memory_space<vmem>>, %arg4: memref<4x48x16xf32, #tpu.memory_space<vmem>>, %arg5: memref<2x48x1xf32, #tpu.memory_space<vmem>>, %arg6: memref<2x24x16xf32, #tpu.memory_space<vmem>>, %arg7: memref<24x1xf32, #tpu.memory_space<vmem>>, %arg8: memref<1x16x128xf32, #tpu.memory_space<vmem>>, %arg9: memref<1x8x128xf32, #tpu.memory_space<vmem>>) attributes {dimension_semantics = [#tpu.dimension_semantics<parallel>, #tpu.dimension_semantics<parallel>], iteration_bounds = array<i64: 2, 1>, scalar_prefetch = 0 : i64, scratch_operands = 0 : i64, tpu.core_type = #tpu.core_type<tc>, window_params = [{transform_indices = @transform_0, window_bounds = array<i64: 1, 16, 128>}, {transform_indices = @transform_1, window_bounds = array<i64: 1, 16, 128>}, {pipeline_mode = #tpu.pipeline_mode<synchronous>, transform_indices = @transform_2, window_bounds = array<i64: 4, 48, 16>}, {pipeline_mode = #tpu.pipeline_mode<synchronous>, transform_indices = @transform_3, window_bounds = array<i64: 2, 48, 1>}, {pipeline_mode = #tpu.pipeline_mode<synchronous>, transform_indices = @transform_4, window_bounds = array<i64: 2, 24, 16>}, {pipeline_mode = #tpu.pipeline_mode<synchronous>, transform_indices = @transform_5, window_bounds = array<i64: 24, 1>}, {transform_indices = @transform_6, window_bounds = array<i64: 1, 16, 128>}, {transform_indices = @transform_7, window_bounds = array<i64: 1, 8, 128>}]} {
    %c0 = arith.constant 0 : index
    %c0_0 = arith.constant 0 : index
    %c0_1 = arith.constant 0 : index
    %0 = vector.load %arg3[%c0, %c0_0, %c0_1] : memref<1x16x128xf32, #tpu.memory_space<vmem>>, vector<1x16x128xf32>
    %1 = vector.shape_cast %0 : vector<1x16x128xf32> to vector<16x128xf32>
    %c0_2 = arith.constant 0 : index
    %c0_3 = arith.constant 0 : index
    %c0_4 = arith.constant 0 : index
    %2 = vector.load %arg2[%c0_2, %c0_3, %c0_4] : memref<1x16x128xf32, #tpu.memory_space<vmem>>, vector<1x16x128xf32>
    %3 = vector.shape_cast %2 : vector<1x16x128xf32> to vector<16x128xf32>
    %4 = vector.extract_strided_slice %1 {offsets = [0, 0], sizes = [16, 3], strides = [1, 1]} : vector<16x128xf32> to vector<16x3xf32>
    %5 = tpu.concatenate %3, %4 in 1 : vector<16x128xf32>, vector<16x3xf32> -> vector<16x131xf32>
    %c0_5 = arith.constant 0 : index
    %c0_6 = arith.constant 0 : index
    %c0_7 = arith.constant 0 : index
    %6 = vector.load %arg4[%c0_5, %c0_6, %c0_7] : memref<4x48x16xf32, #tpu.memory_space<vmem>>, vector<1x48x16xf32>
    %7 = vector.shape_cast %6 : vector<1x48x16xf32> to vector<48x16xf32>
    %8 = vector.extract_strided_slice %5 {offsets = [0, 0], sizes = [16, 130], strides = [1, 1]} : vector<16x131xf32> to vector<16x130xf32>
    %cst = arith.constant dense<0.000000e+00> : vector<48x130xf32>
    %9 = tpu.matmul %7, %8, %cst {dimension_numbers = #tpu.dot_dimension_numbers<[1], [0], [0], [1], [0, 0, 1, 1], [], []>, precision = #tpu.contract_precision<fp32>} : vector<48x16xf32>, vector<16x130xf32>, vector<48x130xf32> -> vector<48x130xf32>
    %c1 = arith.constant 1 : index
    %c0_8 = arith.constant 0 : index
    %c0_9 = arith.constant 0 : index
    %10 = vector.load %arg4[%c1, %c0_8, %c0_9] : memref<4x48x16xf32, #tpu.memory_space<vmem>>, vector<1x48x16xf32>
    %11 = vector.shape_cast %10 : vector<1x48x16xf32> to vector<48x16xf32>
    %12 = vector.extract_strided_slice %5 {offsets = [0, 1], sizes = [16, 130], strides = [1, 1]} : vector<16x131xf32> to vector<16x130xf32>
    %cst_10 = arith.constant dense<0.000000e+00> : vector<48x130xf32>
    %13 = tpu.matmul %11, %12, %cst_10 {dimension_numbers = #tpu.dot_dimension_numbers<[1], [0], [0], [1], [0, 0, 1, 1], [], []>, precision = #tpu.contract_precision<fp32>} : vector<48x16xf32>, vector<16x130xf32>, vector<48x130xf32> -> vector<48x130xf32>
    %14 = arith.addf %9, %13 : vector<48x130xf32>
    %c0_11 = arith.constant 0 : index
    %c0_12 = arith.constant 0 : index
    %c0_13 = arith.constant 0 : index
    %15 = vector.load %arg5[%c0_11, %c0_12, %c0_13] : memref<2x48x1xf32, #tpu.memory_space<vmem>>, vector<1x48x1xf32>
    %16 = vector.shape_cast %15 : vector<1x48x1xf32> to vector<48x1xf32>
    %17 = vector.broadcast %16 : vector<48x1xf32> to vector<48x130xf32>
    %18 = arith.addf %14, %17 : vector<48x130xf32>
    %19 = vector.extract_strided_slice %18 {offsets = [0, 0], sizes = [16, 130], strides = [1, 1]} : vector<48x130xf32> to vector<16x130xf32>
    %20 = math.tanh %19 : vector<16x130xf32>
    %21 = vector.extract_strided_slice %18 {offsets = [16, 0], sizes = [16, 130], strides = [1, 1]} : vector<48x130xf32> to vector<16x130xf32>
    %22 = arith.negf %21 : vector<16x130xf32>
    %23 = math.exp %22 : vector<16x130xf32>
    %cst_14 = arith.constant 1.000000e+00 : f32
    %24 = vector.broadcast %cst_14 : f32 to vector<16x130xf32>
    %25 = arith.addf %24, %23 : vector<16x130xf32>
    %26 = arith.divf %24, %25 : vector<16x130xf32>
    %27 = arith.mulf %20, %26 : vector<16x130xf32>
    %28 = vector.extract_strided_slice %18 {offsets = [32, 0], sizes = [16, 130], strides = [1, 1]} : vector<48x130xf32> to vector<16x130xf32>
    %29 = arith.addf %27, %28 : vector<16x130xf32>
    %c2 = arith.constant 2 : index
    %c0_15 = arith.constant 0 : index
    %c0_16 = arith.constant 0 : index
    %30 = vector.load %arg4[%c2, %c0_15, %c0_16] : memref<4x48x16xf32, #tpu.memory_space<vmem>>, vector<1x48x16xf32>
    %31 = vector.shape_cast %30 : vector<1x48x16xf32> to vector<48x16xf32>
    %32 = vector.extract_strided_slice %29 {offsets = [0, 0], sizes = [16, 129], strides = [1, 1]} : vector<16x130xf32> to vector<16x129xf32>
    %cst_17 = arith.constant dense<0.000000e+00> : vector<48x129xf32>
    %33 = tpu.matmul %31, %32, %cst_17 {dimension_numbers = #tpu.dot_dimension_numbers<[1], [0], [0], [1], [0, 0, 1, 1], [], []>, precision = #tpu.contract_precision<fp32>} : vector<48x16xf32>, vector<16x129xf32>, vector<48x129xf32> -> vector<48x129xf32>
    %c3 = arith.constant 3 : index
    %c0_18 = arith.constant 0 : index
    %c0_19 = arith.constant 0 : index
    %34 = vector.load %arg4[%c3, %c0_18, %c0_19] : memref<4x48x16xf32, #tpu.memory_space<vmem>>, vector<1x48x16xf32>
    %35 = vector.shape_cast %34 : vector<1x48x16xf32> to vector<48x16xf32>
    %36 = vector.extract_strided_slice %29 {offsets = [0, 1], sizes = [16, 129], strides = [1, 1]} : vector<16x130xf32> to vector<16x129xf32>
    %cst_20 = arith.constant dense<0.000000e+00> : vector<48x129xf32>
    %37 = tpu.matmul %35, %36, %cst_20 {dimension_numbers = #tpu.dot_dimension_numbers<[1], [0], [0], [1], [0, 0, 1, 1], [], []>, precision = #tpu.contract_precision<fp32>} : vector<48x16xf32>, vector<16x129xf32>, vector<48x129xf32> -> vector<48x129xf32>
    %38 = arith.addf %33, %37 : vector<48x129xf32>
    %c1_21 = arith.constant 1 : index
    %c0_22 = arith.constant 0 : index
    %c0_23 = arith.constant 0 : index
    %39 = vector.load %arg5[%c1_21, %c0_22, %c0_23] : memref<2x48x1xf32, #tpu.memory_space<vmem>>, vector<1x48x1xf32>
    %40 = vector.shape_cast %39 : vector<1x48x1xf32> to vector<48x1xf32>
    %41 = vector.broadcast %40 : vector<48x1xf32> to vector<48x129xf32>
    %42 = arith.addf %38, %41 : vector<48x129xf32>
    %43 = vector.extract_strided_slice %42 {offsets = [0, 0], sizes = [16, 129], strides = [1, 1]} : vector<48x129xf32> to vector<16x129xf32>
    %44 = math.tanh %43 : vector<16x129xf32>
    %45 = vector.extract_strided_slice %42 {offsets = [16, 0], sizes = [16, 129], strides = [1, 1]} : vector<48x129xf32> to vector<16x129xf32>
    %46 = arith.negf %45 : vector<16x129xf32>
    %47 = math.exp %46 : vector<16x129xf32>
    %cst_24 = arith.constant 1.000000e+00 : f32
    %48 = vector.broadcast %cst_24 : f32 to vector<16x129xf32>
    %49 = arith.addf %48, %47 : vector<16x129xf32>
    %50 = arith.divf %48, %49 : vector<16x129xf32>
    %51 = arith.mulf %44, %50 : vector<16x129xf32>
    %52 = vector.extract_strided_slice %42 {offsets = [32, 0], sizes = [16, 129], strides = [1, 1]} : vector<48x129xf32> to vector<16x129xf32>
    %53 = arith.addf %51, %52 : vector<16x129xf32>
    %54 = vector.extract_strided_slice %53 {offsets = [0, 0], sizes = [16, 128], strides = [1, 1]} : vector<16x129xf32> to vector<16x128xf32>
    %c0_25 = arith.constant 0 : index
    %c0_26 = arith.constant 0 : index
    %c0_27 = arith.constant 0 : index
    %55 = vector.load %arg8[%c0_25, %c0_26, %c0_27] : memref<1x16x128xf32, #tpu.memory_space<vmem>>, vector<1x16x128xf32>
    %56 = vector.shape_cast %55 : vector<1x16x128xf32> to vector<16x128xf32>
    %57 = vector.shape_cast %54 : vector<16x128xf32> to vector<1x16x128xf32>
    tpu.vector_store %arg8[%c0_25, %c0_26, %c0_27], %57 {strides = array<i32>} : memref<1x16x128xf32, #tpu.memory_space<vmem>>, vector<1x16x128xf32>,
    %c0_28 = arith.constant 0 : index
    %c0_29 = arith.constant 0 : index
    %c0_30 = arith.constant 0 : index
    %58 = vector.load %arg6[%c0_28, %c0_29, %c0_30] : memref<2x24x16xf32, #tpu.memory_space<vmem>>, vector<1x24x16xf32>
    %59 = vector.shape_cast %58 : vector<1x24x16xf32> to vector<24x16xf32>
    %60 = vector.extract_strided_slice %53 {offsets = [0, 0], sizes = [16, 128], strides = [1, 1]} : vector<16x129xf32> to vector<16x128xf32>
    %cst_31 = arith.constant dense<0.000000e+00> : vector<24x128xf32>
    %61 = tpu.matmul %59, %60, %cst_31 {dimension_numbers = #tpu.dot_dimension_numbers<[1], [0], [0], [1], [0, 0, 1, 1], [], []>, precision = #tpu.contract_precision<fp32>} : vector<24x16xf32>, vector<16x128xf32>, vector<24x128xf32> -> vector<24x128xf32>
    %c1_32 = arith.constant 1 : index
    %c0_33 = arith.constant 0 : index
    %c0_34 = arith.constant 0 : index
    %62 = vector.load %arg6[%c1_32, %c0_33, %c0_34] : memref<2x24x16xf32, #tpu.memory_space<vmem>>, vector<1x24x16xf32>
    %63 = vector.shape_cast %62 : vector<1x24x16xf32> to vector<24x16xf32>
    %64 = vector.extract_strided_slice %53 {offsets = [0, 1], sizes = [16, 128], strides = [1, 1]} : vector<16x129xf32> to vector<16x128xf32>
    %cst_35 = arith.constant dense<0.000000e+00> : vector<24x128xf32>
    %65 = tpu.matmul %63, %64, %cst_35 {dimension_numbers = #tpu.dot_dimension_numbers<[1], [0], [0], [1], [0, 0, 1, 1], [], []>, precision = #tpu.contract_precision<fp32>} : vector<24x16xf32>, vector<16x128xf32>, vector<24x128xf32> -> vector<24x128xf32>
    %66 = arith.addf %61, %65 : vector<24x128xf32>
    %c0_36 = arith.constant 0 : index
    %c0_37 = arith.constant 0 : index
    %67 = vector.load %arg7[%c0_36, %c0_37] : memref<24x1xf32, #tpu.memory_space<vmem>>, vector<24x1xf32>
    %68 = vector.broadcast %67 : vector<24x1xf32> to vector<24x128xf32>
    %69 = arith.addf %66, %68 : vector<24x128xf32>
    %70 = vector.extract_strided_slice %69 {offsets = [0, 0], sizes = [8, 128], strides = [1, 1]} : vector<24x128xf32> to vector<8x128xf32>
    %71 = math.tanh %70 : vector<8x128xf32>
    %72 = vector.extract_strided_slice %69 {offsets = [8, 0], sizes = [8, 128], strides = [1, 1]} : vector<24x128xf32> to vector<8x128xf32>
    %73 = arith.negf %72 : vector<8x128xf32>
    %74 = math.exp %73 : vector<8x128xf32>
    %cst_38 = arith.constant 1.000000e+00 : f32
    %75 = vector.broadcast %cst_38 : f32 to vector<8x128xf32>
    %76 = arith.addf %75, %74 : vector<8x128xf32>
    %77 = arith.divf %75, %76 : vector<8x128xf32>
    %78 = arith.mulf %71, %77 : vector<8x128xf32>
    %79 = vector.extract_strided_slice %69 {offsets = [16, 0], sizes = [8, 128], strides = [1, 1]} : vector<24x128xf32> to vector<8x128xf32>
    %80 = arith.addf %78, %79 : vector<8x128xf32>
    %c0_39 = arith.constant 0 : index
    %c0_40 = arith.constant 0 : index
    %c0_41 = arith.constant 0 : index
    %81 = vector.load %arg9[%c0_39, %c0_40, %c0_41] : memref<1x8x128xf32, #tpu.memory_space<vmem>>, vector<1x8x128xf32>
    %82 = vector.shape_cast %81 : vector<1x8x128xf32> to vector<8x128xf32>
    %83 = vector.shape_cast %80 : vector<8x128xf32> to vector<1x8x128xf32>
    tpu.vector_store %arg9[%c0_39, %c0_40, %c0_41], %83 {strides = array<i32>} : memref<1x8x128xf32, #tpu.memory_space<vmem>>, vector<1x8x128xf32>,
    return
  }
  func.func @transform_0(%arg0: i32, %arg1: i32) -> (i32, i32, i32) {
    %c0_i32 = arith.constant 0 : i32
    %c0_i32_0 = arith.constant 0 : i32
    return %arg0, %c0_i32, %arg1 : i32, i32, i32
  }
  func.func @transform_1(%arg0: i32, %arg1: i32) -> (i32, i32, i32) {
    %c1_i32 = arith.constant 1 : i32
    %0 = arith.addi %arg1, %c1_i32 : i32
    %c1_i32_0 = arith.constant 1 : i32
    %1 = arith.muli %0, %c1_i32_0 : i32
    %c0_i32 = arith.constant 0 : i32
    %c0_i32_1 = arith.constant 0 : i32
    return %arg0, %c0_i32, %1 : i32, i32, i32
  }
  func.func @transform_2(%arg0: i32, %arg1: i32) -> (i32, i32, i32) {
    %c0_i32 = arith.constant 0 : i32
    %c0_i32_0 = arith.constant 0 : i32
    %c0_i32_1 = arith.constant 0 : i32
    %c0_i32_2 = arith.constant 0 : i32
    return %c0_i32, %c0_i32_0, %c0_i32_1 : i32, i32, i32
  }
  func.func @transform_3(%arg0: i32, %arg1: i32) -> (i32, i32, i32) {
    %c0_i32 = arith.constant 0 : i32
    %c0_i32_0 = arith.constant 0 : i32
    %c0_i32_1 = arith.constant 0 : i32
    %c0_i32_2 = arith.constant 0 : i32
    return %c0_i32, %c0_i32_0, %c0_i32_1 : i32, i32, i32
  }
  func.func @transform_4(%arg0: i32, %arg1: i32) -> (i32, i32, i32) {
    %c0_i32 = arith.constant 0 : i32
    %c0_i32_0 = arith.constant 0 : i32
    %c0_i32_1 = arith.constant 0 : i32
    %c0_i32_2 = arith.constant 0 : i32
    return %c0_i32, %c0_i32_0, %c0_i32_1 : i32, i32, i32
  }
  func.func @transform_5(%arg0: i32, %arg1: i32) -> (i32, i32) {
    %c0_i32 = arith.constant 0 : i32
    %c0_i32_0 = arith.constant 0 : i32
    %c0_i32_1 = arith.constant 0 : i32
    return %c0_i32, %c0_i32_0 : i32, i32
  }
  func.func @transform_6(%arg0: i32, %arg1: i32) -> (i32, i32, i32) {
    %c0_i32 = arith.constant 0 : i32
    %c0_i32_0 = arith.constant 0 : i32
    return %arg0, %c0_i32, %arg1 : i32, i32, i32
  }
  func.func @transform_7(%arg0: i32, %arg1: i32) -> (i32, i32, i32) {
    %c0_i32 = arith.constant 0 : i32
    %c0_i32_0 = arith.constant 0 : i32
    return %arg0, %c0_i32, %arg1 : i32, i32, i32
  }
}

</mosaic_0001>

<llo_original>
// kernel: tpu_custom_call.1
$region0: #{tpu_custom_call.1}
  #allocation0 [shape = 'u32[]', space=smem, size = 0x4, offset = 0x4, fixed_abs, tag = 'smem constant byte address 0x4 - core index']
  #allocation1 [shape = 'u32[72,128]{1,0:T(1,128)}', space=vmem, size = 0x9000, scoped, tag = 'internal scratch']
  %s0 = inlined_call_operand.vmem [shape: f32[2,16,256], index: 0, kind: input, shape index: {}]
  %s1 = inlined_call_operand.vmem [shape: f32[2,16,256], index: 1, kind: input, shape index: {}]
  %s2 = inlined_call_operand.vmem [shape: f32[4,48,16], index: 2, kind: input, shape index: {}]
  %s3 = inlined_call_operand.vmem [shape: f32[2,48,1], index: 3, kind: input, shape index: {}]
  %s4 = inlined_call_operand.vmem [shape: f32[2,24,16], index: 4, kind: input, shape index: {}]
  %s5 = inlined_call_operand.vmem [shape: f32[24,1], index: 5, kind: input, shape index: {}]
  %s6 = inlined_call_operand.hbm [shape: f32[2,16,128], index: 6, kind: output, shape index: {0}]
  %s7 = inlined_call_operand.hbm [shape: f32[2,8,128], index: 7, kind: output, shape index: {1}]
  %8 = xla_tuple %s6, %s7
  %s9 = sld [smem:[#allocation0]]
  $region141: #{tpu_custom_call.1} parent=0
    _
  %s11 = ssub.s32 1, %s9
  %s12 = scalar_select 0, %s11, %s9
  $region1: #{tpu_custom_call.1} parent=0
    #allocation2 [shape = 'u8[16384]{0}', space=vmem, size = 0x4000, scoped, tag = 'input window, operand 0']
    #allocation3 [shape = 'u8[16384]{0}', space=vmem, size = 0x4000, scoped, tag = 'input window, operand 1']
    #allocation4 [shape = 'u8[16384]{0}', space=vmem, size = 0x4000, scoped, tag = 'output window, operand 0']
    #allocation5 [shape = 's32[2]{0}', space=sflag, size = 0x8, scoped, tag = 'scoped memory for tpu_custom_call.1']
    #allocation6 [shape = 'u8[8192]{0}', space=vmem, size = 0x2000, scoped, tag = 'output window, operand 1']
    #allocation7 [shape = 's32[2]{0}', space=sflag, size = 0x8, scoped, tag = 'scoped memory for tpu_custom_call.1']
    %13 = vsyncpa [#allocation5], 0
    %s14 = scalar_lea.sflag [#allocation5], 1
    %15 = vsyncpa %s14, 0
    %16 = vsyncpa [#allocation7], 0
    %s17 = scalar_lea.sflag [#allocation7], 1
    %18 = vsyncpa %s17, 0
    loop: start=0, step=1, limit=4
    $region2: #{tpu_custom_call.1} parent=1 // loop_pre_header
      _
    $region3: #{tpu_custom_call.1} parent=1 // loop_header
      %s20 = sphi 0, %s24
      %p21 = scmp.ge.s32.totalorder %s20, 4
      %s27 = sphi 0, %s39
      %s28 = sphi 0, %s35
      %s29 = sphi 0, %s27
      %s30 = sphi 0, %s28
      %s31 = sphi 0, %s29
      %s32 = sphi 0, %s30
      %s44 = sphi 0, %s46
      %s47 = sphi 0, %s44
      %s48 = sphi 0, %s47
      %s64 = sphi 0, %s48
      %s74 = sphi 0, %s76
      %s77 = sphi 0, %s74
      %s78 = sphi 0, %s77
      %s94 = sphi 0, %s78
      %s98 = sphi 0, %s98
      %s100 = sphi 0, %s98
      %s101 = sphi 0, %s100
      %s115 = sphi 0, %s101
      %s119 = sphi 0, %s119
      %s121 = sphi 0, %s119
      %s122 = sphi 0, %s121
      %s136 = sphi 0, %s122
      %s140 = sphi 0, %s140
      %s142 = sphi 0, %s140
      %s143 = sphi 0, %s142
      %s157 = sphi 0, %s143
      %s161 = sphi 0, %s161
      %s163 = sphi 0, %s161
      %s164 = sphi 0, %s163
      %s178 = sphi 0, %s164
      %s186 = sphi 0, %s188
      %s189 = sphi 0, %s186
      %s190 = sphi 0, %s189
      %s206 = sphi 0, %s190
      %s214 = sphi 0, %s216
      %s217 = sphi 0, %s214
      %s218 = sphi 0, %s217
      %s234 = sphi 0, %s218
    $region4: #{tpu_custom_call.1} parent=1 // loop_header_branch
      %23 = sbr.rel (%p21) target = $region8
    $region5: #{tpu_custom_call.1} parent=1 // loop_body
      %s25 = ssub.s32 %s20, 1
      %s26 = ssub.s32 %s20, 2
      %s33 = sadd.s32 1, %s28
      %p34 = scmp.ge.s32.totalorder %s33, 1
      %s35 = scalar_select %p34, 0, %s33
      %s36 = sadd.s32 1, %s27
      %s37 = scalar_select %p34, %s36, %s27
      %p38 = scmp.ge.s32.totalorder %s37, 2
      %s39 = scalar_select %p38, 0, %s37
      %s40 = ssub.s32 %s27, %s39
      %s41 = ssub.s32 %s28, %s35
      %s42 = sor.u32 %s40, %s41
      %p43 = scmp.eq.s32.totalorder %s42, 0
      %s45 = sadd.s32 %s44, 1
      %s46 = scalar_select %p43, %s44, %s45
      %p49 = pneg %p43
      %p50 = scmp.eq.s32.totalorder %s20, 1
      %p51 = por %p49, %p50
      %p52 = scmp.ne.s32.totalorder %s44, %s47
      %p53 = scmp.eq.s32.totalorder %s20, 0
      %p54 = por %p52, %p53
      %p55 = scmp.ne.s32.totalorder %s44, %s47
      %p56 = scmp.eq.s32.totalorder %s25, 1
      %p57 = por %p55, %p56
      %p58 = scmp.ne.s32.totalorder %s47, %s48
      %p59 = scmp.eq.s32.totalorder %s25, 0
      %p60 = por %p58, %p59
      %p61 = scmp.ne.s32.totalorder %s47, %s48
      %p62 = scmp.eq.s32.totalorder %s26, 1
      %p63 = por %p61, %p62
      %p65 = scmp.ne.s32.totalorder %s48, %s64
      %p66 = scmp.eq.s32.totalorder %s26, 0
      %p67 = por %p65, %p66
      %s68 = sadd.s32 %s28, 1
      %s69 = sadd.s32 %s35, 1
      %s70 = ssub.s32 %s27, %s39
      %s71 = ssub.s32 %s68, %s69
      %s72 = sor.u32 %s70, %s71
      %p73 = scmp.eq.s32.totalorder %s72, 0
      %s75 = sadd.s32 %s74, 1
      %s76 = scalar_select %p73, %s74, %s75
      %p79 = pneg %p73
      %p80 = scmp.eq.s32.totalorder %s20, 1
      %p81 = por %p79, %p80
      %p82 = scmp.ne.s32.totalorder %s74, %s77
      %p83 = scmp.eq.s32.totalorder %s20, 0
      %p84 = por %p82, %p83
      %p85 = scmp.ne.s32.totalorder %s74, %s77
      %p86 = scmp.eq.s32.totalorder %s25, 1
      %p87 = por %p85, %p86
      %p88 = scmp.ne.s32.totalorder %s77, %s78
      %p89 = scmp.eq.s32.totalorder %s25, 0
      %p90 = por %p88, %p89
      %p91 = scmp.ne.s32.totalorder %s77, %s78
      %p92 = scmp.eq.s32.totalorder %s26, 1
      %p93 = por %p91, %p92
      %p95 = scmp.ne.s32.totalorder %s78, %s94
      %p96 = scmp.eq.s32.totalorder %s26, 0
      %p97 = por %p95, %p96
      %s99 = sadd.s32 %s98, 1
      %p102 = scmp.eq.s32.totalorder %s20, 1
      %p103 = scmp.ne.s32.totalorder %s98, %s100
      %p104 = scmp.eq.s32.totalorder %s20, 0
      %p105 = por %p103, %p104
      %p106 = scmp.ne.s32.totalorder %s98, %s100
      %p107 = scmp.eq.s32.totalorder %s25, 1
      %p108 = por %p106, %p107
      %p109 = scmp.ne.s32.totalorder %s100, %s101
      %p110 = scmp.eq.s32.totalorder %s25, 0
      %p111 = por %p109, %p110
      %p112 = scmp.ne.s32.totalorder %s100, %s101
      %p113 = scmp.eq.s32.totalorder %s26, 1
      %p114 = por %p112, %p113
      %p116 = scmp.ne.s32.totalorder %s101, %s115
      %p117 = scmp.eq.s32.totalorder %s26, 0
      %p118 = por %p116, %p117
      %s120 = sadd.s32 %s119, 1
      %p123 = scmp.eq.s32.totalorder %s20, 1
      %p124 = scmp.ne.s32.totalorder %s119, %s121
      %p125 = scmp.eq.s32.totalorder %s20, 0
      %p126 = por %p124, %p125
      %p127 = scmp.ne.s32.totalorder %s119, %s121
      %p128 = scmp.eq.s32.totalorder %s25, 1
      %p129 = por %p127, %p128
      %p130 = scmp.ne.s32.totalorder %s121, %s122
      %p131 = scmp.eq.s32.totalorder %s25, 0
      %p132 = por %p130, %p131
      %p133 = scmp.ne.s32.totalorder %s121, %s122
      %p134 = scmp.eq.s32.totalorder %s26, 1
      %p135 = por %p133, %p134
      %p137 = scmp.ne.s32.totalorder %s122, %s136
      %p138 = scmp.eq.s32.totalorder %s26, 0
      %p139 = por %p137, %p138
      %s141 = sadd.s32 %s140, 1
      %p144 = scmp.eq.s32.totalorder %s20, 1
      %p145 = scmp.ne.s32.totalorder %s140, %s142
      %p146 = scmp.eq.s32.totalorder %s20, 0
      %p147 = por %p145, %p146
      %p148 = scmp.ne.s32.totalorder %s140, %s142
      %p149 = scmp.eq.s32.totalorder %s25, 1
      %p150 = por %p148, %p149
      %p151 = scmp.ne.s32.totalorder %s142, %s143
      %p152 = scmp.eq.s32.totalorder %s25, 0
      %p153 = por %p151, %p152
      %p154 = scmp.ne.s32.totalorder %s142, %s143
      %p155 = scmp.eq.s32.totalorder %s26, 1
      %p156 = por %p154, %p155
      %p158 = scmp.ne.s32.totalorder %s143, %s157
      %p159 = scmp.eq.s32.totalorder %s26, 0
      %p160 = por %p158, %p159
      %s162 = sadd.s32 %s161, 1
      %p165 = scmp.eq.s32.totalorder %s20, 1
      %p166 = scmp.ne.s32.totalorder %s161, %s163
      %p167 = scmp.eq.s32.totalorder %s20, 0
      %p168 = por %p166, %p167
      %p169 = scmp.ne.s32.totalorder %s161, %s163
      %p170 = scmp.eq.s32.totalorder %s25, 1
      %p171 = por %p169, %p170
      %p172 = scmp.ne.s32.totalorder %s163, %s164
      %p173 = scmp.eq.s32.totalorder %s25, 0
      %p174 = por %p172, %p173
      %p175 = scmp.ne.s32.totalorder %s163, %s164
      %p176 = scmp.eq.s32.totalorder %s26, 1
      %p177 = por %p175, %p176
      %p179 = scmp.ne.s32.totalorder %s164, %s178
      %p180 = scmp.eq.s32.totalorder %s26, 0
      %p181 = por %p179, %p180
      %s182 = ssub.s32 %s27, %s39
      %s183 = ssub.s32 %s28, %s35
      %s184 = sor.u32 %s182, %s183
      %p185 = scmp.eq.s32.totalorder %s184, 0
      %s187 = sadd.s32 %s186, 1
      %s188 = scalar_select %p185, %s186, %s187
      %p191 = pneg %p185
      %p192 = scmp.eq.s32.totalorder %s20, 1
      %p193 = por %p191, %p192
      %p194 = scmp.ne.s32.totalorder %s186, %s189
      %p195 = scmp.eq.s32.totalorder %s20, 0
      %p196 = por %p194, %p195
      %p197 = scmp.ne.s32.totalorder %s186, %s189
      %p198 = scmp.eq.s32.totalorder %s25, 1
      %p199 = por %p197, %p198
      %p200 = scmp.ne.s32.totalorder %s189, %s190
      %p201 = scmp.eq.s32.totalorder %s25, 0
      %p202 = por %p200, %p201
      %p203 = scmp.ne.s32.totalorder %s189, %s190
      %p204 = scmp.eq.s32.totalorder %s26, 1
      %p205 = por %p203, %p204
      %p207 = scmp.ne.s32.totalorder %s190, %s206
      %p208 = scmp.eq.s32.totalorder %s26, 0
      %p209 = por %p207, %p208
      %s210 = ssub.s32 %s27, %s39
      %s211 = ssub.s32 %s28, %s35
      %s212 = sor.u32 %s210, %s211
      %p213 = scmp.eq.s32.totalorder %s212, 0
      %s215 = sadd.s32 %s214, 1
      %s216 = scalar_select %p213, %s214, %s215
      %p219 = pneg %p213
      %p220 = scmp.eq.s32.totalorder %s20, 1
      %p221 = por %p219, %p220
      %p222 = scmp.ne.s32.totalorder %s214, %s217
      %p223 = scmp.eq.s32.totalorder %s20, 0
      %p224 = por %p222, %p223
      %p225 = scmp.ne.s32.totalorder %s214, %s217
      %p226 = scmp.eq.s32.totalorder %s25, 1
      %p227 = por %p225, %p226
      %p228 = scmp.ne.s32.totalorder %s217, %s218
      %p229 = scmp.eq.s32.totalorder %s25, 0
      %p230 = por %p228, %p229
      %p231 = scmp.ne.s32.totalorder %s217, %s218
      %p232 = scmp.eq.s32.totalorder %s26, 1
      %p233 = por %p231, %p232
      %p235 = scmp.ne.s32.totalorder %s218, %s234
      %p236 = scmp.eq.s32.totalorder %s26, 0
      %p237 = por %p235, %p236
      %p238 = scmp.le.s32.totalorder 1, %s20
      %p239 = scmp.lt.s32.totalorder %s20, 3
      %p240 = pnand %p238, %p239
      %p241 = pneg %p240
      // Predicated region
      $region9: #{tpu_custom_call.1} parent=5 // pred_check
        _
      $region10: #{tpu_custom_call.1} parent=5 // pred_check_branch
        %243 = sbr.rel (%p240) target = $region12
      $region11: #{tpu_custom_call.1} parent=5 // pred_region
        %s244 = ssub.s32 %s20, 1
        // Predicated region
        $region13: #{tpu_custom_call.1} parent=11 // pred_check
          %p245 = pneg %p111
        $region14: #{tpu_custom_call.1} parent=11 // pred_check_branch
          %247 = sbr.rel (%p245) target = $region16
        $region15: #{tpu_custom_call.1} parent=11 // pred_region
          _
        $region16: #{tpu_custom_call.1} parent=11 // pred_fallthru
          _
        // Predicated region
        $region17: #{tpu_custom_call.1} parent=11 // pred_check
          %p248 = pneg %p132
        $region18: #{tpu_custom_call.1} parent=11 // pred_check_branch
          %250 = sbr.rel (%p248) target = $region20
        $region19: #{tpu_custom_call.1} parent=11 // pred_region
          _
        $region20: #{tpu_custom_call.1} parent=11 // pred_fallthru
          _
        // Predicated region
        $region21: #{tpu_custom_call.1} parent=11 // pred_check
          %p251 = pneg %p153
        $region22: #{tpu_custom_call.1} parent=11 // pred_check_branch
          %253 = sbr.rel (%p251) target = $region24
        $region23: #{tpu_custom_call.1} parent=11 // pred_region
          _
        $region24: #{tpu_custom_call.1} parent=11 // pred_fallthru
          _
        // Predicated region
        $region25: #{tpu_custom_call.1} parent=11 // pred_check
          %p254 = pneg %p174
        $region26: #{tpu_custom_call.1} parent=11 // pred_check_branch
          %256 = sbr.rel (%p254) target = $region28
        $region27: #{tpu_custom_call.1} parent=11 // pred_region
          _
        $region28: #{tpu_custom_call.1} parent=11 // pred_fallthru
          _
      $region12: #{tpu_custom_call.1} parent=5 // pred_fallthru
        _
      %p257 = scmp.lt.s32.totalorder %s20, 2
      // Predicated region
      $region29: #{tpu_custom_call.1} parent=5 // pred_check
        %p258 = pneg %p257
      $region30: #{tpu_custom_call.1} parent=5 // pred_check_branch
        %260 = sbr.rel (%p258) target = $region32
      $region31: #{tpu_custom_call.1} parent=5 // pred_region
        // Predicated region
        $region33: #{tpu_custom_call.1} parent=31 // pred_check
          %p261 = pneg %p54
        $region34: #{tpu_custom_call.1} parent=31 // pred_check_branch
          %263 = sbr.rel (%p261) target = $region36
        $region35: #{tpu_custom_call.1} parent=31 // pred_region
          %s264 = sand.u32 %s44, 1
          %s265 = sand.u32 %s44, 1
          %s266 = smul.addr %s265, 16
          %s267 = scalar_lea.vmem [#allocation2], %s266
          %s268 = smul.addr %s27, 4
          %s269 = sadd.s32 %s28, %s268
          %s270 = smul.addr %s269, 8
          %s271 = scalar_lea.vmem %s0, %s270
          // Predicated region
          $region37: #{tpu_custom_call.1} parent=35 // pred_check
            _
          $region38: #{tpu_custom_call.1} parent=35 // pred_check_branch
            %273 = sbr.rel (0) target = $region40
          $region39: #{tpu_custom_call.1} parent=35 // pred_region
            // Predicated region
            $region41: #{tpu_custom_call.1} parent=39 // pred_check
              _
            $region42: #{tpu_custom_call.1} parent=39 // pred_check_branch
              %275 = sbr.rel (0) target = $region44
            $region43: #{tpu_custom_call.1} parent=39 // pred_region
              // Predicated region
              $region56: #{tpu_custom_call.1} parent=43 // pred_check
                _
              $region57: #{tpu_custom_call.1} parent=43 // pred_check_branch
                %293 = sbr.rel (0) target = $region59
              $region58: #{tpu_custom_call.1} parent=43 // pred_region
                loop: start=0, step=1, limit=1
                $region60: #{tpu_custom_call.1} parent=58 // loop_pre_header
                  _
                $region61: #{tpu_custom_call.1} parent=58 // loop_header
                  %s295 = sphi 0, %s299
                  %p296 = scmp.ge.s32.totalorder %s295, 1
                  %s300 = sphi %s271, %s271
                  %s301 = sphi %s267, %s267
                $region62: #{tpu_custom_call.1} parent=58 // loop_header_branch
                  %298 = sbr.rel (%p296) target = $region66
                $region63: #{tpu_custom_call.1} parent=58 // loop_body
                  %v302 = vld [vmem:[%s300] sm:$0xff]
                  %303 = vst [vmem:[%s301] sm:$0xff] %v302
                  %v304 = vld [vmem:[%s300 + $0x10] sm:$0xff]
                  %305 = vst [vmem:[%s301 + $0x8] sm:$0xff] %v304
                $region64: #{tpu_custom_call.1} parent=58 // loop_footer
                  %s299 = sadd.s32 1, %s295
                $region65: #{tpu_custom_call.1} parent=58 // loop_footer_branch
                  %294 = sbr.rel target = $region61
                $region66: #{tpu_custom_call.1} parent=58 // loop_exit
                  _
              $region59: #{tpu_custom_call.1} parent=43 // pred_fallthru
                _
              // Predicated region
              $region67: #{tpu_custom_call.1} parent=43 // pred_check
                _
              $region68: #{tpu_custom_call.1} parent=43 // pred_check_branch
                %307 = sbr.rel target = $region70
              $region69: #{tpu_custom_call.1} parent=43 // pred_region
                _
              $region70: #{tpu_custom_call.1} parent=43 // pred_fallthru
                _
            $region44: #{tpu_custom_call.1} parent=39 // pred_fallthru
              _
            // Predicated region
            $region45: #{tpu_custom_call.1} parent=39 // pred_check
              _
            $region46: #{tpu_custom_call.1} parent=39 // pred_check_branch
              %277 = sbr.rel target = $region48
            $region47: #{tpu_custom_call.1} parent=39 // pred_region
              %s279 = ssub.s32 256, 1
              loop: start=0, step=1, limit=1
              $region49: #{tpu_custom_call.1} parent=47 // loop_pre_header
                _
              $region50: #{tpu_custom_call.1} parent=47 // loop_header
                %s281 = sphi 0, %s285
                %p282 = scmp.ge.s32.totalorder %s281, 1
                %s286 = sphi %s271, %s271
                %s287 = sphi %s267, %s267
              $region51: #{tpu_custom_call.1} parent=47 // loop_header_branch
                %284 = sbr.rel (%p282) target = $region55
              $region52: #{tpu_custom_call.1} parent=47 // loop_body
                %v288 = vld [vmem:[%s286] sm:%s279]
                %289 = vst [vmem:[%s287] sm:%s279] %v288
                %v290 = vld [vmem:[%s286 + $0x10] sm:%s279]
                %291 = vst [vmem:[%s287 + $0x8] sm:%s279] %v290
              $region53: #{tpu_custom_call.1} parent=47 // loop_footer
                %s285 = sadd.s32 1, %s281
              $region54: #{tpu_custom_call.1} parent=47 // loop_footer_branch
                %280 = sbr.rel target = $region50
              $region55: #{tpu_custom_call.1} parent=47 // loop_exit
                _
            $region48: #{tpu_custom_call.1} parent=39 // pred_fallthru
              _
          $region40: #{tpu_custom_call.1} parent=35 // pred_fallthru
            _
          %308 = vnop
        $region36: #{tpu_custom_call.1} parent=31 // pred_fallthru
          _
        // Predicated region
        $region71: #{tpu_custom_call.1} parent=31 // pred_check
          %p309 = pneg %p84
        $region72: #{tpu_custom_call.1} parent=31 // pred_check_branch
          %311 = sbr.rel (%p309) target = $region74
        $region73: #{tpu_custom_call.1} parent=31 // pred_region
          %s312 = sand.u32 %s74, 1
          %s313 = sand.u32 %s74, 1
          %s314 = smul.addr %s313, 16
          %s315 = scalar_lea.vmem [#allocation3], %s314
          %s316 = sadd.s32 %s28, 1
          %s317 = smul.addr %s27, 4
          %s318 = sadd.s32 %s316, %s317
          %s319 = smul.addr %s318, 8
          %s320 = scalar_lea.vmem %s1, %s319
          // Predicated region
          $region75: #{tpu_custom_call.1} parent=73 // pred_check
            _
          $region76: #{tpu_custom_call.1} parent=73 // pred_check_branch
            %322 = sbr.rel (0) target = $region78
          $region77: #{tpu_custom_call.1} parent=73 // pred_region
            // Predicated region
            $region79: #{tpu_custom_call.1} parent=77 // pred_check
              _
            $region80: #{tpu_custom_call.1} parent=77 // pred_check_branch
              %324 = sbr.rel (0) target = $region82
            $region81: #{tpu_custom_call.1} parent=77 // pred_region
              // Predicated region
              $region94: #{tpu_custom_call.1} parent=81 // pred_check
                _
              $region95: #{tpu_custom_call.1} parent=81 // pred_check_branch
                %342 = sbr.rel (0) target = $region97
              $region96: #{tpu_custom_call.1} parent=81 // pred_region
                loop: start=0, step=1, limit=1
                $region98: #{tpu_custom_call.1} parent=96 // loop_pre_header
                  _
                $region99: #{tpu_custom_call.1} parent=96 // loop_header
                  %s344 = sphi 0, %s348
                  %p345 = scmp.ge.s32.totalorder %s344, 1
                  %s349 = sphi %s320, %s320
                  %s350 = sphi %s315, %s315
                $region100: #{tpu_custom_call.1} parent=96 // loop_header_branch
                  %347 = sbr.rel (%p345) target = $region104
                $region101: #{tpu_custom_call.1} parent=96 // loop_body
                  %v351 = vld [vmem:[%s349] sm:$0xff]
                  %352 = vst [vmem:[%s350] sm:$0xff] %v351
                  %v353 = vld [vmem:[%s349 + $0x10] sm:$0xff]
                  %354 = vst [vmem:[%s350 + $0x8] sm:$0xff] %v353
                $region102: #{tpu_custom_call.1} parent=96 // loop_footer
                  %s348 = sadd.s32 1, %s344
                $region103: #{tpu_custom_call.1} parent=96 // loop_footer_branch
                  %343 = sbr.rel target = $region99
                $region104: #{tpu_custom_call.1} parent=96 // loop_exit
                  _
              $region97: #{tpu_custom_call.1} parent=81 // pred_fallthru
                _
              // Predicated region
              $region105: #{tpu_custom_call.1} parent=81 // pred_check
                _
              $region106: #{tpu_custom_call.1} parent=81 // pred_check_branch
                %356 = sbr.rel target = $region108
              $region107: #{tpu_custom_call.1} parent=81 // pred_region
                _
              $region108: #{tpu_custom_call.1} parent=81 // pred_fallthru
                _
            $region82: #{tpu_custom_call.1} parent=77 // pred_fallthru
              _
            // Predicated region
            $region83: #{tpu_custom_call.1} parent=77 // pred_check
              _
            $region84: #{tpu_custom_call.1} parent=77 // pred_check_branch
              %326 = sbr.rel target = $region86
            $region85: #{tpu_custom_call.1} parent=77 // pred_region
              %s328 = ssub.s32 256, 1
              loop: start=0, step=1, limit=1
              $region87: #{tpu_custom_call.1} parent=85 // loop_pre_header
                _
              $region88: #{tpu_custom_call.1} parent=85 // loop_header
                %s330 = sphi 0, %s334
                %p331 = scmp.ge.s32.totalorder %s330, 1
                %s335 = sphi %s320, %s320
                %s336 = sphi %s315, %s315
              $region89: #{tpu_custom_call.1} parent=85 // loop_header_branch
                %333 = sbr.rel (%p331) target = $region93
              $region90: #{tpu_custom_call.1} parent=85 // loop_body
                %v337 = vld [vmem:[%s335] sm:%s328]
                %338 = vst [vmem:[%s336] sm:%s328] %v337
                %v339 = vld [vmem:[%s335 + $0x10] sm:%s328]
                %340 = vst [vmem:[%s336 + $0x8] sm:%s328] %v339
              $region91: #{tpu_custom_call.1} parent=85 // loop_footer
                %s334 = sadd.s32 1, %s330
              $region92: #{tpu_custom_call.1} parent=85 // loop_footer_branch
                %329 = sbr.rel target = $region88
              $region93: #{tpu_custom_call.1} parent=85 // loop_exit
                _
            $region86: #{tpu_custom_call.1} parent=77 // pred_fallthru
              _
          $region78: #{tpu_custom_call.1} parent=73 // pred_fallthru
            _
          %357 = vnop
        $region74: #{tpu_custom_call.1} parent=31 // pred_fallthru
          _
      $region32: #{tpu_custom_call.1} parent=5 // pred_fallthru
        _
      %p358 = scmp.le.s32.totalorder 1, %s20
      %p359 = scmp.lt.s32.totalorder %s20, 3
      %p360 = pnand %p358, %p359
      %p361 = pneg %p360
      // Predicated region
      $region109: #{tpu_custom_call.1} parent=5 // pred_check
        _
      $region110: #{tpu_custom_call.1} parent=5 // pred_check_branch
        %363 = sbr.rel (%p360) target = $region112
      $region111: #{tpu_custom_call.1} parent=5 // pred_region
        %s364 = ssub.s32 %s20, 1
        %s365 = sand.u32 %s47, 1
        %s366 = sand.u32 %s47, 1
        %s367 = smul.addr %s366, 16
        %s368 = scalar_lea.vmem [#allocation2], %s367
        // Predicated region
        $region113: #{tpu_custom_call.1} parent=111 // pred_check
          %p369 = pneg %p60
        $region114: #{tpu_custom_call.1} parent=111 // pred_check_branch
          %371 = sbr.rel (%p369) target = $region116
        $region115: #{tpu_custom_call.1} parent=111 // pred_region
          _
        $region116: #{tpu_custom_call.1} parent=111 // pred_fallthru
          _
        %s372 = sand.u32 %s77, 1
        %s373 = sand.u32 %s77, 1
        %s374 = smul.addr %s373, 16
        %s375 = scalar_lea.vmem [#allocation3], %s374
        // Predicated region
        $region117: #{tpu_custom_call.1} parent=111 // pred_check
          %p376 = pneg %p90
        $region118: #{tpu_custom_call.1} parent=111 // pred_check_branch
          %378 = sbr.rel (%p376) target = $region120
        $region119: #{tpu_custom_call.1} parent=111 // pred_region
          _
        $region120: #{tpu_custom_call.1} parent=111 // pred_fallthru
          _
        %s379 = sand.u32 %s47, 1
        %s380 = sand.u32 %s47, 1
        %s381 = smul.addr %s380, 16
        %s382 = scalar_lea.vmem [#allocation2], %s381
        %p383 = pneg %p60
        %p384 = pneg %p57
        %s385 = sand.u32 %s77, 1
        %s386 = sand.u32 %s77, 1
        %s387 = smul.addr %s386, 16
        %s388 = scalar_lea.vmem [#allocation3], %s387
        %p389 = pneg %p90
        %p390 = pneg %p87
        %p391 = pneg %p111
        %p392 = pneg %p108
        %p393 = pneg %p132
        %p394 = pneg %p129
        %p395 = pneg %p153
        %p396 = pneg %p150
        %p397 = pneg %p174
        %p398 = pneg %p171
        %p399 = pneg %p202
        %p400 = pneg %p199
        %s401 = sand.u32 %s189, 1
        %s402 = scalar_lea.sflag [#allocation5], %s401
        %s403 = sand.u32 %s189, 1
        %s404 = smul.addr %s403, 16
        %s405 = scalar_lea.vmem [#allocation4], %s404
        %p406 = pneg %p230
        %p407 = pneg %p227
        %s408 = sand.u32 %s217, 1
        %s409 = scalar_lea.sflag [#allocation7], %s408
        %s410 = sand.u32 %s217, 1
        %s411 = smul.addr %s410, 8
        %s412 = scalar_lea.vmem [#allocation6], %s411
        %s413 = sadd.s32 %s30, 1
        %v414 = vld [vmem:[%s375] sm:$0xff]
        %v415 = vld [vmem:[%s375 + $0x8] sm:$0xff]
        %v416 = vld [vmem:[%s368] sm:$0xff]
        %v417 = vld [vmem:[%s368 + $0x8] sm:$0xff]
        %v418 = vld [vmem:[%s2] sm:$0xff]
        %v419 = vld [vmem:[%s2 + $0x8] sm:$0xff]
        %v420 = vld [vmem:[%s2 + $0x10] sm:$0xff]
        %v421 = vld [vmem:[%s2 + $0x18] sm:$0xff]
        %v422 = vld [vmem:[%s2 + $0x20] sm:$0xff]
        %v423 = vld [vmem:[%s2 + $0x28] sm:$0xff]
        %s424 = scalar_lea.vmem %s2, 48
        %v425 = vld [vmem:[%s424] sm:$0xff]
        %v426 = vld [vmem:[%s424 + $0x8] sm:$0xff]
        %v427 = vld [vmem:[%s424 + $0x10] sm:$0xff]
        %v428 = vld [vmem:[%s424 + $0x18] sm:$0xff]
        %v429 = vld [vmem:[%s424 + $0x20] sm:$0xff]
        %v430 = vld [vmem:[%s424 + $0x28] sm:$0xff]
        %435 = vrot.lane.b32.xlu0 %v416, 127
        %v436 = vpop.permute.xlu0 %435
        %437 = vrot.lane.b32.xlu0 %v414, 127
        %v438 = vpop.permute.xlu0 %437
        %439 = vrot.lane.b32.xlu0 %v417, 127
        %v440 = vpop.permute.xlu0 %439
        %441 = vrot.lane.b32.xlu0 %v415, 127
        %v442 = vpop.permute.xlu0 %441
        %vm443 = vcmask 1039360
        %v444 = vsel %vm443, %v436, %v438
        %v445 = vsel %vm443, %v440, %v442
        %vm450 = vcmask 130048
        %v452 = vsel %vm450, %v425, 0
        %v455 = vsel %vm450, %v426, 0
        %v458 = vsel %vm450, %v427, 0
        %v461 = vsel %vm450, %v428, 0
        %v464 = vsel %vm450, %v429, 0
        %v467 = vsel %vm450, %v430, 0
        %469 = vmatpush.msra.mxu0 0.0
        %470 = vmatpush.msra.mxu0 0.0
        %471 = vmatpush.msra.mxu0 0.0
        %472 = vmatpush.msra.mxu0 0.0
        %473 = vmatpush.msra.mxu0 0.0
        %474 = vmatpush.msra.mxu0 0.0
        %475 = vmatpush.msra.mxu0 0.0
        %476 = vmatpush.msra.mxu0 0.0
        %477 = vmatpush.msra.mxu0 0.0
        %478 = vmatpush.msra.mxu0 0.0
        %479 = vmatpush.msra.mxu0 0.0
        %480 = vmatpush.msra.mxu0 0.0
        %481 = vmatpush.msra.mxu0 0.0
        %482 = vmatpush.msra.mxu0 0.0
        %v483 = vand.u32 %v445, 4294901760
        %484 = vmatpush.msra.mxu0 %v483
        %v485 = vand.u32 %v444, 4294901760
        %486 = vmatpush.msra.mxu0 %v485
        %v487 = vand.u32 %v452, 4294901760
        %v488 = vsub.f32 %v452, %v487
        %v489 = vand.u32 %v488, 4294901760
        %v490 = vsub.f32 %v488, %v489
        %v491 = vand.u32 %v490, 4294901760
        %492 = vmatmul.f32.gmra.mxu0 %v491
        %v493 = vpop.f32.mrf.mxu0
        %v494 = vadd.f32 0.0, %v493
        %v495 = vand.u32 %v455, 4294901760
        %v496 = vsub.f32 %v455, %v495
        %v497 = vand.u32 %v496, 4294901760
        %v498 = vsub.f32 %v496, %v497
        %v499 = vand.u32 %v498, 4294901760
        %500 = vmatmul.f32.gmra.mxu0 %v499
        %v501 = vpop.f32.mrf.mxu0
        %v502 = vadd.f32 0.0, %v501
        %v503 = vand.u32 %v458, 4294901760
        %v504 = vsub.f32 %v458, %v503
        %v505 = vand.u32 %v504, 4294901760
        %v506 = vsub.f32 %v504, %v505
        %v507 = vand.u32 %v506, 4294901760
        %508 = vmatmul.f32.gmra.mxu0 %v507
        %v509 = vpop.f32.mrf.mxu0
        %v510 = vadd.f32 0.0, %v509
        %v511 = vand.u32 %v461, 4294901760
        %v512 = vsub.f32 %v461, %v511
        %v513 = vand.u32 %v512, 4294901760
        %v514 = vsub.f32 %v512, %v513
        %v515 = vand.u32 %v514, 4294901760
        %516 = vmatmul.f32.gmra.mxu0 %v515
        %v517 = vpop.f32.mrf.mxu0
        %v518 = vadd.f32 0.0, %v517
        %v519 = vand.u32 %v464, 4294901760
        %v520 = vsub.f32 %v464, %v519
        %v521 = vand.u32 %v520, 4294901760
        %v522 = vsub.f32 %v520, %v521
        %v523 = vand.u32 %v522, 4294901760
        %524 = vmatmul.f32.gmra.mxu0 %v523
        %v525 = vpop.f32.mrf.mxu0
        %v526 = vadd.f32 0.0, %v525
        %v527 = vand.u32 %v467, 4294901760
        %v528 = vsub.f32 %v467, %v527
        %v529 = vand.u32 %v528, 4294901760
        %v530 = vsub.f32 %v528, %v529
        %v531 = vand.u32 %v530, 4294901760
        %532 = vmatmul.f32.gmra.mxu0 %v531
        %v533 = vpop.f32.mrf.mxu0
        %v534 = vadd.f32 0.0, %v533
        %535 = vdwg.mxu0
        %536 = vmatpush.msra.mxu0 0.0
        %537 = vmatpush.msra.mxu0 0.0
        %538 = vmatpush.msra.mxu0 0.0
        %539 = vmatpush.msra.mxu0 0.0
        %540 = vmatpush.msra.mxu0 0.0
        %541 = vmatpush.msra.mxu0 0.0
        %542 = vmatpush.msra.mxu0 0.0
        %543 = vmatpush.msra.mxu0 0.0
        %544 = vmatpush.msra.mxu0 0.0
        %545 = vmatpush.msra.mxu0 0.0
        %546 = vmatpush.msra.mxu0 0.0
        %547 = vmatpush.msra.mxu0 0.0
        %548 = vmatpush.msra.mxu0 0.0
        %549 = vmatpush.msra.mxu0 0.0
        %v550 = vand.u32 %v445, 4294901760
        %v551 = vsub.f32 %v445, %v550
        %v552 = vand.u32 %v551, 4294901760
        %v553 = vsub.f32 %v551, %v552
        %v554 = vand.u32 %v553, 4294901760
        %555 = vmatpush.msra.mxu0 %v554
        %v556 = vand.u32 %v444, 4294901760
        %v557 = vsub.f32 %v444, %v556
        %v558 = vand.u32 %v557, 4294901760
        %v559 = vsub.f32 %v557, %v558
        %v560 = vand.u32 %v559, 4294901760
        %561 = vmatpush.msra.mxu0 %v560
        %v562 = vand.u32 %v452, 4294901760
        %563 = vmatmul.f32.gmra.mxu0 %v562
        %v564 = vpop.f32.mrf.mxu0
        %v565 = vadd.f32 %v494, %v564
        %v566 = vand.u32 %v455, 4294901760
        %567 = vmatmul.f32.gmra.mxu0 %v566
        %v568 = vpop.f32.mrf.mxu0
        %v569 = vadd.f32 %v502, %v568
        %v570 = vand.u32 %v458, 4294901760
        %571 = vmatmul.f32.gmra.mxu0 %v570
        %v572 = vpop.f32.mrf.mxu0
        %v573 = vadd.f32 %v510, %v572
        %v574 = vand.u32 %v461, 4294901760
        %575 = vmatmul.f32.gmra.mxu0 %v574
        %v576 = vpop.f32.mrf.mxu0
        %v577 = vadd.f32 %v518, %v576
        %v578 = vand.u32 %v464, 4294901760
        %579 = vmatmul.f32.gmra.mxu0 %v578
        %v580 = vpop.f32.mrf.mxu0
        %v581 = vadd.f32 %v526, %v580
        %v582 = vand.u32 %v467, 4294901760
        %583 = vmatmul.f32.gmra.mxu0 %v582
        %v584 = vpop.f32.mrf.mxu0
        %v585 = vadd.f32 %v534, %v584
        %586 = vdwg.mxu0
        %587 = vmatpush.msra.mxu0 0.0
        %588 = vmatpush.msra.mxu0 0.0
        %589 = vmatpush.msra.mxu0 0.0
        %590 = vmatpush.msra.mxu0 0.0
        %591 = vmatpush.msra.mxu0 0.0
        %592 = vmatpush.msra.mxu0 0.0
        %593 = vmatpush.msra.mxu0 0.0
        %594 = vmatpush.msra.mxu0 0.0
        %595 = vmatpush.msra.mxu0 0.0
        %596 = vmatpush.msra.mxu0 0.0
        %597 = vmatpush.msra.mxu0 0.0
        %598 = vmatpush.msra.mxu0 0.0
        %599 = vmatpush.msra.mxu0 0.0
        %600 = vmatpush.msra.mxu0 0.0
        %v601 = vand.u32 %v445, 4294901760
        %v602 = vsub.f32 %v445, %v601
        %603 = vmatpush.msra.mxu0 %v602
        %v604 = vand.u32 %v444, 4294901760
        %v605 = vsub.f32 %v444, %v604
        %606 = vmatpush.msra.mxu0 %v605
        %v607 = vand.u32 %v452, 4294901760
        %v608 = vsub.f32 %v452, %v607
        %609 = vmatmul.f32.gmra.mxu0 %v608
        %v610 = vpop.f32.mrf.mxu0
        %v611 = vadd.f32 %v565, %v610
        %v612 = vand.u32 %v455, 4294901760
        %v613 = vsub.f32 %v455, %v612
        %614 = vmatmul.f32.gmra.mxu0 %v613
        %v615 = vpop.f32.mrf.mxu0
        %v616 = vadd.f32 %v569, %v615
        %v617 = vand.u32 %v458, 4294901760
        %v618 = vsub.f32 %v458, %v617
        %619 = vmatmul.f32.gmra.mxu0 %v618
        %v620 = vpop.f32.mrf.mxu0
        %v621 = vadd.f32 %v573, %v620
        %v622 = vand.u32 %v461, 4294901760
        %v623 = vsub.f32 %v461, %v622
        %624 = vmatmul.f32.gmra.mxu0 %v623
        %v625 = vpop.f32.mrf.mxu0
        %v626 = vadd.f32 %v577, %v625
        %v627 = vand.u32 %v464, 4294901760
        %v628 = vsub.f32 %v464, %v627
        %629 = vmatmul.f32.gmra.mxu0 %v628
        %v630 = vpop.f32.mrf.mxu0
        %v631 = vadd.f32 %v581, %v630
        %v632 = vand.u32 %v467, 4294901760
        %v633 = vsub.f32 %v467, %v632
        %634 = vmatmul.f32.gmra.mxu0 %v633
        %v635 = vpop.f32.mrf.mxu0
        %v636 = vadd.f32 %v585, %v635
        %637 = vdwg.mxu0
        %638 = vmatpush.msra.mxu0 0.0
        %639 = vmatpush.msra.mxu0 0.0
        %640 = vmatpush.msra.mxu0 0.0
        %641 = vmatpush.msra.mxu0 0.0
        %642 = vmatpush.msra.mxu0 0.0
        %643 = vmatpush.msra.mxu0 0.0
        %644 = vmatpush.msra.mxu0 0.0
        %645 = vmatpush.msra.mxu0 0.0
        %646 = vmatpush.msra.mxu0 0.0
        %647 = vmatpush.msra.mxu0 0.0
        %648 = vmatpush.msra.mxu0 0.0
        %649 = vmatpush.msra.mxu0 0.0
        %650 = vmatpush.msra.mxu0 0.0
        %651 = vmatpush.msra.mxu0 0.0
        %v652 = vand.u32 %v445, 4294901760
        %653 = vmatpush.msra.mxu0 %v652
        %v654 = vand.u32 %v444, 4294901760
        %655 = vmatpush.msra.mxu0 %v654
        %v656 = vand.u32 %v452, 4294901760
        %v657 = vsub.f32 %v452, %v656
        %v658 = vand.u32 %v657, 4294901760
        %659 = vmatmul.f32.gmra.mxu0 %v658
        %v660 = vpop.f32.mrf.mxu0
        %v661 = vadd.f32 %v611, %v660
        %v662 = vand.u32 %v455, 4294901760
        %v663 = vsub.f32 %v455, %v662
        %v664 = vand.u32 %v663, 4294901760
        %665 = vmatmul.f32.gmra.mxu0 %v664
        %v666 = vpop.f32.mrf.mxu0
        %v667 = vadd.f32 %v616, %v666
        %v668 = vand.u32 %v458, 4294901760
        %v669 = vsub.f32 %v458, %v668
        %v670 = vand.u32 %v669, 4294901760
        %671 = vmatmul.f32.gmra.mxu0 %v670
        %v672 = vpop.f32.mrf.mxu0
        %v673 = vadd.f32 %v621, %v672
        %v674 = vand.u32 %v461, 4294901760
        %v675 = vsub.f32 %v461, %v674
        %v676 = vand.u32 %v675, 4294901760
        %677 = vmatmul.f32.gmra.mxu0 %v676
        %v678 = vpop.f32.mrf.mxu0
        %v679 = vadd.f32 %v626, %v678
        %v680 = vand.u32 %v464, 4294901760
        %v681 = vsub.f32 %v464, %v680
        %v682 = vand.u32 %v681, 4294901760
        %683 = vmatmul.f32.gmra.mxu0 %v682
        %v684 = vpop.f32.mrf.mxu0
        %v685 = vadd.f32 %v631, %v684
        %v686 = vand.u32 %v467, 4294901760
        %v687 = vsub.f32 %v467, %v686
        %v688 = vand.u32 %v687, 4294901760
        %689 = vmatmul.f32.gmra.mxu0 %v688
        %v690 = vpop.f32.mrf.mxu0
        %v691 = vadd.f32 %v636, %v690
        %692 = vdwg.mxu0
        %693 = vmatpush.msra.mxu0 0.0
        %694 = vmatpush.msra.mxu0 0.0
        %695 = vmatpush.msra.mxu0 0.0
        %696 = vmatpush.msra.mxu0 0.0
        %697 = vmatpush.msra.mxu0 0.0
        %698 = vmatpush.msra.mxu0 0.0
        %699 = vmatpush.msra.mxu0 0.0
        %700 = vmatpush.msra.mxu0 0.0
        %701 = vmatpush.msra.mxu0 0.0
        %702 = vmatpush.msra.mxu0 0.0
        %703 = vmatpush.msra.mxu0 0.0
        %704 = vmatpush.msra.mxu0 0.0
        %705 = vmatpush.msra.mxu0 0.0
        %706 = vmatpush.msra.mxu0 0.0
        %v707 = vand.u32 %v445, 4294901760
        %v708 = vsub.f32 %v445, %v707
        %v709 = vand.u32 %v708, 4294901760
        %710 = vmatpush.msra.mxu0 %v709
        %v711 = vand.u32 %v444, 4294901760
        %v712 = vsub.f32 %v444, %v711
        %v713 = vand.u32 %v712, 4294901760
        %714 = vmatpush.msra.mxu0 %v713
        %v715 = vand.u32 %v452, 4294901760
        %716 = vmatmul.f32.gmra.mxu0 %v715
        %v717 = vpop.f32.mrf.mxu0
        %v718 = vadd.f32 %v661, %v717
        %v719 = vand.u32 %v455, 4294901760
        %720 = vmatmul.f32.gmra.mxu0 %v719
        %v721 = vpop.f32.mrf.mxu0
        %v722 = vadd.f32 %v667, %v721
        %v723 = vand.u32 %v458, 4294901760
        %724 = vmatmul.f32.gmra.mxu0 %v723
        %v725 = vpop.f32.mrf.mxu0
        %v726 = vadd.f32 %v673, %v725
        %v727 = vand.u32 %v461, 4294901760
        %728 = vmatmul.f32.gmra.mxu0 %v727
        %v729 = vpop.f32.mrf.mxu0
        %v730 = vadd.f32 %v679, %v729
        %v731 = vand.u32 %v464, 4294901760
        %732 = vmatmul.f32.gmra.mxu0 %v731
        %v733 = vpop.f32.mrf.mxu0
        %v734 = vadd.f32 %v685, %v733
        %v735 = vand.u32 %v467, 4294901760
        %736 = vmatmul.f32.gmra.mxu0 %v735
        %v737 = vpop.f32.mrf.mxu0
        %v738 = vadd.f32 %v691, %v737
        %739 = vdwg.mxu0
        %740 = vmatpush.msra.mxu0 0.0
        %741 = vmatpush.msra.mxu0 0.0
        %742 = vmatpush.msra.mxu0 0.0
        %743 = vmatpush.msra.mxu0 0.0
        %744 = vmatpush.msra.mxu0 0.0
        %745 = vmatpush.msra.mxu0 0.0
        %746 = vmatpush.msra.mxu0 0.0
        %747 = vmatpush.msra.mxu0 0.0
        %748 = vmatpush.msra.mxu0 0.0
        %749 = vmatpush.msra.mxu0 0.0
        %750 = vmatpush.msra.mxu0 0.0
        %751 = vmatpush.msra.mxu0 0.0
        %752 = vmatpush.msra.mxu0 0.0
        %753 = vmatpush.msra.mxu0 0.0
        %v754 = vand.u32 %v445, 4294901760
        %755 = vmatpush.msra.mxu0 %v754
        %v756 = vand.u32 %v444, 4294901760
        %757 = vmatpush.msra.mxu0 %v756
        %v758 = vand.u32 %v452, 4294901760
        %759 = vmatmul.f32.gmra.mxu0 %v758
        %v760 = vpop.f32.mrf.mxu0
        %v761 = vadd.f32 %v718, %v760
        %v762 = vand.u32 %v455, 4294901760
        %763 = vmatmul.f32.gmra.mxu0 %v762
        %v764 = vpop.f32.mrf.mxu0
        %v765 = vadd.f32 %v722, %v764
        %v766 = vand.u32 %v458, 4294901760
        %767 = vmatmul.f32.gmra.mxu0 %v766
        %v768 = vpop.f32.mrf.mxu0
        %v769 = vadd.f32 %v726, %v768
        %v770 = vand.u32 %v461, 4294901760
        %771 = vmatmul.f32.gmra.mxu0 %v770
        %v772 = vpop.f32.mrf.mxu0
        %v773 = vadd.f32 %v730, %v772
        %v774 = vand.u32 %v464, 4294901760
        %775 = vmatmul.f32.gmra.mxu0 %v774
        %v776 = vpop.f32.mrf.mxu0
        %v777 = vadd.f32 %v734, %v776
        %v778 = vand.u32 %v467, 4294901760
        %779 = vmatmul.f32.gmra.mxu0 %v778
        %v780 = vpop.f32.mrf.mxu0
        %v781 = vadd.f32 %v738, %v780
        %782 = vdwg.mxu0
        %783 = vmatpush.msra.mxu0 0.0
        %784 = vmatpush.msra.mxu0 0.0
        %785 = vmatpush.msra.mxu0 0.0
        %786 = vmatpush.msra.mxu0 0.0
        %787 = vmatpush.msra.mxu0 0.0
        %788 = vmatpush.msra.mxu0 0.0
        %789 = vmatpush.msra.mxu0 0.0
        %790 = vmatpush.msra.mxu0 0.0
        %791 = vmatpush.msra.mxu0 0.0
        %792 = vmatpush.msra.mxu0 0.0
        %793 = vmatpush.msra.mxu0 0.0
        %794 = vmatpush.msra.mxu0 0.0
        %795 = vmatpush.msra.mxu0 0.0
        %796 = vmatpush.msra.mxu0 0.0
        %v797 = vand.u32 %v442, 4294901760
        %798 = vmatpush.msra.mxu0 %v797
        %v799 = vand.u32 %v438, 4294901760
        %800 = vmatpush.msra.mxu0 %v799
        %v801 = vand.u32 %v452, 4294901760
        %v802 = vsub.f32 %v452, %v801
        %v803 = vand.u32 %v802, 4294901760
        %v804 = vsub.f32 %v802, %v803
        %v805 = vand.u32 %v804, 4294901760
        %806 = vmatmul.f32.gmra.mxu0 %v805
        %v807 = vpop.f32.mrf.mxu0
        %v808 = vadd.f32 0.0, %v807
        %v809 = vand.u32 %v455, 4294901760
        %v810 = vsub.f32 %v455, %v809
        %v811 = vand.u32 %v810, 4294901760
        %v812 = vsub.f32 %v810, %v811
        %v813 = vand.u32 %v812, 4294901760
        %814 = vmatmul.f32.gmra.mxu0 %v813
        %v815 = vpop.f32.mrf.mxu0
        %v816 = vadd.f32 0.0, %v815
        %v817 = vand.u32 %v458, 4294901760
        %v818 = vsub.f32 %v458, %v817
        %v819 = vand.u32 %v818, 4294901760
        %v820 = vsub.f32 %v818, %v819
        %v821 = vand.u32 %v820, 4294901760
        %822 = vmatmul.f32.gmra.mxu0 %v821
        %v823 = vpop.f32.mrf.mxu0
        %v824 = vadd.f32 0.0, %v823
        %v825 = vand.u32 %v461, 4294901760
        %v826 = vsub.f32 %v461, %v825
        %v827 = vand.u32 %v826, 4294901760
        %v828 = vsub.f32 %v826, %v827
        %v829 = vand.u32 %v828, 4294901760
        %830 = vmatmul.f32.gmra.mxu0 %v829
        %v831 = vpop.f32.mrf.mxu0
        %v832 = vadd.f32 0.0, %v831
        %v833 = vand.u32 %v464, 4294901760
        %v834 = vsub.f32 %v464, %v833
        %v835 = vand.u32 %v834, 4294901760
        %v836 = vsub.f32 %v834, %v835
        %v837 = vand.u32 %v836, 4294901760
        %838 = vmatmul.f32.gmra.mxu0 %v837
        %v839 = vpop.f32.mrf.mxu0
        %v840 = vadd.f32 0.0, %v839
        %v841 = vand.u32 %v467, 4294901760
        %v842 = vsub.f32 %v467, %v841
        %v843 = vand.u32 %v842, 4294901760
        %v844 = vsub.f32 %v842, %v843
        %v845 = vand.u32 %v844, 4294901760
        %846 = vmatmul.f32.gmra.mxu0 %v845
        %v847 = vpop.f32.mrf.mxu0
        %v848 = vadd.f32 0.0, %v847
        %849 = vdwg.mxu0
        %850 = vmatpush.msra.mxu0 0.0
        %851 = vmatpush.msra.mxu0 0.0
        %852 = vmatpush.msra.mxu0 0.0
        %853 = vmatpush.msra.mxu0 0.0
        %854 = vmatpush.msra.mxu0 0.0
        %855 = vmatpush.msra.mxu0 0.0
        %856 = vmatpush.msra.mxu0 0.0
        %857 = vmatpush.msra.mxu0 0.0
        %858 = vmatpush.msra.mxu0 0.0
        %859 = vmatpush.msra.mxu0 0.0
        %860 = vmatpush.msra.mxu0 0.0
        %861 = vmatpush.msra.mxu0 0.0
        %862 = vmatpush.msra.mxu0 0.0
        %863 = vmatpush.msra.mxu0 0.0
        %v864 = vand.u32 %v442, 4294901760
        %v865 = vsub.f32 %v442, %v864
        %v866 = vand.u32 %v865, 4294901760
        %v867 = vsub.f32 %v865, %v866
        %v868 = vand.u32 %v867, 4294901760
        %869 = vmatpush.msra.mxu0 %v868
        %v870 = vand.u32 %v438, 4294901760
        %v871 = vsub.f32 %v438, %v870
        %v872 = vand.u32 %v871, 4294901760
        %v873 = vsub.f32 %v871, %v872
        %v874 = vand.u32 %v873, 4294901760
        %875 = vmatpush.msra.mxu0 %v874
        %v876 = vand.u32 %v452, 4294901760
        %877 = vmatmul.f32.gmra.mxu0 %v876
        %v878 = vpop.f32.mrf.mxu0
        %v879 = vadd.f32 %v808, %v878
        %v880 = vand.u32 %v455, 4294901760
        %881 = vmatmul.f32.gmra.mxu0 %v880
        %v882 = vpop.f32.mrf.mxu0
        %v883 = vadd.f32 %v816, %v882
        %v884 = vand.u32 %v458, 4294901760
        %885 = vmatmul.f32.gmra.mxu0 %v884
        %v886 = vpop.f32.mrf.mxu0
        %v887 = vadd.f32 %v824, %v886
        %v888 = vand.u32 %v461, 4294901760
        %889 = vmatmul.f32.gmra.mxu0 %v888
        %v890 = vpop.f32.mrf.mxu0
        %v891 = vadd.f32 %v832, %v890
        %v892 = vand.u32 %v464, 4294901760
        %893 = vmatmul.f32.gmra.mxu0 %v892
        %v894 = vpop.f32.mrf.mxu0
        %v895 = vadd.f32 %v840, %v894
        %v896 = vand.u32 %v467, 4294901760
        %897 = vmatmul.f32.gmra.mxu0 %v896
        %v898 = vpop.f32.mrf.mxu0
        %v899 = vadd.f32 %v848, %v898
        %900 = vdwg.mxu0
        %901 = vmatpush.msra.mxu0 0.0
        %902 = vmatpush.msra.mxu0 0.0
        %903 = vmatpush.msra.mxu0 0.0
        %904 = vmatpush.msra.mxu0 0.0
        %905 = vmatpush.msra.mxu0 0.0
        %906 = vmatpush.msra.mxu0 0.0
        %907 = vmatpush.msra.mxu0 0.0
        %908 = vmatpush.msra.mxu0 0.0
        %909 = vmatpush.msra.mxu0 0.0
        %910 = vmatpush.msra.mxu0 0.0
        %911 = vmatpush.msra.mxu0 0.0
        %912 = vmatpush.msra.mxu0 0.0
        %913 = vmatpush.msra.mxu0 0.0
        %914 = vmatpush.msra.mxu0 0.0
        %v915 = vand.u32 %v442, 4294901760
        %v916 = vsub.f32 %v442, %v915
        %917 = vmatpush.msra.mxu0 %v916
        %v918 = vand.u32 %v438, 4294901760
        %v919 = vsub.f32 %v438, %v918
        %920 = vmatpush.msra.mxu0 %v919
        %v921 = vand.u32 %v452, 4294901760
        %v922 = vsub.f32 %v452, %v921
        %923 = vmatmul.f32.gmra.mxu0 %v922
        %v924 = vpop.f32.mrf.mxu0
        %v925 = vadd.f32 %v879, %v924
        %v926 = vand.u32 %v455, 4294901760
        %v927 = vsub.f32 %v455, %v926
        %928 = vmatmul.f32.gmra.mxu0 %v927
        %v929 = vpop.f32.mrf.mxu0
        %v930 = vadd.f32 %v883, %v929
        %v931 = vand.u32 %v458, 4294901760
        %v932 = vsub.f32 %v458, %v931
        %933 = vmatmul.f32.gmra.mxu0 %v932
        %v934 = vpop.f32.mrf.mxu0
        %v935 = vadd.f32 %v887, %v934
        %v936 = vand.u32 %v461, 4294901760
        %v937 = vsub.f32 %v461, %v936
        %938 = vmatmul.f32.gmra.mxu0 %v937
        %v939 = vpop.f32.mrf.mxu0
        %v940 = vadd.f32 %v891, %v939
        %v941 = vand.u32 %v464, 4294901760
        %v942 = vsub.f32 %v464, %v941
        %943 = vmatmul.f32.gmra.mxu0 %v942
        %v944 = vpop.f32.mrf.mxu0
        %v945 = vadd.f32 %v895, %v944
        %v946 = vand.u32 %v467, 4294901760
        %v947 = vsub.f32 %v467, %v946
        %948 = vmatmul.f32.gmra.mxu0 %v947
        %v949 = vpop.f32.mrf.mxu0
        %v950 = vadd.f32 %v899, %v949
        %951 = vdwg.mxu0
        %952 = vmatpush.msra.mxu0 0.0
        %953 = vmatpush.msra.mxu0 0.0
        %954 = vmatpush.msra.mxu0 0.0
        %955 = vmatpush.msra.mxu0 0.0
        %956 = vmatpush.msra.mxu0 0.0
        %957 = vmatpush.msra.mxu0 0.0
        %958 = vmatpush.msra.mxu0 0.0
        %959 = vmatpush.msra.mxu0 0.0
        %960 = vmatpush.msra.mxu0 0.0
        %961 = vmatpush.msra.mxu0 0.0
        %962 = vmatpush.msra.mxu0 0.0
        %963 = vmatpush.msra.mxu0 0.0
        %964 = vmatpush.msra.mxu0 0.0
        %965 = vmatpush.msra.mxu0 0.0
        %v966 = vand.u32 %v442, 4294901760
        %967 = vmatpush.msra.mxu0 %v966
        %v968 = vand.u32 %v438, 4294901760
        %969 = vmatpush.msra.mxu0 %v968
        %v970 = vand.u32 %v452, 4294901760
        %v971 = vsub.f32 %v452, %v970
        %v972 = vand.u32 %v971, 4294901760
        %973 = vmatmul.f32.gmra.mxu0 %v972
        %v974 = vpop.f32.mrf.mxu0
        %v975 = vadd.f32 %v925, %v974
        %v976 = vand.u32 %v455, 4294901760
        %v977 = vsub.f32 %v455, %v976
        %v978 = vand.u32 %v977, 4294901760
        %979 = vmatmul.f32.gmra.mxu0 %v978
        %v980 = vpop.f32.mrf.mxu0
        %v981 = vadd.f32 %v930, %v980
        %v982 = vand.u32 %v458, 4294901760
        %v983 = vsub.f32 %v458, %v982
        %v984 = vand.u32 %v983, 4294901760
        %985 = vmatmul.f32.gmra.mxu0 %v984
        %v986 = vpop.f32.mrf.mxu0
        %v987 = vadd.f32 %v935, %v986
        %v988 = vand.u32 %v461, 4294901760
        %v989 = vsub.f32 %v461, %v988
        %v990 = vand.u32 %v989, 4294901760
        %991 = vmatmul.f32.gmra.mxu0 %v990
        %v992 = vpop.f32.mrf.mxu0
        %v993 = vadd.f32 %v940, %v992
        %v994 = vand.u32 %v464, 4294901760
        %v995 = vsub.f32 %v464, %v994
        %v996 = vand.u32 %v995, 4294901760
        %997 = vmatmul.f32.gmra.mxu0 %v996
        %v998 = vpop.f32.mrf.mxu0
        %v999 = vadd.f32 %v945, %v998
        %v1000 = vand.u32 %v467, 4294901760
        %v1001 = vsub.f32 %v467, %v1000
        %v1002 = vand.u32 %v1001, 4294901760
        %1003 = vmatmul.f32.gmra.mxu0 %v1002
        %v1004 = vpop.f32.mrf.mxu0
        %v1005 = vadd.f32 %v950, %v1004
        %1006 = vdwg.mxu0
        %1007 = vmatpush.msra.mxu0 0.0
        %1008 = vmatpush.msra.mxu0 0.0
        %1009 = vmatpush.msra.mxu0 0.0
        %1010 = vmatpush.msra.mxu0 0.0
        %1011 = vmatpush.msra.mxu0 0.0
        %1012 = vmatpush.msra.mxu0 0.0
        %1013 = vmatpush.msra.mxu0 0.0
        %1014 = vmatpush.msra.mxu0 0.0
        %1015 = vmatpush.msra.mxu0 0.0
        %1016 = vmatpush.msra.mxu0 0.0
        %1017 = vmatpush.msra.mxu0 0.0
        %1018 = vmatpush.msra.mxu0 0.0
        %1019 = vmatpush.msra.mxu0 0.0
        %1020 = vmatpush.msra.mxu0 0.0
        %v1021 = vand.u32 %v442, 4294901760
        %v1022 = vsub.f32 %v442, %v1021
        %v1023 = vand.u32 %v1022, 4294901760
        %1024 = vmatpush.msra.mxu0 %v1023
        %v1025 = vand.u32 %v438, 4294901760
        %v1026 = vsub.f32 %v438, %v1025
        %v1027 = vand.u32 %v1026, 4294901760
        %1028 = vmatpush.msra.mxu0 %v1027
        %v1029 = vand.u32 %v452, 4294901760
        %1030 = vmatmul.f32.gmra.mxu0 %v1029
        %v1031 = vpop.f32.mrf.mxu0
        %v1032 = vadd.f32 %v975, %v1031
        %v1033 = vand.u32 %v455, 4294901760
        %1034 = vmatmul.f32.gmra.mxu0 %v1033
        %v1035 = vpop.f32.mrf.mxu0
        %v1036 = vadd.f32 %v981, %v1035
        %v1037 = vand.u32 %v458, 4294901760
        %1038 = vmatmul.f32.gmra.mxu0 %v1037
        %v1039 = vpop.f32.mrf.mxu0
        %v1040 = vadd.f32 %v987, %v1039
        %v1041 = vand.u32 %v461, 4294901760
        %1042 = vmatmul.f32.gmra.mxu0 %v1041
        %v1043 = vpop.f32.mrf.mxu0
        %v1044 = vadd.f32 %v993, %v1043
        %v1045 = vand.u32 %v464, 4294901760
        %1046 = vmatmul.f32.gmra.mxu0 %v1045
        %v1047 = vpop.f32.mrf.mxu0
        %v1048 = vadd.f32 %v999, %v1047
        %v1049 = vand.u32 %v467, 4294901760
        %1050 = vmatmul.f32.gmra.mxu0 %v1049
        %v1051 = vpop.f32.mrf.mxu0
        %v1052 = vadd.f32 %v1005, %v1051
        %1053 = vdwg.mxu0
        %1054 = vmatpush.msra.mxu0 0.0
        %1055 = vmatpush.msra.mxu0 0.0
        %1056 = vmatpush.msra.mxu0 0.0
        %1057 = vmatpush.msra.mxu0 0.0
        %1058 = vmatpush.msra.mxu0 0.0
        %1059 = vmatpush.msra.mxu0 0.0
        %1060 = vmatpush.msra.mxu0 0.0
        %1061 = vmatpush.msra.mxu0 0.0
        %1062 = vmatpush.msra.mxu0 0.0
        %1063 = vmatpush.msra.mxu0 0.0
        %1064 = vmatpush.msra.mxu0 0.0
        %1065 = vmatpush.msra.mxu0 0.0
        %1066 = vmatpush.msra.mxu0 0.0
        %1067 = vmatpush.msra.mxu0 0.0
        %v1068 = vand.u32 %v442, 4294901760
        %1069 = vmatpush.msra.mxu0 %v1068
        %v1070 = vand.u32 %v438, 4294901760
        %1071 = vmatpush.msra.mxu0 %v1070
        %v1072 = vand.u32 %v452, 4294901760
        %1073 = vmatmul.f32.gmra.mxu0 %v1072
        %v1074 = vpop.f32.mrf.mxu0
        %v1075 = vadd.f32 %v1032, %v1074
        %v1076 = vand.u32 %v455, 4294901760
        %1077 = vmatmul.f32.gmra.mxu0 %v1076
        %v1078 = vpop.f32.mrf.mxu0
        %v1079 = vadd.f32 %v1036, %v1078
        %v1080 = vand.u32 %v458, 4294901760
        %1081 = vmatmul.f32.gmra.mxu0 %v1080
        %v1082 = vpop.f32.mrf.mxu0
        %v1083 = vadd.f32 %v1040, %v1082
        %v1084 = vand.u32 %v461, 4294901760
        %1085 = vmatmul.f32.gmra.mxu0 %v1084
        %v1086 = vpop.f32.mrf.mxu0
        %v1087 = vadd.f32 %v1044, %v1086
        %v1088 = vand.u32 %v464, 4294901760
        %1089 = vmatmul.f32.gmra.mxu0 %v1088
        %v1090 = vpop.f32.mrf.mxu0
        %v1091 = vadd.f32 %v1048, %v1090
        %v1092 = vand.u32 %v467, 4294901760
        %1093 = vmatmul.f32.gmra.mxu0 %v1092
        %v1094 = vpop.f32.mrf.mxu0
        %v1095 = vadd.f32 %v1052, %v1094
        %1096 = vdwg.mxu0
        %v1098 = vsel %vm450, %v418, 0
        %v1101 = vsel %vm450, %v419, 0
        %v1104 = vsel %vm450, %v420, 0
        %v1107 = vsel %vm450, %v421, 0
        %v1110 = vsel %vm450, %v422, 0
        %v1113 = vsel %vm450, %v423, 0
        %1115 = vmatpush.msra.mxu0 0.0
        %1116 = vmatpush.msra.mxu0 0.0
        %1117 = vmatpush.msra.mxu0 0.0
        %1118 = vmatpush.msra.mxu0 0.0
        %1119 = vmatpush.msra.mxu0 0.0
        %1120 = vmatpush.msra.mxu0 0.0
        %1121 = vmatpush.msra.mxu0 0.0
        %1122 = vmatpush.msra.mxu0 0.0
        %1123 = vmatpush.msra.mxu0 0.0
        %1124 = vmatpush.msra.mxu0 0.0
        %1125 = vmatpush.msra.mxu0 0.0
        %1126 = vmatpush.msra.mxu0 0.0
        %1127 = vmatpush.msra.mxu0 0.0
        %1128 = vmatpush.msra.mxu0 0.0
        %v1129 = vand.u32 %v417, 4294901760
        %1130 = vmatpush.msra.mxu0 %v1129
        %v1131 = vand.u32 %v416, 4294901760
        %1132 = vmatpush.msra.mxu0 %v1131
        %v1133 = vand.u32 %v1098, 4294901760
        %v1134 = vsub.f32 %v1098, %v1133
        %v1135 = vand.u32 %v1134, 4294901760
        %v1136 = vsub.f32 %v1134, %v1135
        %v1137 = vand.u32 %v1136, 4294901760
        %1138 = vmatmul.f32.gmra.mxu0 %v1137
        %v1139 = vpop.f32.mrf.mxu0
        %v1140 = vadd.f32 %v761, %v1139
        %v1141 = vand.u32 %v1101, 4294901760
        %v1142 = vsub.f32 %v1101, %v1141
        %v1143 = vand.u32 %v1142, 4294901760
        %v1144 = vsub.f32 %v1142, %v1143
        %v1145 = vand.u32 %v1144, 4294901760
        %1146 = vmatmul.f32.gmra.mxu0 %v1145
        %v1147 = vpop.f32.mrf.mxu0
        %v1148 = vadd.f32 %v765, %v1147
        %v1149 = vand.u32 %v1104, 4294901760
        %v1150 = vsub.f32 %v1104, %v1149
        %v1151 = vand.u32 %v1150, 4294901760
        %v1152 = vsub.f32 %v1150, %v1151
        %v1153 = vand.u32 %v1152, 4294901760
        %1154 = vmatmul.f32.gmra.mxu0 %v1153
        %v1155 = vpop.f32.mrf.mxu0
        %v1156 = vadd.f32 %v769, %v1155
        %v1157 = vand.u32 %v1107, 4294901760
        %v1158 = vsub.f32 %v1107, %v1157
        %v1159 = vand.u32 %v1158, 4294901760
        %v1160 = vsub.f32 %v1158, %v1159
        %v1161 = vand.u32 %v1160, 4294901760
        %1162 = vmatmul.f32.gmra.mxu0 %v1161
        %v1163 = vpop.f32.mrf.mxu0
        %v1164 = vadd.f32 %v773, %v1163
        %v1165 = vand.u32 %v1110, 4294901760
        %v1166 = vsub.f32 %v1110, %v1165
        %v1167 = vand.u32 %v1166, 4294901760
        %v1168 = vsub.f32 %v1166, %v1167
        %v1169 = vand.u32 %v1168, 4294901760
        %1170 = vmatmul.f32.gmra.mxu0 %v1169
        %v1171 = vpop.f32.mrf.mxu0
        %v1172 = vadd.f32 %v777, %v1171
        %v1173 = vand.u32 %v1113, 4294901760
        %v1174 = vsub.f32 %v1113, %v1173
        %v1175 = vand.u32 %v1174, 4294901760
        %v1176 = vsub.f32 %v1174, %v1175
        %v1177 = vand.u32 %v1176, 4294901760
        %1178 = vmatmul.f32.gmra.mxu0 %v1177
        %v1179 = vpop.f32.mrf.mxu0
        %v1180 = vadd.f32 %v781, %v1179
        %1181 = vdwg.mxu0
        %1182 = vmatpush.msra.mxu0 0.0
        %1183 = vmatpush.msra.mxu0 0.0
        %1184 = vmatpush.msra.mxu0 0.0
        %1185 = vmatpush.msra.mxu0 0.0
        %1186 = vmatpush.msra.mxu0 0.0
        %1187 = vmatpush.msra.mxu0 0.0
        %1188 = vmatpush.msra.mxu0 0.0
        %1189 = vmatpush.msra.mxu0 0.0
        %1190 = vmatpush.msra.mxu0 0.0
        %1191 = vmatpush.msra.mxu0 0.0
        %1192 = vmatpush.msra.mxu0 0.0
        %1193 = vmatpush.msra.mxu0 0.0
        %1194 = vmatpush.msra.mxu0 0.0
        %1195 = vmatpush.msra.mxu0 0.0
        %v1196 = vand.u32 %v417, 4294901760
        %v1197 = vsub.f32 %v417, %v1196
        %v1198 = vand.u32 %v1197, 4294901760
        %v1199 = vsub.f32 %v1197, %v1198
        %v1200 = vand.u32 %v1199, 4294901760
        %1201 = vmatpush.msra.mxu0 %v1200
        %v1202 = vand.u32 %v416, 4294901760
        %v1203 = vsub.f32 %v416, %v1202
        %v1204 = vand.u32 %v1203, 4294901760
        %v1205 = vsub.f32 %v1203, %v1204
        %v1206 = vand.u32 %v1205, 4294901760
        %1207 = vmatpush.msra.mxu0 %v1206
        %v1208 = vand.u32 %v1098, 4294901760
        %1209 = vmatmul.f32.gmra.mxu0 %v1208
        %v1210 = vpop.f32.mrf.mxu0
        %v1211 = vadd.f32 %v1140, %v1210
        %v1212 = vand.u32 %v1101, 4294901760
        %1213 = vmatmul.f32.gmra.mxu0 %v1212
        %v1214 = vpop.f32.mrf.mxu0
        %v1215 = vadd.f32 %v1148, %v1214
        %v1216 = vand.u32 %v1104, 4294901760
        %1217 = vmatmul.f32.gmra.mxu0 %v1216
        %v1218 = vpop.f32.mrf.mxu0
        %v1219 = vadd.f32 %v1156, %v1218
        %v1220 = vand.u32 %v1107, 4294901760
        %1221 = vmatmul.f32.gmra.mxu0 %v1220
        %v1222 = vpop.f32.mrf.mxu0
        %v1223 = vadd.f32 %v1164, %v1222
        %v1224 = vand.u32 %v1110, 4294901760
        %1225 = vmatmul.f32.gmra.mxu0 %v1224
        %v1226 = vpop.f32.mrf.mxu0
        %v1227 = vadd.f32 %v1172, %v1226
        %v1228 = vand.u32 %v1113, 4294901760
        %1229 = vmatmul.f32.gmra.mxu0 %v1228
        %v1230 = vpop.f32.mrf.mxu0
        %v1231 = vadd.f32 %v1180, %v1230
        %1232 = vdwg.mxu0
        %1233 = vmatpush.msra.mxu0 0.0
        %1234 = vmatpush.msra.mxu0 0.0
        %1235 = vmatpush.msra.mxu0 0.0
        %1236 = vmatpush.msra.mxu0 0.0
        %1237 = vmatpush.msra.mxu0 0.0
        %1238 = vmatpush.msra.mxu0 0.0
        %1239 = vmatpush.msra.mxu0 0.0
        %1240 = vmatpush.msra.mxu0 0.0
        %1241 = vmatpush.msra.mxu0 0.0
        %1242 = vmatpush.msra.mxu0 0.0
        %1243 = vmatpush.msra.mxu0 0.0
        %1244 = vmatpush.msra.mxu0 0.0
        %1245 = vmatpush.msra.mxu0 0.0
        %1246 = vmatpush.msra.mxu0 0.0
        %v1247 = vand.u32 %v417, 4294901760
        %v1248 = vsub.f32 %v417, %v1247
        %1249 = vmatpush.msra.mxu0 %v1248
        %v1250 = vand.u32 %v416, 4294901760
        %v1251 = vsub.f32 %v416, %v1250
        %1252 = vmatpush.msra.mxu0 %v1251
        %v1253 = vand.u32 %v1098, 4294901760
        %v1254 = vsub.f32 %v1098, %v1253
        %1255 = vmatmul.f32.gmra.mxu0 %v1254
        %v1256 = vpop.f32.mrf.mxu0
        %v1257 = vadd.f32 %v1211, %v1256
        %v1258 = vand.u32 %v1101, 4294901760
        %v1259 = vsub.f32 %v1101, %v1258
        %1260 = vmatmul.f32.gmra.mxu0 %v1259
        %v1261 = vpop.f32.mrf.mxu0
        %v1262 = vadd.f32 %v1215, %v1261
        %v1263 = vand.u32 %v1104, 4294901760
        %v1264 = vsub.f32 %v1104, %v1263
        %1265 = vmatmul.f32.gmra.mxu0 %v1264
        %v1266 = vpop.f32.mrf.mxu0
        %v1267 = vadd.f32 %v1219, %v1266
        %v1268 = vand.u32 %v1107, 4294901760
        %v1269 = vsub.f32 %v1107, %v1268
        %1270 = vmatmul.f32.gmra.mxu0 %v1269
        %v1271 = vpop.f32.mrf.mxu0
        %v1272 = vadd.f32 %v1223, %v1271
        %v1273 = vand.u32 %v1110, 4294901760
        %v1274 = vsub.f32 %v1110, %v1273
        %1275 = vmatmul.f32.gmra.mxu0 %v1274
        %v1276 = vpop.f32.mrf.mxu0
        %v1277 = vadd.f32 %v1227, %v1276
        %v1278 = vand.u32 %v1113, 4294901760
        %v1279 = vsub.f32 %v1113, %v1278
        %1280 = vmatmul.f32.gmra.mxu0 %v1279
        %v1281 = vpop.f32.mrf.mxu0
        %v1282 = vadd.f32 %v1231, %v1281
        %1283 = vdwg.mxu0
        %1284 = vmatpush.msra.mxu0 0.0
        %1285 = vmatpush.msra.mxu0 0.0
        %1286 = vmatpush.msra.mxu0 0.0
        %1287 = vmatpush.msra.mxu0 0.0
        %1288 = vmatpush.msra.mxu0 0.0
        %1289 = vmatpush.msra.mxu0 0.0
        %1290 = vmatpush.msra.mxu0 0.0
        %1291 = vmatpush.msra.mxu0 0.0
        %1292 = vmatpush.msra.mxu0 0.0
        %1293 = vmatpush.msra.mxu0 0.0
        %1294 = vmatpush.msra.mxu0 0.0
        %1295 = vmatpush.msra.mxu0 0.0
        %1296 = vmatpush.msra.mxu0 0.0
        %1297 = vmatpush.msra.mxu0 0.0
        %v1298 = vand.u32 %v417, 4294901760
        %1299 = vmatpush.msra.mxu0 %v1298
        %v1300 = vand.u32 %v416, 4294901760
        %1301 = vmatpush.msra.mxu0 %v1300
        %v1302 = vand.u32 %v1098, 4294901760
        %v1303 = vsub.f32 %v1098, %v1302
        %v1304 = vand.u32 %v1303, 4294901760
        %1305 = vmatmul.f32.gmra.mxu0 %v1304
        %v1306 = vpop.f32.mrf.mxu0
        %v1307 = vadd.f32 %v1257, %v1306
        %v1308 = vand.u32 %v1101, 4294901760
        %v1309 = vsub.f32 %v1101, %v1308
        %v1310 = vand.u32 %v1309, 4294901760
        %1311 = vmatmul.f32.gmra.mxu0 %v1310
        %v1312 = vpop.f32.mrf.mxu0
        %v1313 = vadd.f32 %v1262, %v1312
        %v1314 = vand.u32 %v1104, 4294901760
        %v1315 = vsub.f32 %v1104, %v1314
        %v1316 = vand.u32 %v1315, 4294901760
        %1317 = vmatmul.f32.gmra.mxu0 %v1316
        %v1318 = vpop.f32.mrf.mxu0
        %v1319 = vadd.f32 %v1267, %v1318
        %v1320 = vand.u32 %v1107, 4294901760
        %v1321 = vsub.f32 %v1107, %v1320
        %v1322 = vand.u32 %v1321, 4294901760
        %1323 = vmatmul.f32.gmra.mxu0 %v1322
        %v1324 = vpop.f32.mrf.mxu0
        %v1325 = vadd.f32 %v1272, %v1324
        %v1326 = vand.u32 %v1110, 4294901760
        %v1327 = vsub.f32 %v1110, %v1326
        %v1328 = vand.u32 %v1327, 4294901760
        %1329 = vmatmul.f32.gmra.mxu0 %v1328
        %v1330 = vpop.f32.mrf.mxu0
        %v1331 = vadd.f32 %v1277, %v1330
        %v1332 = vand.u32 %v1113, 4294901760
        %v1333 = vsub.f32 %v1113, %v1332
        %v1334 = vand.u32 %v1333, 4294901760
        %1335 = vmatmul.f32.gmra.mxu0 %v1334
        %v1336 = vpop.f32.mrf.mxu0
        %v1337 = vadd.f32 %v1282, %v1336
        %1338 = vdwg.mxu0
        %1339 = vmatpush.msra.mxu0 0.0
        %1340 = vmatpush.msra.mxu0 0.0
        %1341 = vmatpush.msra.mxu0 0.0
        %1342 = vmatpush.msra.mxu0 0.0
        %1343 = vmatpush.msra.mxu0 0.0
        %1344 = vmatpush.msra.mxu0 0.0
        %1345 = vmatpush.msra.mxu0 0.0
        %1346 = vmatpush.msra.mxu0 0.0
        %1347 = vmatpush.msra.mxu0 0.0
        %1348 = vmatpush.msra.mxu0 0.0
        %1349 = vmatpush.msra.mxu0 0.0
        %1350 = vmatpush.msra.mxu0 0.0
        %1351 = vmatpush.msra.mxu0 0.0
        %1352 = vmatpush.msra.mxu0 0.0
        %v1353 = vand.u32 %v417, 4294901760
        %v1354 = vsub.f32 %v417, %v1353
        %v1355 = vand.u32 %v1354, 4294901760
        %1356 = vmatpush.msra.mxu0 %v1355
        %v1357 = vand.u32 %v416, 4294901760
        %v1358 = vsub.f32 %v416, %v1357
        %v1359 = vand.u32 %v1358, 4294901760
        %1360 = vmatpush.msra.mxu0 %v1359
        %v1361 = vand.u32 %v1098, 4294901760
        %1362 = vmatmul.f32.gmra.mxu0 %v1361
        %v1363 = vpop.f32.mrf.mxu0
        %v1364 = vadd.f32 %v1307, %v1363
        %v1365 = vand.u32 %v1101, 4294901760
        %1366 = vmatmul.f32.gmra.mxu0 %v1365
        %v1367 = vpop.f32.mrf.mxu0
        %v1368 = vadd.f32 %v1313, %v1367
        %v1369 = vand.u32 %v1104, 4294901760
        %1370 = vmatmul.f32.gmra.mxu0 %v1369
        %v1371 = vpop.f32.mrf.mxu0
        %v1372 = vadd.f32 %v1319, %v1371
        %v1373 = vand.u32 %v1107, 4294901760
        %1374 = vmatmul.f32.gmra.mxu0 %v1373
        %v1375 = vpop.f32.mrf.mxu0
        %v1376 = vadd.f32 %v1325, %v1375
        %v1377 = vand.u32 %v1110, 4294901760
        %1378 = vmatmul.f32.gmra.mxu0 %v1377
        %v1379 = vpop.f32.mrf.mxu0
        %v1380 = vadd.f32 %v1331, %v1379
        %v1381 = vand.u32 %v1113, 4294901760
        %1382 = vmatmul.f32.gmra.mxu0 %v1381
        %v1383 = vpop.f32.mrf.mxu0
        %v1384 = vadd.f32 %v1337, %v1383
        %1385 = vdwg.mxu0
        %1386 = vmatpush.msra.mxu0 0.0
        %1387 = vmatpush.msra.mxu0 0.0
        %1388 = vmatpush.msra.mxu0 0.0
        %1389 = vmatpush.msra.mxu0 0.0
        %1390 = vmatpush.msra.mxu0 0.0
        %1391 = vmatpush.msra.mxu0 0.0
        %1392 = vmatpush.msra.mxu0 0.0
        %1393 = vmatpush.msra.mxu0 0.0
        %1394 = vmatpush.msra.mxu0 0.0
        %1395 = vmatpush.msra.mxu0 0.0
        %1396 = vmatpush.msra.mxu0 0.0
        %1397 = vmatpush.msra.mxu0 0.0
        %1398 = vmatpush.msra.mxu0 0.0
        %1399 = vmatpush.msra.mxu0 0.0
        %v1400 = vand.u32 %v417, 4294901760
        %1401 = vmatpush.msra.mxu0 %v1400
        %v1402 = vand.u32 %v416, 4294901760
        %1403 = vmatpush.msra.mxu0 %v1402
        %v1404 = vand.u32 %v1098, 4294901760
        %1405 = vmatmul.f32.gmra.mxu0 %v1404
        %v1406 = vpop.f32.mrf.mxu0
        %v1407 = vadd.f32 %v1364, %v1406
        %v1408 = vand.u32 %v1101, 4294901760
        %1409 = vmatmul.f32.gmra.mxu0 %v1408
        %v1410 = vpop.f32.mrf.mxu0
        %v1411 = vadd.f32 %v1368, %v1410
        %v1412 = vand.u32 %v1104, 4294901760
        %1413 = vmatmul.f32.gmra.mxu0 %v1412
        %v1414 = vpop.f32.mrf.mxu0
        %v1415 = vadd.f32 %v1372, %v1414
        %v1416 = vand.u32 %v1107, 4294901760
        %1417 = vmatmul.f32.gmra.mxu0 %v1416
        %v1418 = vpop.f32.mrf.mxu0
        %v1419 = vadd.f32 %v1376, %v1418
        %v1420 = vand.u32 %v1110, 4294901760
        %1421 = vmatmul.f32.gmra.mxu0 %v1420
        %v1422 = vpop.f32.mrf.mxu0
        %v1423 = vadd.f32 %v1380, %v1422
        %v1424 = vand.u32 %v1113, 4294901760
        %1425 = vmatmul.f32.gmra.mxu0 %v1424
        %v1426 = vpop.f32.mrf.mxu0
        %v1427 = vadd.f32 %v1384, %v1426
        %1428 = vdwg.mxu0
        %1429 = vmatpush.msra.mxu0 0.0
        %1430 = vmatpush.msra.mxu0 0.0
        %1431 = vmatpush.msra.mxu0 0.0
        %1432 = vmatpush.msra.mxu0 0.0
        %1433 = vmatpush.msra.mxu0 0.0
        %1434 = vmatpush.msra.mxu0 0.0
        %1435 = vmatpush.msra.mxu0 0.0
        %1436 = vmatpush.msra.mxu0 0.0
        %1437 = vmatpush.msra.mxu0 0.0
        %1438 = vmatpush.msra.mxu0 0.0
        %1439 = vmatpush.msra.mxu0 0.0
        %1440 = vmatpush.msra.mxu0 0.0
        %1441 = vmatpush.msra.mxu0 0.0
        %1442 = vmatpush.msra.mxu0 0.0
        %v1443 = vand.u32 %v415, 4294901760
        %1444 = vmatpush.msra.mxu0 %v1443
        %v1445 = vand.u32 %v414, 4294901760
        %1446 = vmatpush.msra.mxu0 %v1445
        %v1447 = vand.u32 %v1098, 4294901760
        %v1448 = vsub.f32 %v1098, %v1447
        %v1449 = vand.u32 %v1448, 4294901760
        %v1450 = vsub.f32 %v1448, %v1449
        %v1451 = vand.u32 %v1450, 4294901760
        %1452 = vmatmul.f32.gmra.mxu0 %v1451
        %v1453 = vpop.f32.mrf.mxu0
        %v1454 = vadd.f32 %v1075, %v1453
        %v1455 = vand.u32 %v1101, 4294901760
        %v1456 = vsub.f32 %v1101, %v1455
        %v1457 = vand.u32 %v1456, 4294901760
        %v1458 = vsub.f32 %v1456, %v1457
        %v1459 = vand.u32 %v1458, 4294901760
        %1460 = vmatmul.f32.gmra.mxu0 %v1459
        %v1461 = vpop.f32.mrf.mxu0
        %v1462 = vadd.f32 %v1079, %v1461
        %v1463 = vand.u32 %v1104, 4294901760
        %v1464 = vsub.f32 %v1104, %v1463
        %v1465 = vand.u32 %v1464, 4294901760
        %v1466 = vsub.f32 %v1464, %v1465
        %v1467 = vand.u32 %v1466, 4294901760
        %1468 = vmatmul.f32.gmra.mxu0 %v1467
        %v1469 = vpop.f32.mrf.mxu0
        %v1470 = vadd.f32 %v1083, %v1469
        %v1471 = vand.u32 %v1107, 4294901760
        %v1472 = vsub.f32 %v1107, %v1471
        %v1473 = vand.u32 %v1472, 4294901760
        %v1474 = vsub.f32 %v1472, %v1473
        %v1475 = vand.u32 %v1474, 4294901760
        %1476 = vmatmul.f32.gmra.mxu0 %v1475
        %v1477 = vpop.f32.mrf.mxu0
        %v1478 = vadd.f32 %v1087, %v1477
        %v1479 = vand.u32 %v1110, 4294901760
        %v1480 = vsub.f32 %v1110, %v1479
        %v1481 = vand.u32 %v1480, 4294901760
        %v1482 = vsub.f32 %v1480, %v1481
        %v1483 = vand.u32 %v1482, 4294901760
        %1484 = vmatmul.f32.gmra.mxu0 %v1483
        %v1485 = vpop.f32.mrf.mxu0
        %v1486 = vadd.f32 %v1091, %v1485
        %v1487 = vand.u32 %v1113, 4294901760
        %v1488 = vsub.f32 %v1113, %v1487
        %v1489 = vand.u32 %v1488, 4294901760
        %v1490 = vsub.f32 %v1488, %v1489
        %v1491 = vand.u32 %v1490, 4294901760
        %1492 = vmatmul.f32.gmra.mxu0 %v1491
        %v1493 = vpop.f32.mrf.mxu0
        %v1494 = vadd.f32 %v1095, %v1493
        %1495 = vdwg.mxu0
        %1496 = vmatpush.msra.mxu0 0.0
        %1497 = vmatpush.msra.mxu0 0.0
        %1498 = vmatpush.msra.mxu0 0.0
        %1499 = vmatpush.msra.mxu0 0.0
        %1500 = vmatpush.msra.mxu0 0.0
        %1501 = vmatpush.msra.mxu0 0.0
        %1502 = vmatpush.msra.mxu0 0.0
        %1503 = vmatpush.msra.mxu0 0.0
        %1504 = vmatpush.msra.mxu0 0.0
        %1505 = vmatpush.msra.mxu0 0.0
        %1506 = vmatpush.msra.mxu0 0.0
        %1507 = vmatpush.msra.mxu0 0.0
        %1508 = vmatpush.msra.mxu0 0.0
        %1509 = vmatpush.msra.mxu0 0.0
        %v1510 = vand.u32 %v415, 4294901760
        %v1511 = vsub.f32 %v415, %v1510
        %v1512 = vand.u32 %v1511, 4294901760
        %v1513 = vsub.f32 %v1511, %v1512
        %v1514 = vand.u32 %v1513, 4294901760
        %1515 = vmatpush.msra.mxu0 %v1514
        %v1516 = vand.u32 %v414, 4294901760
        %v1517 = vsub.f32 %v414, %v1516
        %v1518 = vand.u32 %v1517, 4294901760
        %v1519 = vsub.f32 %v1517, %v1518
        %v1520 = vand.u32 %v1519, 4294901760
        %1521 = vmatpush.msra.mxu0 %v1520
        %v1522 = vand.u32 %v1098, 4294901760
        %1523 = vmatmul.f32.gmra.mxu0 %v1522
        %v1524 = vpop.f32.mrf.mxu0
        %v1525 = vadd.f32 %v1454, %v1524
        %v1526 = vand.u32 %v1101, 4294901760
        %1527 = vmatmul.f32.gmra.mxu0 %v1526
        %v1528 = vpop.f32.mrf.mxu0
        %v1529 = vadd.f32 %v1462, %v1528
        %v1530 = vand.u32 %v1104, 4294901760
        %1531 = vmatmul.f32.gmra.mxu0 %v1530
        %v1532 = vpop.f32.mrf.mxu0
        %v1533 = vadd.f32 %v1470, %v1532
        %v1534 = vand.u32 %v1107, 4294901760
        %1535 = vmatmul.f32.gmra.mxu0 %v1534
        %v1536 = vpop.f32.mrf.mxu0
        %v1537 = vadd.f32 %v1478, %v1536
        %v1538 = vand.u32 %v1110, 4294901760
        %1539 = vmatmul.f32.gmra.mxu0 %v1538
        %v1540 = vpop.f32.mrf.mxu0
        %v1541 = vadd.f32 %v1486, %v1540
        %v1542 = vand.u32 %v1113, 4294901760
        %1543 = vmatmul.f32.gmra.mxu0 %v1542
        %v1544 = vpop.f32.mrf.mxu0
        %v1545 = vadd.f32 %v1494, %v1544
        %1546 = vdwg.mxu0
        %1547 = vmatpush.msra.mxu0 0.0
        %1548 = vmatpush.msra.mxu0 0.0
        %1549 = vmatpush.msra.mxu0 0.0
        %1550 = vmatpush.msra.mxu0 0.0
        %1551 = vmatpush.msra.mxu0 0.0
        %1552 = vmatpush.msra.mxu0 0.0
        %1553 = vmatpush.msra.mxu0 0.0
        %1554 = vmatpush.msra.mxu0 0.0
        %1555 = vmatpush.msra.mxu0 0.0
        %1556 = vmatpush.msra.mxu0 0.0
        %1557 = vmatpush.msra.mxu0 0.0
        %1558 = vmatpush.msra.mxu0 0.0
        %1559 = vmatpush.msra.mxu0 0.0
        %1560 = vmatpush.msra.mxu0 0.0
        %v1561 = vand.u32 %v415, 4294901760
        %v1562 = vsub.f32 %v415, %v1561
        %1563 = vmatpush.msra.mxu0 %v1562
        %v1564 = vand.u32 %v414, 4294901760
        %v1565 = vsub.f32 %v414, %v1564
        %1566 = vmatpush.msra.mxu0 %v1565
        %v1567 = vand.u32 %v1098, 4294901760
        %v1568 = vsub.f32 %v1098, %v1567
        %1569 = vmatmul.f32.gmra.mxu0 %v1568
        %v1570 = vpop.f32.mrf.mxu0
        %v1571 = vadd.f32 %v1525, %v1570
        %v1572 = vand.u32 %v1101, 4294901760
        %v1573 = vsub.f32 %v1101, %v1572
        %1574 = vmatmul.f32.gmra.mxu0 %v1573
        %v1575 = vpop.f32.mrf.mxu0
        %v1576 = vadd.f32 %v1529, %v1575
        %v1577 = vand.u32 %v1104, 4294901760
        %v1578 = vsub.f32 %v1104, %v1577
        %1579 = vmatmul.f32.gmra.mxu0 %v1578
        %v1580 = vpop.f32.mrf.mxu0
        %v1581 = vadd.f32 %v1533, %v1580
        %v1582 = vand.u32 %v1107, 4294901760
        %v1583 = vsub.f32 %v1107, %v1582
        %1584 = vmatmul.f32.gmra.mxu0 %v1583
        %v1585 = vpop.f32.mrf.mxu0
        %v1586 = vadd.f32 %v1537, %v1585
        %v1587 = vand.u32 %v1110, 4294901760
        %v1588 = vsub.f32 %v1110, %v1587
        %1589 = vmatmul.f32.gmra.mxu0 %v1588
        %v1590 = vpop.f32.mrf.mxu0
        %v1591 = vadd.f32 %v1541, %v1590
        %v1592 = vand.u32 %v1113, 4294901760
        %v1593 = vsub.f32 %v1113, %v1592
        %1594 = vmatmul.f32.gmra.mxu0 %v1593
        %v1595 = vpop.f32.mrf.mxu0
        %v1596 = vadd.f32 %v1545, %v1595
        %1597 = vdwg.mxu0
        %1598 = vmatpush.msra.mxu0 0.0
        %1599 = vmatpush.msra.mxu0 0.0
        %1600 = vmatpush.msra.mxu0 0.0
        %1601 = vmatpush.msra.mxu0 0.0
        %1602 = vmatpush.msra.mxu0 0.0
        %1603 = vmatpush.msra.mxu0 0.0
        %1604 = vmatpush.msra.mxu0 0.0
        %1605 = vmatpush.msra.mxu0 0.0
        %1606 = vmatpush.msra.mxu0 0.0
        %1607 = vmatpush.msra.mxu0 0.0
        %1608 = vmatpush.msra.mxu0 0.0
        %1609 = vmatpush.msra.mxu0 0.0
        %1610 = vmatpush.msra.mxu0 0.0
        %1611 = vmatpush.msra.mxu0 0.0
        %v1612 = vand.u32 %v415, 4294901760
        %1613 = vmatpush.msra.mxu0 %v1612
        %v1614 = vand.u32 %v414, 4294901760
        %1615 = vmatpush.msra.mxu0 %v1614
        %v1616 = vand.u32 %v1098, 4294901760
        %v1617 = vsub.f32 %v1098, %v1616
        %v1618 = vand.u32 %v1617, 4294901760
        %1619 = vmatmul.f32.gmra.mxu0 %v1618
        %v1620 = vpop.f32.mrf.mxu0
        %v1621 = vadd.f32 %v1571, %v1620
        %v1622 = vand.u32 %v1101, 4294901760
        %v1623 = vsub.f32 %v1101, %v1622
        %v1624 = vand.u32 %v1623, 4294901760
        %1625 = vmatmul.f32.gmra.mxu0 %v1624
        %v1626 = vpop.f32.mrf.mxu0
        %v1627 = vadd.f32 %v1576, %v1626
        %v1628 = vand.u32 %v1104, 4294901760
        %v1629 = vsub.f32 %v1104, %v1628
        %v1630 = vand.u32 %v1629, 4294901760
        %1631 = vmatmul.f32.gmra.mxu0 %v1630
        %v1632 = vpop.f32.mrf.mxu0
        %v1633 = vadd.f32 %v1581, %v1632
        %v1634 = vand.u32 %v1107, 4294901760
        %v1635 = vsub.f32 %v1107, %v1634
        %v1636 = vand.u32 %v1635, 4294901760
        %1637 = vmatmul.f32.gmra.mxu0 %v1636
        %v1638 = vpop.f32.mrf.mxu0
        %v1639 = vadd.f32 %v1586, %v1638
        %v1640 = vand.u32 %v1110, 4294901760
        %v1641 = vsub.f32 %v1110, %v1640
        %v1642 = vand.u32 %v1641, 4294901760
        %1643 = vmatmul.f32.gmra.mxu0 %v1642
        %v1644 = vpop.f32.mrf.mxu0
        %v1645 = vadd.f32 %v1591, %v1644
        %v1646 = vand.u32 %v1113, 4294901760
        %v1647 = vsub.f32 %v1113, %v1646
        %v1648 = vand.u32 %v1647, 4294901760
        %1649 = vmatmul.f32.gmra.mxu0 %v1648
        %v1650 = vpop.f32.mrf.mxu0
        %v1651 = vadd.f32 %v1596, %v1650
        %1652 = vdwg.mxu0
        %1653 = vmatpush.msra.mxu0 0.0
        %1654 = vmatpush.msra.mxu0 0.0
        %1655 = vmatpush.msra.mxu0 0.0
        %1656 = vmatpush.msra.mxu0 0.0
        %1657 = vmatpush.msra.mxu0 0.0
        %1658 = vmatpush.msra.mxu0 0.0
        %1659 = vmatpush.msra.mxu0 0.0
        %1660 = vmatpush.msra.mxu0 0.0
        %1661 = vmatpush.msra.mxu0 0.0
        %1662 = vmatpush.msra.mxu0 0.0
        %1663 = vmatpush.msra.mxu0 0.0
        %1664 = vmatpush.msra.mxu0 0.0
        %1665 = vmatpush.msra.mxu0 0.0
        %1666 = vmatpush.msra.mxu0 0.0
        %v1667 = vand.u32 %v415, 4294901760
        %v1668 = vsub.f32 %v415, %v1667
        %v1669 = vand.u32 %v1668, 4294901760
        %1670 = vmatpush.msra.mxu0 %v1669
        %v1671 = vand.u32 %v414, 4294901760
        %v1672 = vsub.f32 %v414, %v1671
        %v1673 = vand.u32 %v1672, 4294901760
        %1674 = vmatpush.msra.mxu0 %v1673
        %v1675 = vand.u32 %v1098, 4294901760
        %1676 = vmatmul.f32.gmra.mxu0 %v1675
        %v1677 = vpop.f32.mrf.mxu0
        %v1678 = vadd.f32 %v1621, %v1677
        %v1679 = vand.u32 %v1101, 4294901760
        %1680 = vmatmul.f32.gmra.mxu0 %v1679
        %v1681 = vpop.f32.mrf.mxu0
        %v1682 = vadd.f32 %v1627, %v1681
        %v1683 = vand.u32 %v1104, 4294901760
        %1684 = vmatmul.f32.gmra.mxu0 %v1683
        %v1685 = vpop.f32.mrf.mxu0
        %v1686 = vadd.f32 %v1633, %v1685
        %v1687 = vand.u32 %v1107, 4294901760
        %1688 = vmatmul.f32.gmra.mxu0 %v1687
        %v1689 = vpop.f32.mrf.mxu0
        %v1690 = vadd.f32 %v1639, %v1689
        %v1691 = vand.u32 %v1110, 4294901760
        %1692 = vmatmul.f32.gmra.mxu0 %v1691
        %v1693 = vpop.f32.mrf.mxu0
        %v1694 = vadd.f32 %v1645, %v1693
        %v1695 = vand.u32 %v1113, 4294901760
        %1696 = vmatmul.f32.gmra.mxu0 %v1695
        %v1697 = vpop.f32.mrf.mxu0
        %v1698 = vadd.f32 %v1651, %v1697
        %1699 = vdwg.mxu0
        %1700 = vmatpush.msra.mxu0 0.0
        %1701 = vmatpush.msra.mxu0 0.0
        %1702 = vmatpush.msra.mxu0 0.0
        %1703 = vmatpush.msra.mxu0 0.0
        %1704 = vmatpush.msra.mxu0 0.0
        %1705 = vmatpush.msra.mxu0 0.0
        %1706 = vmatpush.msra.mxu0 0.0
        %1707 = vmatpush.msra.mxu0 0.0
        %1708 = vmatpush.msra.mxu0 0.0
        %1709 = vmatpush.msra.mxu0 0.0
        %1710 = vmatpush.msra.mxu0 0.0
        %1711 = vmatpush.msra.mxu0 0.0
        %1712 = vmatpush.msra.mxu0 0.0
        %1713 = vmatpush.msra.mxu0 0.0
        %v1714 = vand.u32 %v415, 4294901760
        %1715 = vmatpush.msra.mxu0 %v1714
        %v1716 = vand.u32 %v414, 4294901760
        %1717 = vmatpush.msra.mxu0 %v1716
        %v1718 = vand.u32 %v1098, 4294901760
        %1719 = vmatmul.f32.gmra.mxu0 %v1718
        %v1720 = vpop.f32.mrf.mxu0
        %v1721 = vadd.f32 %v1678, %v1720
        %v1722 = vand.u32 %v1101, 4294901760
        %1723 = vmatmul.f32.gmra.mxu0 %v1722
        %v1724 = vpop.f32.mrf.mxu0
        %v1725 = vadd.f32 %v1682, %v1724
        %v1726 = vand.u32 %v1104, 4294901760
        %1727 = vmatmul.f32.gmra.mxu0 %v1726
        %v1728 = vpop.f32.mrf.mxu0
        %v1729 = vadd.f32 %v1686, %v1728
        %v1730 = vand.u32 %v1107, 4294901760
        %1731 = vmatmul.f32.gmra.mxu0 %v1730
        %v1732 = vpop.f32.mrf.mxu0
        %v1733 = vadd.f32 %v1690, %v1732
        %v1734 = vand.u32 %v1110, 4294901760
        %1735 = vmatmul.f32.gmra.mxu0 %v1734
        %v1736 = vpop.f32.mrf.mxu0
        %v1737 = vadd.f32 %v1694, %v1736
        %v1738 = vand.u32 %v1113, 4294901760
        %1739 = vmatmul.f32.gmra.mxu0 %v1738
        %v1740 = vpop.f32.mrf.mxu0
        %v1741 = vadd.f32 %v1698, %v1740
        %1742 = vdwg.mxu0
        %v1743 = vld [vmem:[%s3] sm:$0xff]
        %v1744 = vld [vmem:[%s3 + $0x8] sm:$0xff]
        %v1745 = vld [vmem:[%s3 + $0x10] sm:$0xff]
        %v1746 = vld [vmem:[%s3 + $0x18] sm:$0xff]
        %v1747 = vld [vmem:[%s3 + $0x20] sm:$0xff]
        %v1748 = vld [vmem:[%s3 + $0x28] sm:$0xff]
        %1750 = vset.pattern.permute.xlu0 0
        %1751 = vperm.xlu0 %1750, %v1743
        %v1752 = vpop.permute.xlu0 %1751
        %1755 = vset.pattern.permute.xlu0 0
        %1756 = vperm.xlu0 %1755, %v1744
        %v1757 = vpop.permute.xlu0 %1756
        %1760 = vset.pattern.permute.xlu0 0
        %1761 = vperm.xlu0 %1760, %v1745
        %v1762 = vpop.permute.xlu0 %1761
        %1765 = vset.pattern.permute.xlu0 0
        %1766 = vperm.xlu0 %1765, %v1746
        %v1767 = vpop.permute.xlu0 %1766
        %1770 = vset.pattern.permute.xlu0 0
        %1771 = vperm.xlu0 %1770, %v1747
        %v1772 = vpop.permute.xlu0 %1771
        %1775 = vset.pattern.permute.xlu0 0
        %1776 = vperm.xlu0 %1775, %v1748
        %v1777 = vpop.permute.xlu0 %1776
        %v1779 = vadd.f32 %v1407, %v1752
        %v1780 = vadd.f32 %v1721, %v1752
        %v1781 = vadd.f32 %v1411, %v1757
        %v1782 = vadd.f32 %v1725, %v1757
        %v1783 = vadd.f32 %v1415, %v1762
        %v1784 = vadd.f32 %v1729, %v1762
        %v1785 = vadd.f32 %v1419, %v1767
        %v1786 = vadd.f32 %v1733, %v1767
        %v1787 = vadd.f32 %v1423, %v1772
        %v1788 = vadd.f32 %v1737, %v1772
        %v1789 = vadd.f32 %v1427, %v1777
        %v1790 = vadd.f32 %v1741, %v1777
        %v1791 = vtanh.pop %v1779
        %v1792 = vtanh.pop %v1780
        %v1793 = vtanh.pop %v1781
        %v1794 = vtanh.pop %v1782
        %v1795 = vxor.u32 %v1783, 2147483648
        %v1796 = vxor.u32 %v1784, 2147483648
        %v1797 = vxor.u32 %v1785, 2147483648
        %v1798 = vxor.u32 %v1786, 2147483648
        %v1799 = vmul.f32 %v1795, 1.442695
        %v1800 = vpow.pop %v1799
        %v1801 = vmul.f32 %v1796, 1.442695
        %v1802 = vpow.pop %v1801
        %v1803 = vmul.f32 %v1797, 1.442695
        %v1804 = vpow.pop %v1803
        %v1805 = vmul.f32 %v1798, 1.442695
        %v1806 = vpow.pop %v1805
        %v1807 = vadd.f32 %v1800, 1.0
        %v1808 = vadd.f32 %v1802, 1.0
        %v1809 = vadd.f32 %v1804, 1.0
        %v1810 = vadd.f32 %v1806, 1.0
        %v1811 = vrcp.pop %v1807
        %v1812 = vmul.f32 %v1807, %v1811
        %v1813 = vsub.f32 1.0, %v1812
        %v1814 = vmul.f32 %v1811, %v1813
        %v1815 = vadd.f32 %v1811, %v1814
        %vm1816 = vweird.f32 %v1807
        %vm1817 = vweird.f32 %v1811
        %vm1818 = vmor %vm1816, %vm1817
        %v1819 = vsel %vm1818, %v1811, %v1815
        %v1820 = vand.u32 2147483647, %v1807
        %vm1821 = vcmp.eq.f32.partialorder %v1820, 8.507059e+37
        %v1822 = vand.u32 %v1807, 2147483648
        %v1823 = vor.u32 1.1754944e-38, %v1822
        %v1824 = vsel %vm1821, %v1823, %v1819
        %v1825 = vmul.f32 1.0, %v1824
        %v1826 = vrcp.pop %v1808
        %v1827 = vmul.f32 %v1808, %v1826
        %v1828 = vsub.f32 1.0, %v1827
        %v1829 = vmul.f32 %v1826, %v1828
        %v1830 = vadd.f32 %v1826, %v1829
        %vm1831 = vweird.f32 %v1808
        %vm1832 = vweird.f32 %v1826
        %vm1833 = vmor %vm1831, %vm1832
        %v1834 = vsel %vm1833, %v1826, %v1830
        %v1835 = vand.u32 2147483647, %v1808
        %vm1836 = vcmp.eq.f32.partialorder %v1835, 8.507059e+37
        %v1837 = vand.u32 %v1808, 2147483648
        %v1838 = vor.u32 1.1754944e-38, %v1837
        %v1839 = vsel %vm1836, %v1838, %v1834
        %v1840 = vmul.f32 1.0, %v1839
        %v1841 = vrcp.pop %v1809
        %v1842 = vmul.f32 %v1809, %v1841
        %v1843 = vsub.f32 1.0, %v1842
        %v1844 = vmul.f32 %v1841, %v1843
        %v1845 = vadd.f32 %v1841, %v1844
        %vm1846 = vweird.f32 %v1809
        %vm1847 = vweird.f32 %v1841
        %vm1848 = vmor %vm1846, %vm1847
        %v1849 = vsel %vm1848, %v1841, %v1845
        %v1850 = vand.u32 2147483647, %v1809
        %vm1851 = vcmp.eq.f32.partialorder %v1850, 8.507059e+37
        %v1852 = vand.u32 %v1809, 2147483648
        %v1853 = vor.u32 1.1754944e-38, %v1852
        %v1854 = vsel %vm1851, %v1853, %v1849
        %v1855 = vmul.f32 1.0, %v1854
        %v1856 = vrcp.pop %v1810
        %v1857 = vmul.f32 %v1810, %v1856
        %v1858 = vsub.f32 1.0, %v1857
        %v1859 = vmul.f32 %v1856, %v1858
        %v1860 = vadd.f32 %v1856, %v1859
        %vm1861 = vweird.f32 %v1810
        %vm1862 = vweird.f32 %v1856
        %vm1863 = vmor %vm1861, %vm1862
        %v1864 = vsel %vm1863, %v1856, %v1860
        %v1865 = vand.u32 2147483647, %v1810
        %vm1866 = vcmp.eq.f32.partialorder %v1865, 8.507059e+37
        %v1867 = vand.u32 %v1810, 2147483648
        %v1868 = vor.u32 1.1754944e-38, %v1867
        %v1869 = vsel %vm1866, %v1868, %v1864
        %v1870 = vmul.f32 1.0, %v1869
        %v1871 = vmul.f32 %v1791, %v1825
        %v1872 = vmul.f32 %v1792, %v1840
        %v1873 = vmul.f32 %v1793, %v1855
        %v1874 = vmul.f32 %v1794, %v1870
        %v1875 = vadd.f32 %v1871, %v1787
        %v1876 = vadd.f32 %v1872, %v1788
        %v1877 = vadd.f32 %v1873, %v1789
        %v1878 = vadd.f32 %v1874, %v1790
        %s1879 = scalar_lea.vmem %s2, 96
        %v1880 = vld [vmem:[%s1879] sm:$0xff]
        %v1881 = vld [vmem:[%s1879 + $0x8] sm:$0xff]
        %v1882 = vld [vmem:[%s1879 + $0x10] sm:$0xff]
        %v1883 = vld [vmem:[%s1879 + $0x18] sm:$0xff]
        %v1884 = vld [vmem:[%s1879 + $0x20] sm:$0xff]
        %v1885 = vld [vmem:[%s1879 + $0x28] sm:$0xff]
        %s1886 = scalar_lea.vmem %s2, 144
        %v1887 = vld [vmem:[%s1886] sm:$0xff]
        %v1888 = vld [vmem:[%s1886 + $0x8] sm:$0xff]
        %v1889 = vld [vmem:[%s1886 + $0x10] sm:$0xff]
        %v1890 = vld [vmem:[%s1886 + $0x18] sm:$0xff]
        %v1891 = vld [vmem:[%s1886 + $0x20] sm:$0xff]
        %v1892 = vld [vmem:[%s1886 + $0x28] sm:$0xff]
        %1897 = vrot.lane.b32.xlu0 %v1875, 127
        %v1898 = vpop.permute.xlu0 %1897
        %1899 = vrot.lane.b32.xlu0 %v1876, 127
        %v1900 = vpop.permute.xlu0 %1899
        %1901 = vrot.lane.b32.xlu0 %v1877, 127
        %v1902 = vpop.permute.xlu0 %1901
        %1903 = vrot.lane.b32.xlu0 %v1878, 127
        %v1904 = vpop.permute.xlu0 %1903
        %v1905 = vsel %vm443, %v1898, %v1900
        %v1906 = vsel %vm443, %v1902, %v1904
        %v1912 = vsel %vm450, %v1887, 0
        %v1915 = vsel %vm450, %v1888, 0
        %v1918 = vsel %vm450, %v1889, 0
        %v1921 = vsel %vm450, %v1890, 0
        %v1924 = vsel %vm450, %v1891, 0
        %v1927 = vsel %vm450, %v1892, 0
        %1929 = vmatpush.msra.mxu0 0.0
        %1930 = vmatpush.msra.mxu0 0.0
        %1931 = vmatpush.msra.mxu0 0.0
        %1932 = vmatpush.msra.mxu0 0.0
        %1933 = vmatpush.msra.mxu0 0.0
        %1934 = vmatpush.msra.mxu0 0.0
        %1935 = vmatpush.msra.mxu0 0.0
        %1936 = vmatpush.msra.mxu0 0.0
        %1937 = vmatpush.msra.mxu0 0.0
        %1938 = vmatpush.msra.mxu0 0.0
        %1939 = vmatpush.msra.mxu0 0.0
        %1940 = vmatpush.msra.mxu0 0.0
        %1941 = vmatpush.msra.mxu0 0.0
        %1942 = vmatpush.msra.mxu0 0.0
        %v1943 = vand.u32 %v1906, 4294901760
        %1944 = vmatpush.msra.mxu0 %v1943
        %v1945 = vand.u32 %v1905, 4294901760
        %1946 = vmatpush.msra.mxu0 %v1945
        %v1947 = vand.u32 %v1912, 4294901760
        %v1948 = vsub.f32 %v1912, %v1947
        %v1949 = vand.u32 %v1948, 4294901760
        %v1950 = vsub.f32 %v1948, %v1949
        %v1951 = vand.u32 %v1950, 4294901760
        %1952 = vmatmul.f32.gmra.mxu0 %v1951
        %v1953 = vpop.f32.mrf.mxu0
        %v1954 = vadd.f32 0.0, %v1953
        %v1955 = vand.u32 %v1915, 4294901760
        %v1956 = vsub.f32 %v1915, %v1955
        %v1957 = vand.u32 %v1956, 4294901760
        %v1958 = vsub.f32 %v1956, %v1957
        %v1959 = vand.u32 %v1958, 4294901760
        %1960 = vmatmul.f32.gmra.mxu0 %v1959
        %v1961 = vpop.f32.mrf.mxu0
        %v1962 = vadd.f32 0.0, %v1961
        %v1963 = vand.u32 %v1918, 4294901760
        %v1964 = vsub.f32 %v1918, %v1963
        %v1965 = vand.u32 %v1964, 4294901760
        %v1966 = vsub.f32 %v1964, %v1965
        %v1967 = vand.u32 %v1966, 4294901760
        %1968 = vmatmul.f32.gmra.mxu0 %v1967
        %v1969 = vpop.f32.mrf.mxu0
        %v1970 = vadd.f32 0.0, %v1969
        %v1971 = vand.u32 %v1921, 4294901760
        %v1972 = vsub.f32 %v1921, %v1971
        %v1973 = vand.u32 %v1972, 4294901760
        %v1974 = vsub.f32 %v1972, %v1973
        %v1975 = vand.u32 %v1974, 4294901760
        %1976 = vmatmul.f32.gmra.mxu0 %v1975
        %v1977 = vpop.f32.mrf.mxu0
        %v1978 = vadd.f32 0.0, %v1977
        %v1979 = vand.u32 %v1924, 4294901760
        %v1980 = vsub.f32 %v1924, %v1979
        %v1981 = vand.u32 %v1980, 4294901760
        %v1982 = vsub.f32 %v1980, %v1981
        %v1983 = vand.u32 %v1982, 4294901760
        %1984 = vmatmul.f32.gmra.mxu0 %v1983
        %v1985 = vpop.f32.mrf.mxu0
        %v1986 = vadd.f32 0.0, %v1985
        %v1987 = vand.u32 %v1927, 4294901760
        %v1988 = vsub.f32 %v1927, %v1987
        %v1989 = vand.u32 %v1988, 4294901760
        %v1990 = vsub.f32 %v1988, %v1989
        %v1991 = vand.u32 %v1990, 4294901760
        %1992 = vmatmul.f32.gmra.mxu0 %v1991
        %v1993 = vpop.f32.mrf.mxu0
        %v1994 = vadd.f32 0.0, %v1993
        %1995 = vdwg.mxu0
        %1996 = vmatpush.msra.mxu0 0.0
        %1997 = vmatpush.msra.mxu0 0.0
        %1998 = vmatpush.msra.mxu0 0.0
        %1999 = vmatpush.msra.mxu0 0.0
        %2000 = vmatpush.msra.mxu0 0.0
        %2001 = vmatpush.msra.mxu0 0.0
        %2002 = vmatpush.msra.mxu0 0.0
        %2003 = vmatpush.msra.mxu0 0.0
        %2004 = vmatpush.msra.mxu0 0.0
        %2005 = vmatpush.msra.mxu0 0.0
        %2006 = vmatpush.msra.mxu0 0.0
        %2007 = vmatpush.msra.mxu0 0.0
        %2008 = vmatpush.msra.mxu0 0.0
        %2009 = vmatpush.msra.mxu0 0.0
        %v2010 = vand.u32 %v1906, 4294901760
        %v2011 = vsub.f32 %v1906, %v2010
        %v2012 = vand.u32 %v2011, 4294901760
        %v2013 = vsub.f32 %v2011, %v2012
        %v2014 = vand.u32 %v2013, 4294901760
        %2015 = vmatpush.msra.mxu0 %v2014
        %v2016 = vand.u32 %v1905, 4294901760
        %v2017 = vsub.f32 %v1905, %v2016
        %v2018 = vand.u32 %v2017, 4294901760
        %v2019 = vsub.f32 %v2017, %v2018
        %v2020 = vand.u32 %v2019, 4294901760
        %2021 = vmatpush.msra.mxu0 %v2020
        %v2022 = vand.u32 %v1912, 4294901760
        %2023 = vmatmul.f32.gmra.mxu0 %v2022
        %v2024 = vpop.f32.mrf.mxu0
        %v2025 = vadd.f32 %v1954, %v2024
        %v2026 = vand.u32 %v1915, 4294901760
        %2027 = vmatmul.f32.gmra.mxu0 %v2026
        %v2028 = vpop.f32.mrf.mxu0
        %v2029 = vadd.f32 %v1962, %v2028
        %v2030 = vand.u32 %v1918, 4294901760
        %2031 = vmatmul.f32.gmra.mxu0 %v2030
        %v2032 = vpop.f32.mrf.mxu0
        %v2033 = vadd.f32 %v1970, %v2032
        %v2034 = vand.u32 %v1921, 4294901760
        %2035 = vmatmul.f32.gmra.mxu0 %v2034
        %v2036 = vpop.f32.mrf.mxu0
        %v2037 = vadd.f32 %v1978, %v2036
        %v2038 = vand.u32 %v1924, 4294901760
        %2039 = vmatmul.f32.gmra.mxu0 %v2038
        %v2040 = vpop.f32.mrf.mxu0
        %v2041 = vadd.f32 %v1986, %v2040
        %v2042 = vand.u32 %v1927, 4294901760
        %2043 = vmatmul.f32.gmra.mxu0 %v2042
        %v2044 = vpop.f32.mrf.mxu0
        %v2045 = vadd.f32 %v1994, %v2044
        %2046 = vdwg.mxu0
        %2047 = vmatpush.msra.mxu0 0.0
        %2048 = vmatpush.msra.mxu0 0.0
        %2049 = vmatpush.msra.mxu0 0.0
        %2050 = vmatpush.msra.mxu0 0.0
        %2051 = vmatpush.msra.mxu0 0.0
        %2052 = vmatpush.msra.mxu0 0.0
        %2053 = vmatpush.msra.mxu0 0.0
        %2054 = vmatpush.msra.mxu0 0.0
        %2055 = vmatpush.msra.mxu0 0.0
        %2056 = vmatpush.msra.mxu0 0.0
        %2057 = vmatpush.msra.mxu0 0.0
        %2058 = vmatpush.msra.mxu0 0.0
        %2059 = vmatpush.msra.mxu0 0.0
        %2060 = vmatpush.msra.mxu0 0.0
        %v2061 = vand.u32 %v1906, 4294901760
        %v2062 = vsub.f32 %v1906, %v2061
        %2063 = vmatpush.msra.mxu0 %v2062
        %v2064 = vand.u32 %v1905, 4294901760
        %v2065 = vsub.f32 %v1905, %v2064
        %2066 = vmatpush.msra.mxu0 %v2065
        %v2067 = vand.u32 %v1912, 4294901760
        %v2068 = vsub.f32 %v1912, %v2067
        %2069 = vmatmul.f32.gmra.mxu0 %v2068
        %v2070 = vpop.f32.mrf.mxu0
        %v2071 = vadd.f32 %v2025, %v2070
        %v2072 = vand.u32 %v1915, 4294901760
        %v2073 = vsub.f32 %v1915, %v2072
        %2074 = vmatmul.f32.gmra.mxu0 %v2073
        %v2075 = vpop.f32.mrf.mxu0
        %v2076 = vadd.f32 %v2029, %v2075
        %v2077 = vand.u32 %v1918, 4294901760
        %v2078 = vsub.f32 %v1918, %v2077
        %2079 = vmatmul.f32.gmra.mxu0 %v2078
        %v2080 = vpop.f32.mrf.mxu0
        %v2081 = vadd.f32 %v2033, %v2080
        %v2082 = vand.u32 %v1921, 4294901760
        %v2083 = vsub.f32 %v1921, %v2082
        %2084 = vmatmul.f32.gmra.mxu0 %v2083
        %v2085 = vpop.f32.mrf.mxu0
        %v2086 = vadd.f32 %v2037, %v2085
        %v2087 = vand.u32 %v1924, 4294901760
        %v2088 = vsub.f32 %v1924, %v2087
        %2089 = vmatmul.f32.gmra.mxu0 %v2088
        %v2090 = vpop.f32.mrf.mxu0
        %v2091 = vadd.f32 %v2041, %v2090
        %v2092 = vand.u32 %v1927, 4294901760
        %v2093 = vsub.f32 %v1927, %v2092
        %2094 = vmatmul.f32.gmra.mxu0 %v2093
        %v2095 = vpop.f32.mrf.mxu0
        %v2096 = vadd.f32 %v2045, %v2095
        %2097 = vdwg.mxu0
        %2098 = vmatpush.msra.mxu0 0.0
        %2099 = vmatpush.msra.mxu0 0.0
        %2100 = vmatpush.msra.mxu0 0.0
        %2101 = vmatpush.msra.mxu0 0.0
        %2102 = vmatpush.msra.mxu0 0.0
        %2103 = vmatpush.msra.mxu0 0.0
        %2104 = vmatpush.msra.mxu0 0.0
        %2105 = vmatpush.msra.mxu0 0.0
        %2106 = vmatpush.msra.mxu0 0.0
        %2107 = vmatpush.msra.mxu0 0.0
        %2108 = vmatpush.msra.mxu0 0.0
        %2109 = vmatpush.msra.mxu0 0.0
        %2110 = vmatpush.msra.mxu0 0.0
        %2111 = vmatpush.msra.mxu0 0.0
        %v2112 = vand.u32 %v1906, 4294901760
        %2113 = vmatpush.msra.mxu0 %v2112
        %v2114 = vand.u32 %v1905, 4294901760
        %2115 = vmatpush.msra.mxu0 %v2114
        %v2116 = vand.u32 %v1912, 4294901760
        %v2117 = vsub.f32 %v1912, %v2116
        %v2118 = vand.u32 %v2117, 4294901760
        %2119 = vmatmul.f32.gmra.mxu0 %v2118
        %v2120 = vpop.f32.mrf.mxu0
        %v2121 = vadd.f32 %v2071, %v2120
        %v2122 = vand.u32 %v1915, 4294901760
        %v2123 = vsub.f32 %v1915, %v2122
        %v2124 = vand.u32 %v2123, 4294901760
        %2125 = vmatmul.f32.gmra.mxu0 %v2124
        %v2126 = vpop.f32.mrf.mxu0
        %v2127 = vadd.f32 %v2076, %v2126
        %v2128 = vand.u32 %v1918, 4294901760
        %v2129 = vsub.f32 %v1918, %v2128
        %v2130 = vand.u32 %v2129, 4294901760
        %2131 = vmatmul.f32.gmra.mxu0 %v2130
        %v2132 = vpop.f32.mrf.mxu0
        %v2133 = vadd.f32 %v2081, %v2132
        %v2134 = vand.u32 %v1921, 4294901760
        %v2135 = vsub.f32 %v1921, %v2134
        %v2136 = vand.u32 %v2135, 4294901760
        %2137 = vmatmul.f32.gmra.mxu0 %v2136
        %v2138 = vpop.f32.mrf.mxu0
        %v2139 = vadd.f32 %v2086, %v2138
        %v2140 = vand.u32 %v1924, 4294901760
        %v2141 = vsub.f32 %v1924, %v2140
        %v2142 = vand.u32 %v2141, 4294901760
        %2143 = vmatmul.f32.gmra.mxu0 %v2142
        %v2144 = vpop.f32.mrf.mxu0
        %v2145 = vadd.f32 %v2091, %v2144
        %v2146 = vand.u32 %v1927, 4294901760
        %v2147 = vsub.f32 %v1927, %v2146
        %v2148 = vand.u32 %v2147, 4294901760
        %2149 = vmatmul.f32.gmra.mxu0 %v2148
        %v2150 = vpop.f32.mrf.mxu0
        %v2151 = vadd.f32 %v2096, %v2150
        %2152 = vdwg.mxu0
        %2153 = vmatpush.msra.mxu0 0.0
        %2154 = vmatpush.msra.mxu0 0.0
        %2155 = vmatpush.msra.mxu0 0.0
        %2156 = vmatpush.msra.mxu0 0.0
        %2157 = vmatpush.msra.mxu0 0.0
        %2158 = vmatpush.msra.mxu0 0.0
        %2159 = vmatpush.msra.mxu0 0.0
        %2160 = vmatpush.msra.mxu0 0.0
        %2161 = vmatpush.msra.mxu0 0.0
        %2162 = vmatpush.msra.mxu0 0.0
        %2163 = vmatpush.msra.mxu0 0.0
        %2164 = vmatpush.msra.mxu0 0.0
        %2165 = vmatpush.msra.mxu0 0.0
        %2166 = vmatpush.msra.mxu0 0.0
        %v2167 = vand.u32 %v1906, 4294901760
        %v2168 = vsub.f32 %v1906, %v2167
        %v2169 = vand.u32 %v2168, 4294901760
        %2170 = vmatpush.msra.mxu0 %v2169
        %v2171 = vand.u32 %v1905, 4294901760
        %v2172 = vsub.f32 %v1905, %v2171
        %v2173 = vand.u32 %v2172, 4294901760
        %2174 = vmatpush.msra.mxu0 %v2173
        %v2175 = vand.u32 %v1912, 4294901760
        %2176 = vmatmul.f32.gmra.mxu0 %v2175
        %v2177 = vpop.f32.mrf.mxu0
        %v2178 = vadd.f32 %v2121, %v2177
        %v2179 = vand.u32 %v1915, 4294901760
        %2180 = vmatmul.f32.gmra.mxu0 %v2179
        %v2181 = vpop.f32.mrf.mxu0
        %v2182 = vadd.f32 %v2127, %v2181
        %v2183 = vand.u32 %v1918, 4294901760
        %2184 = vmatmul.f32.gmra.mxu0 %v2183
        %v2185 = vpop.f32.mrf.mxu0
        %v2186 = vadd.f32 %v2133, %v2185
        %v2187 = vand.u32 %v1921, 4294901760
        %2188 = vmatmul.f32.gmra.mxu0 %v2187
        %v2189 = vpop.f32.mrf.mxu0
        %v2190 = vadd.f32 %v2139, %v2189
        %v2191 = vand.u32 %v1924, 4294901760
        %2192 = vmatmul.f32.gmra.mxu0 %v2191
        %v2193 = vpop.f32.mrf.mxu0
        %v2194 = vadd.f32 %v2145, %v2193
        %v2195 = vand.u32 %v1927, 4294901760
        %2196 = vmatmul.f32.gmra.mxu0 %v2195
        %v2197 = vpop.f32.mrf.mxu0
        %v2198 = vadd.f32 %v2151, %v2197
        %2199 = vdwg.mxu0
        %2200 = vmatpush.msra.mxu0 0.0
        %2201 = vmatpush.msra.mxu0 0.0
        %2202 = vmatpush.msra.mxu0 0.0
        %2203 = vmatpush.msra.mxu0 0.0
        %2204 = vmatpush.msra.mxu0 0.0
        %2205 = vmatpush.msra.mxu0 0.0
        %2206 = vmatpush.msra.mxu0 0.0
        %2207 = vmatpush.msra.mxu0 0.0
        %2208 = vmatpush.msra.mxu0 0.0
        %2209 = vmatpush.msra.mxu0 0.0
        %2210 = vmatpush.msra.mxu0 0.0
        %2211 = vmatpush.msra.mxu0 0.0
        %2212 = vmatpush.msra.mxu0 0.0
        %2213 = vmatpush.msra.mxu0 0.0
        %v2214 = vand.u32 %v1906, 4294901760
        %2215 = vmatpush.msra.mxu0 %v2214
        %v2216 = vand.u32 %v1905, 4294901760
        %2217 = vmatpush.msra.mxu0 %v2216
        %v2218 = vand.u32 %v1912, 4294901760
        %2219 = vmatmul.f32.gmra.mxu0 %v2218
        %v2220 = vpop.f32.mrf.mxu0
        %v2221 = vadd.f32 %v2178, %v2220
        %v2222 = vand.u32 %v1915, 4294901760
        %2223 = vmatmul.f32.gmra.mxu0 %v2222
        %v2224 = vpop.f32.mrf.mxu0
        %v2225 = vadd.f32 %v2182, %v2224
        %v2226 = vand.u32 %v1918, 4294901760
        %2227 = vmatmul.f32.gmra.mxu0 %v2226
        %v2228 = vpop.f32.mrf.mxu0
        %v2229 = vadd.f32 %v2186, %v2228
        %v2230 = vand.u32 %v1921, 4294901760
        %2231 = vmatmul.f32.gmra.mxu0 %v2230
        %v2232 = vpop.f32.mrf.mxu0
        %v2233 = vadd.f32 %v2190, %v2232
        %v2234 = vand.u32 %v1924, 4294901760
        %2235 = vmatmul.f32.gmra.mxu0 %v2234
        %v2236 = vpop.f32.mrf.mxu0
        %v2237 = vadd.f32 %v2194, %v2236
        %v2238 = vand.u32 %v1927, 4294901760
        %2239 = vmatmul.f32.gmra.mxu0 %v2238
        %v2240 = vpop.f32.mrf.mxu0
        %v2241 = vadd.f32 %v2198, %v2240
        %2242 = vdwg.mxu0
        %2243 = vmatpush.msra.mxu0 0.0
        %2244 = vmatpush.msra.mxu0 0.0
        %2245 = vmatpush.msra.mxu0 0.0
        %2246 = vmatpush.msra.mxu0 0.0
        %2247 = vmatpush.msra.mxu0 0.0
        %2248 = vmatpush.msra.mxu0 0.0
        %2249 = vmatpush.msra.mxu0 0.0
        %2250 = vmatpush.msra.mxu0 0.0
        %2251 = vmatpush.msra.mxu0 0.0
        %2252 = vmatpush.msra.mxu0 0.0
        %2253 = vmatpush.msra.mxu0 0.0
        %2254 = vmatpush.msra.mxu0 0.0
        %2255 = vmatpush.msra.mxu0 0.0
        %2256 = vmatpush.msra.mxu0 0.0
        %v2257 = vand.u32 %v1904, 4294901760
        %2258 = vmatpush.msra.mxu0 %v2257
        %v2259 = vand.u32 %v1900, 4294901760
        %2260 = vmatpush.msra.mxu0 %v2259
        %v2261 = vand.u32 %v1912, 4294901760
        %v2262 = vsub.f32 %v1912, %v2261
        %v2263 = vand.u32 %v2262, 4294901760
        %v2264 = vsub.f32 %v2262, %v2263
        %v2265 = vand.u32 %v2264, 4294901760
        %2266 = vmatmul.f32.gmra.mxu0 %v2265
        %v2267 = vpop.f32.mrf.mxu0
        %v2268 = vadd.f32 0.0, %v2267
        %v2269 = vand.u32 %v1915, 4294901760
        %v2270 = vsub.f32 %v1915, %v2269
        %v2271 = vand.u32 %v2270, 4294901760
        %v2272 = vsub.f32 %v2270, %v2271
        %v2273 = vand.u32 %v2272, 4294901760
        %2274 = vmatmul.f32.gmra.mxu0 %v2273
        %v2275 = vpop.f32.mrf.mxu0
        %v2276 = vadd.f32 0.0, %v2275
        %v2277 = vand.u32 %v1918, 4294901760
        %v2278 = vsub.f32 %v1918, %v2277
        %v2279 = vand.u32 %v2278, 4294901760
        %v2280 = vsub.f32 %v2278, %v2279
        %v2281 = vand.u32 %v2280, 4294901760
        %2282 = vmatmul.f32.gmra.mxu0 %v2281
        %v2283 = vpop.f32.mrf.mxu0
        %v2284 = vadd.f32 0.0, %v2283
        %v2285 = vand.u32 %v1921, 4294901760
        %v2286 = vsub.f32 %v1921, %v2285
        %v2287 = vand.u32 %v2286, 4294901760
        %v2288 = vsub.f32 %v2286, %v2287
        %v2289 = vand.u32 %v2288, 4294901760
        %2290 = vmatmul.f32.gmra.mxu0 %v2289
        %v2291 = vpop.f32.mrf.mxu0
        %v2292 = vadd.f32 0.0, %v2291
        %v2293 = vand.u32 %v1924, 4294901760
        %v2294 = vsub.f32 %v1924, %v2293
        %v2295 = vand.u32 %v2294, 4294901760
        %v2296 = vsub.f32 %v2294, %v2295
        %v2297 = vand.u32 %v2296, 4294901760
        %2298 = vmatmul.f32.gmra.mxu0 %v2297
        %v2299 = vpop.f32.mrf.mxu0
        %v2300 = vadd.f32 0.0, %v2299
        %v2301 = vand.u32 %v1927, 4294901760
        %v2302 = vsub.f32 %v1927, %v2301
        %v2303 = vand.u32 %v2302, 4294901760
        %v2304 = vsub.f32 %v2302, %v2303
        %v2305 = vand.u32 %v2304, 4294901760
        %2306 = vmatmul.f32.gmra.mxu0 %v2305
        %v2307 = vpop.f32.mrf.mxu0
        %v2308 = vadd.f32 0.0, %v2307
        %2309 = vdwg.mxu0
        %2310 = vmatpush.msra.mxu0 0.0
        %2311 = vmatpush.msra.mxu0 0.0
        %2312 = vmatpush.msra.mxu0 0.0
        %2313 = vmatpush.msra.mxu0 0.0
        %2314 = vmatpush.msra.mxu0 0.0
        %2315 = vmatpush.msra.mxu0 0.0
        %2316 = vmatpush.msra.mxu0 0.0
        %2317 = vmatpush.msra.mxu0 0.0
        %2318 = vmatpush.msra.mxu0 0.0
        %2319 = vmatpush.msra.mxu0 0.0
        %2320 = vmatpush.msra.mxu0 0.0
        %2321 = vmatpush.msra.mxu0 0.0
        %2322 = vmatpush.msra.mxu0 0.0
        %2323 = vmatpush.msra.mxu0 0.0
        %v2324 = vand.u32 %v1904, 4294901760
        %v2325 = vsub.f32 %v1904, %v2324
        %v2326 = vand.u32 %v2325, 4294901760
        %v2327 = vsub.f32 %v2325, %v2326
        %v2328 = vand.u32 %v2327, 4294901760
        %2329 = vmatpush.msra.mxu0 %v2328
        %v2330 = vand.u32 %v1900, 4294901760
        %v2331 = vsub.f32 %v1900, %v2330
        %v2332 = vand.u32 %v2331, 4294901760
        %v2333 = vsub.f32 %v2331, %v2332
        %v2334 = vand.u32 %v2333, 4294901760
        %2335 = vmatpush.msra.mxu0 %v2334
        %v2336 = vand.u32 %v1912, 4294901760
        %2337 = vmatmul.f32.gmra.mxu0 %v2336
        %v2338 = vpop.f32.mrf.mxu0
        %v2339 = vadd.f32 %v2268, %v2338
        %v2340 = vand.u32 %v1915, 4294901760
        %2341 = vmatmul.f32.gmra.mxu0 %v2340
        %v2342 = vpop.f32.mrf.mxu0
        %v2343 = vadd.f32 %v2276, %v2342
        %v2344 = vand.u32 %v1918, 4294901760
        %2345 = vmatmul.f32.gmra.mxu0 %v2344
        %v2346 = vpop.f32.mrf.mxu0
        %v2347 = vadd.f32 %v2284, %v2346
        %v2348 = vand.u32 %v1921, 4294901760
        %2349 = vmatmul.f32.gmra.mxu0 %v2348
        %v2350 = vpop.f32.mrf.mxu0
        %v2351 = vadd.f32 %v2292, %v2350
        %v2352 = vand.u32 %v1924, 4294901760
        %2353 = vmatmul.f32.gmra.mxu0 %v2352
        %v2354 = vpop.f32.mrf.mxu0
        %v2355 = vadd.f32 %v2300, %v2354
        %v2356 = vand.u32 %v1927, 4294901760
        %2357 = vmatmul.f32.gmra.mxu0 %v2356
        %v2358 = vpop.f32.mrf.mxu0
        %v2359 = vadd.f32 %v2308, %v2358
        %2360 = vdwg.mxu0
        %2361 = vmatpush.msra.mxu0 0.0
        %2362 = vmatpush.msra.mxu0 0.0
        %2363 = vmatpush.msra.mxu0 0.0
        %2364 = vmatpush.msra.mxu0 0.0
        %2365 = vmatpush.msra.mxu0 0.0
        %2366 = vmatpush.msra.mxu0 0.0
        %2367 = vmatpush.msra.mxu0 0.0
        %2368 = vmatpush.msra.mxu0 0.0
        %2369 = vmatpush.msra.mxu0 0.0
        %2370 = vmatpush.msra.mxu0 0.0
        %2371 = vmatpush.msra.mxu0 0.0
        %2372 = vmatpush.msra.mxu0 0.0
        %2373 = vmatpush.msra.mxu0 0.0
        %2374 = vmatpush.msra.mxu0 0.0
        %v2375 = vand.u32 %v1904, 4294901760
        %v2376 = vsub.f32 %v1904, %v2375
        %2377 = vmatpush.msra.mxu0 %v2376
        %v2378 = vand.u32 %v1900, 4294901760
        %v2379 = vsub.f32 %v1900, %v2378
        %2380 = vmatpush.msra.mxu0 %v2379
        %v2381 = vand.u32 %v1912, 4294901760
        %v2382 = vsub.f32 %v1912, %v2381
        %2383 = vmatmul.f32.gmra.mxu0 %v2382
        %v2384 = vpop.f32.mrf.mxu0
        %v2385 = vadd.f32 %v2339, %v2384
        %v2386 = vand.u32 %v1915, 4294901760
        %v2387 = vsub.f32 %v1915, %v2386
        %2388 = vmatmul.f32.gmra.mxu0 %v2387
        %v2389 = vpop.f32.mrf.mxu0
        %v2390 = vadd.f32 %v2343, %v2389
        %v2391 = vand.u32 %v1918, 4294901760
        %v2392 = vsub.f32 %v1918, %v2391
        %2393 = vmatmul.f32.gmra.mxu0 %v2392
        %v2394 = vpop.f32.mrf.mxu0
        %v2395 = vadd.f32 %v2347, %v2394
        %v2396 = vand.u32 %v1921, 4294901760
        %v2397 = vsub.f32 %v1921, %v2396
        %2398 = vmatmul.f32.gmra.mxu0 %v2397
        %v2399 = vpop.f32.mrf.mxu0
        %v2400 = vadd.f32 %v2351, %v2399
        %v2401 = vand.u32 %v1924, 4294901760
        %v2402 = vsub.f32 %v1924, %v2401
        %2403 = vmatmul.f32.gmra.mxu0 %v2402
        %v2404 = vpop.f32.mrf.mxu0
        %v2405 = vadd.f32 %v2355, %v2404
        %v2406 = vand.u32 %v1927, 4294901760
        %v2407 = vsub.f32 %v1927, %v2406
        %2408 = vmatmul.f32.gmra.mxu0 %v2407
        %v2409 = vpop.f32.mrf.mxu0
        %v2410 = vadd.f32 %v2359, %v2409
        %2411 = vdwg.mxu0
        %2412 = vmatpush.msra.mxu0 0.0
        %2413 = vmatpush.msra.mxu0 0.0
        %2414 = vmatpush.msra.mxu0 0.0
        %2415 = vmatpush.msra.mxu0 0.0
        %2416 = vmatpush.msra.mxu0 0.0
        %2417 = vmatpush.msra.mxu0 0.0
        %2418 = vmatpush.msra.mxu0 0.0
        %2419 = vmatpush.msra.mxu0 0.0
        %2420 = vmatpush.msra.mxu0 0.0
        %2421 = vmatpush.msra.mxu0 0.0
        %2422 = vmatpush.msra.mxu0 0.0
        %2423 = vmatpush.msra.mxu0 0.0
        %2424 = vmatpush.msra.mxu0 0.0
        %2425 = vmatpush.msra.mxu0 0.0
        %v2426 = vand.u32 %v1904, 4294901760
        %2427 = vmatpush.msra.mxu0 %v2426
        %v2428 = vand.u32 %v1900, 4294901760
        %2429 = vmatpush.msra.mxu0 %v2428
        %v2430 = vand.u32 %v1912, 4294901760
        %v2431 = vsub.f32 %v1912, %v2430
        %v2432 = vand.u32 %v2431, 4294901760
        %2433 = vmatmul.f32.gmra.mxu0 %v2432
        %v2434 = vpop.f32.mrf.mxu0
        %v2435 = vadd.f32 %v2385, %v2434
        %v2436 = vand.u32 %v1915, 4294901760
        %v2437 = vsub.f32 %v1915, %v2436
        %v2438 = vand.u32 %v2437, 4294901760
        %2439 = vmatmul.f32.gmra.mxu0 %v2438
        %v2440 = vpop.f32.mrf.mxu0
        %v2441 = vadd.f32 %v2390, %v2440
        %v2442 = vand.u32 %v1918, 4294901760
        %v2443 = vsub.f32 %v1918, %v2442
        %v2444 = vand.u32 %v2443, 4294901760
        %2445 = vmatmul.f32.gmra.mxu0 %v2444
        %v2446 = vpop.f32.mrf.mxu0
        %v2447 = vadd.f32 %v2395, %v2446
        %v2448 = vand.u32 %v1921, 4294901760
        %v2449 = vsub.f32 %v1921, %v2448
        %v2450 = vand.u32 %v2449, 4294901760
        %2451 = vmatmul.f32.gmra.mxu0 %v2450
        %v2452 = vpop.f32.mrf.mxu0
        %v2453 = vadd.f32 %v2400, %v2452
        %v2454 = vand.u32 %v1924, 4294901760
        %v2455 = vsub.f32 %v1924, %v2454
        %v2456 = vand.u32 %v2455, 4294901760
        %2457 = vmatmul.f32.gmra.mxu0 %v2456
        %v2458 = vpop.f32.mrf.mxu0
        %v2459 = vadd.f32 %v2405, %v2458
        %v2460 = vand.u32 %v1927, 4294901760
        %v2461 = vsub.f32 %v1927, %v2460
        %v2462 = vand.u32 %v2461, 4294901760
        %2463 = vmatmul.f32.gmra.mxu0 %v2462
        %v2464 = vpop.f32.mrf.mxu0
        %v2465 = vadd.f32 %v2410, %v2464
        %2466 = vdwg.mxu0
        %2467 = vmatpush.msra.mxu0 0.0
        %2468 = vmatpush.msra.mxu0 0.0
        %2469 = vmatpush.msra.mxu0 0.0
        %2470 = vmatpush.msra.mxu0 0.0
        %2471 = vmatpush.msra.mxu0 0.0
        %2472 = vmatpush.msra.mxu0 0.0
        %2473 = vmatpush.msra.mxu0 0.0
        %2474 = vmatpush.msra.mxu0 0.0
        %2475 = vmatpush.msra.mxu0 0.0
        %2476 = vmatpush.msra.mxu0 0.0
        %2477 = vmatpush.msra.mxu0 0.0
        %2478 = vmatpush.msra.mxu0 0.0
        %2479 = vmatpush.msra.mxu0 0.0
        %2480 = vmatpush.msra.mxu0 0.0
        %v2481 = vand.u32 %v1904, 4294901760
        %v2482 = vsub.f32 %v1904, %v2481
        %v2483 = vand.u32 %v2482, 4294901760
        %2484 = vmatpush.msra.mxu0 %v2483
        %v2485 = vand.u32 %v1900, 4294901760
        %v2486 = vsub.f32 %v1900, %v2485
        %v2487 = vand.u32 %v2486, 4294901760
        %2488 = vmatpush.msra.mxu0 %v2487
        %v2489 = vand.u32 %v1912, 4294901760
        %2490 = vmatmul.f32.gmra.mxu0 %v2489
        %v2491 = vpop.f32.mrf.mxu0
        %v2492 = vadd.f32 %v2435, %v2491
        %v2493 = vand.u32 %v1915, 4294901760
        %2494 = vmatmul.f32.gmra.mxu0 %v2493
        %v2495 = vpop.f32.mrf.mxu0
        %v2496 = vadd.f32 %v2441, %v2495
        %v2497 = vand.u32 %v1918, 4294901760
        %2498 = vmatmul.f32.gmra.mxu0 %v2497
        %v2499 = vpop.f32.mrf.mxu0
        %v2500 = vadd.f32 %v2447, %v2499
        %v2501 = vand.u32 %v1921, 4294901760
        %2502 = vmatmul.f32.gmra.mxu0 %v2501
        %v2503 = vpop.f32.mrf.mxu0
        %v2504 = vadd.f32 %v2453, %v2503
        %v2505 = vand.u32 %v1924, 4294901760
        %2506 = vmatmul.f32.gmra.mxu0 %v2505
        %v2507 = vpop.f32.mrf.mxu0
        %v2508 = vadd.f32 %v2459, %v2507
        %v2509 = vand.u32 %v1927, 4294901760
        %2510 = vmatmul.f32.gmra.mxu0 %v2509
        %v2511 = vpop.f32.mrf.mxu0
        %v2512 = vadd.f32 %v2465, %v2511
        %2513 = vdwg.mxu0
        %2514 = vmatpush.msra.mxu0 0.0
        %2515 = vmatpush.msra.mxu0 0.0
        %2516 = vmatpush.msra.mxu0 0.0
        %2517 = vmatpush.msra.mxu0 0.0
        %2518 = vmatpush.msra.mxu0 0.0
        %2519 = vmatpush.msra.mxu0 0.0
        %2520 = vmatpush.msra.mxu0 0.0
        %2521 = vmatpush.msra.mxu0 0.0
        %2522 = vmatpush.msra.mxu0 0.0
        %2523 = vmatpush.msra.mxu0 0.0
        %2524 = vmatpush.msra.mxu0 0.0
        %2525 = vmatpush.msra.mxu0 0.0
        %2526 = vmatpush.msra.mxu0 0.0
        %2527 = vmatpush.msra.mxu0 0.0
        %v2528 = vand.u32 %v1904, 4294901760
        %2529 = vmatpush.msra.mxu0 %v2528
        %v2530 = vand.u32 %v1900, 4294901760
        %2531 = vmatpush.msra.mxu0 %v2530
        %v2532 = vand.u32 %v1912, 4294901760
        %2533 = vmatmul.f32.gmra.mxu0 %v2532
        %v2534 = vpop.f32.mrf.mxu0
        %v2535 = vadd.f32 %v2492, %v2534
        %v2536 = vand.u32 %v1915, 4294901760
        %2537 = vmatmul.f32.gmra.mxu0 %v2536
        %v2538 = vpop.f32.mrf.mxu0
        %v2539 = vadd.f32 %v2496, %v2538
        %v2540 = vand.u32 %v1918, 4294901760
        %2541 = vmatmul.f32.gmra.mxu0 %v2540
        %v2542 = vpop.f32.mrf.mxu0
        %v2543 = vadd.f32 %v2500, %v2542
        %v2544 = vand.u32 %v1921, 4294901760
        %2545 = vmatmul.f32.gmra.mxu0 %v2544
        %v2546 = vpop.f32.mrf.mxu0
        %v2547 = vadd.f32 %v2504, %v2546
        %v2548 = vand.u32 %v1924, 4294901760
        %2549 = vmatmul.f32.gmra.mxu0 %v2548
        %v2550 = vpop.f32.mrf.mxu0
        %v2551 = vadd.f32 %v2508, %v2550
        %v2552 = vand.u32 %v1927, 4294901760
        %2553 = vmatmul.f32.gmra.mxu0 %v2552
        %v2554 = vpop.f32.mrf.mxu0
        %v2555 = vadd.f32 %v2512, %v2554
        %2556 = vdwg.mxu0
        %v2558 = vsel %vm450, %v1880, 0
        %v2561 = vsel %vm450, %v1881, 0
        %v2564 = vsel %vm450, %v1882, 0
        %v2567 = vsel %vm450, %v1883, 0
        %v2570 = vsel %vm450, %v1884, 0
        %v2573 = vsel %vm450, %v1885, 0
        %2575 = vmatpush.msra.mxu0 0.0
        %2576 = vmatpush.msra.mxu0 0.0
        %2577 = vmatpush.msra.mxu0 0.0
        %2578 = vmatpush.msra.mxu0 0.0
        %2579 = vmatpush.msra.mxu0 0.0
        %2580 = vmatpush.msra.mxu0 0.0
        %2581 = vmatpush.msra.mxu0 0.0
        %2582 = vmatpush.msra.mxu0 0.0
        %2583 = vmatpush.msra.mxu0 0.0
        %2584 = vmatpush.msra.mxu0 0.0
        %2585 = vmatpush.msra.mxu0 0.0
        %2586 = vmatpush.msra.mxu0 0.0
        %2587 = vmatpush.msra.mxu0 0.0
        %2588 = vmatpush.msra.mxu0 0.0
        %v2589 = vand.u32 %v1877, 4294901760
        %2590 = vmatpush.msra.mxu0 %v2589
        %v2591 = vand.u32 %v1875, 4294901760
        %2592 = vmatpush.msra.mxu0 %v2591
        %v2593 = vand.u32 %v2558, 4294901760
        %v2594 = vsub.f32 %v2558, %v2593
        %v2595 = vand.u32 %v2594, 4294901760
        %v2596 = vsub.f32 %v2594, %v2595
        %v2597 = vand.u32 %v2596, 4294901760
        %2598 = vmatmul.f32.gmra.mxu0 %v2597
        %v2599 = vpop.f32.mrf.mxu0
        %v2600 = vadd.f32 %v2221, %v2599
        %v2601 = vand.u32 %v2561, 4294901760
        %v2602 = vsub.f32 %v2561, %v2601
        %v2603 = vand.u32 %v2602, 4294901760
        %v2604 = vsub.f32 %v2602, %v2603
        %v2605 = vand.u32 %v2604, 4294901760
        %2606 = vmatmul.f32.gmra.mxu0 %v2605
        %v2607 = vpop.f32.mrf.mxu0
        %v2608 = vadd.f32 %v2225, %v2607
        %v2609 = vand.u32 %v2564, 4294901760
        %v2610 = vsub.f32 %v2564, %v2609
        %v2611 = vand.u32 %v2610, 4294901760
        %v2612 = vsub.f32 %v2610, %v2611
        %v2613 = vand.u32 %v2612, 4294901760
        %2614 = vmatmul.f32.gmra.mxu0 %v2613
        %v2615 = vpop.f32.mrf.mxu0
        %v2616 = vadd.f32 %v2229, %v2615
        %v2617 = vand.u32 %v2567, 4294901760
        %v2618 = vsub.f32 %v2567, %v2617
        %v2619 = vand.u32 %v2618, 4294901760
        %v2620 = vsub.f32 %v2618, %v2619
        %v2621 = vand.u32 %v2620, 4294901760
        %2622 = vmatmul.f32.gmra.mxu0 %v2621
        %v2623 = vpop.f32.mrf.mxu0
        %v2624 = vadd.f32 %v2233, %v2623
        %v2625 = vand.u32 %v2570, 4294901760
        %v2626 = vsub.f32 %v2570, %v2625
        %v2627 = vand.u32 %v2626, 4294901760
        %v2628 = vsub.f32 %v2626, %v2627
        %v2629 = vand.u32 %v2628, 4294901760
        %2630 = vmatmul.f32.gmra.mxu0 %v2629
        %v2631 = vpop.f32.mrf.mxu0
        %v2632 = vadd.f32 %v2237, %v2631
        %v2633 = vand.u32 %v2573, 4294901760
        %v2634 = vsub.f32 %v2573, %v2633
        %v2635 = vand.u32 %v2634, 4294901760
        %v2636 = vsub.f32 %v2634, %v2635
        %v2637 = vand.u32 %v2636, 4294901760
        %2638 = vmatmul.f32.gmra.mxu0 %v2637
        %v2639 = vpop.f32.mrf.mxu0
        %v2640 = vadd.f32 %v2241, %v2639
        %2641 = vdwg.mxu0
        %2642 = vmatpush.msra.mxu0 0.0
        %2643 = vmatpush.msra.mxu0 0.0
        %2644 = vmatpush.msra.mxu0 0.0
        %2645 = vmatpush.msra.mxu0 0.0
        %2646 = vmatpush.msra.mxu0 0.0
        %2647 = vmatpush.msra.mxu0 0.0
        %2648 = vmatpush.msra.mxu0 0.0
        %2649 = vmatpush.msra.mxu0 0.0
        %2650 = vmatpush.msra.mxu0 0.0
        %2651 = vmatpush.msra.mxu0 0.0
        %2652 = vmatpush.msra.mxu0 0.0
        %2653 = vmatpush.msra.mxu0 0.0
        %2654 = vmatpush.msra.mxu0 0.0
        %2655 = vmatpush.msra.mxu0 0.0
        %v2656 = vand.u32 %v1877, 4294901760
        %v2657 = vsub.f32 %v1877, %v2656
        %v2658 = vand.u32 %v2657, 4294901760
        %v2659 = vsub.f32 %v2657, %v2658
        %v2660 = vand.u32 %v2659, 4294901760
        %2661 = vmatpush.msra.mxu0 %v2660
        %v2662 = vand.u32 %v1875, 4294901760
        %v2663 = vsub.f32 %v1875, %v2662
        %v2664 = vand.u32 %v2663, 4294901760
        %v2665 = vsub.f32 %v2663, %v2664
        %v2666 = vand.u32 %v2665, 4294901760
        %2667 = vmatpush.msra.mxu0 %v2666
        %v2668 = vand.u32 %v2558, 4294901760
        %2669 = vmatmul.f32.gmra.mxu0 %v2668
        %v2670 = vpop.f32.mrf.mxu0
        %v2671 = vadd.f32 %v2600, %v2670
        %v2672 = vand.u32 %v2561, 4294901760
        %2673 = vmatmul.f32.gmra.mxu0 %v2672
        %v2674 = vpop.f32.mrf.mxu0
        %v2675 = vadd.f32 %v2608, %v2674
        %v2676 = vand.u32 %v2564, 4294901760
        %2677 = vmatmul.f32.gmra.mxu0 %v2676
        %v2678 = vpop.f32.mrf.mxu0
        %v2679 = vadd.f32 %v2616, %v2678
        %v2680 = vand.u32 %v2567, 4294901760
        %2681 = vmatmul.f32.gmra.mxu0 %v2680
        %v2682 = vpop.f32.mrf.mxu0
        %v2683 = vadd.f32 %v2624, %v2682
        %v2684 = vand.u32 %v2570, 4294901760
        %2685 = vmatmul.f32.gmra.mxu0 %v2684
        %v2686 = vpop.f32.mrf.mxu0
        %v2687 = vadd.f32 %v2632, %v2686
        %v2688 = vand.u32 %v2573, 4294901760
        %2689 = vmatmul.f32.gmra.mxu0 %v2688
        %v2690 = vpop.f32.mrf.mxu0
        %v2691 = vadd.f32 %v2640, %v2690
        %2692 = vdwg.mxu0
        %2693 = vmatpush.msra.mxu0 0.0
        %2694 = vmatpush.msra.mxu0 0.0
        %2695 = vmatpush.msra.mxu0 0.0
        %2696 = vmatpush.msra.mxu0 0.0
        %2697 = vmatpush.msra.mxu0 0.0
        %2698 = vmatpush.msra.mxu0 0.0
        %2699 = vmatpush.msra.mxu0 0.0
        %2700 = vmatpush.msra.mxu0 0.0
        %2701 = vmatpush.msra.mxu0 0.0
        %2702 = vmatpush.msra.mxu0 0.0
        %2703 = vmatpush.msra.mxu0 0.0
        %2704 = vmatpush.msra.mxu0 0.0
        %2705 = vmatpush.msra.mxu0 0.0
        %2706 = vmatpush.msra.mxu0 0.0
        %v2707 = vand.u32 %v1877, 4294901760
        %v2708 = vsub.f32 %v1877, %v2707
        %2709 = vmatpush.msra.mxu0 %v2708
        %v2710 = vand.u32 %v1875, 4294901760
        %v2711 = vsub.f32 %v1875, %v2710
        %2712 = vmatpush.msra.mxu0 %v2711
        %v2713 = vand.u32 %v2558, 4294901760
        %v2714 = vsub.f32 %v2558, %v2713
        %2715 = vmatmul.f32.gmra.mxu0 %v2714
        %v2716 = vpop.f32.mrf.mxu0
        %v2717 = vadd.f32 %v2671, %v2716
        %v2718 = vand.u32 %v2561, 4294901760
        %v2719 = vsub.f32 %v2561, %v2718
        %2720 = vmatmul.f32.gmra.mxu0 %v2719
        %v2721 = vpop.f32.mrf.mxu0
        %v2722 = vadd.f32 %v2675, %v2721
        %v2723 = vand.u32 %v2564, 4294901760
        %v2724 = vsub.f32 %v2564, %v2723
        %2725 = vmatmul.f32.gmra.mxu0 %v2724
        %v2726 = vpop.f32.mrf.mxu0
        %v2727 = vadd.f32 %v2679, %v2726
        %v2728 = vand.u32 %v2567, 4294901760
        %v2729 = vsub.f32 %v2567, %v2728
        %2730 = vmatmul.f32.gmra.mxu0 %v2729
        %v2731 = vpop.f32.mrf.mxu0
        %v2732 = vadd.f32 %v2683, %v2731
        %v2733 = vand.u32 %v2570, 4294901760
        %v2734 = vsub.f32 %v2570, %v2733
        %2735 = vmatmul.f32.gmra.mxu0 %v2734
        %v2736 = vpop.f32.mrf.mxu0
        %v2737 = vadd.f32 %v2687, %v2736
        %v2738 = vand.u32 %v2573, 4294901760
        %v2739 = vsub.f32 %v2573, %v2738
        %2740 = vmatmul.f32.gmra.mxu0 %v2739
        %v2741 = vpop.f32.mrf.mxu0
        %v2742 = vadd.f32 %v2691, %v2741
        %2743 = vdwg.mxu0
        %2744 = vmatpush.msra.mxu0 0.0
        %2745 = vmatpush.msra.mxu0 0.0
        %2746 = vmatpush.msra.mxu0 0.0
        %2747 = vmatpush.msra.mxu0 0.0
        %2748 = vmatpush.msra.mxu0 0.0
        %2749 = vmatpush.msra.mxu0 0.0
        %2750 = vmatpush.msra.mxu0 0.0
        %2751 = vmatpush.msra.mxu0 0.0
        %2752 = vmatpush.msra.mxu0 0.0
        %2753 = vmatpush.msra.mxu0 0.0
        %2754 = vmatpush.msra.mxu0 0.0
        %2755 = vmatpush.msra.mxu0 0.0
        %2756 = vmatpush.msra.mxu0 0.0
        %2757 = vmatpush.msra.mxu0 0.0
        %v2758 = vand.u32 %v1877, 4294901760
        %2759 = vmatpush.msra.mxu0 %v2758
        %v2760 = vand.u32 %v1875, 4294901760
        %2761 = vmatpush.msra.mxu0 %v2760
        %v2762 = vand.u32 %v2558, 4294901760
        %v2763 = vsub.f32 %v2558, %v2762
        %v2764 = vand.u32 %v2763, 4294901760
        %2765 = vmatmul.f32.gmra.mxu0 %v2764
        %v2766 = vpop.f32.mrf.mxu0
        %v2767 = vadd.f32 %v2717, %v2766
        %v2768 = vand.u32 %v2561, 4294901760
        %v2769 = vsub.f32 %v2561, %v2768
        %v2770 = vand.u32 %v2769, 4294901760
        %2771 = vmatmul.f32.gmra.mxu0 %v2770
        %v2772 = vpop.f32.mrf.mxu0
        %v2773 = vadd.f32 %v2722, %v2772
        %v2774 = vand.u32 %v2564, 4294901760
        %v2775 = vsub.f32 %v2564, %v2774
        %v2776 = vand.u32 %v2775, 4294901760
        %2777 = vmatmul.f32.gmra.mxu0 %v2776
        %v2778 = vpop.f32.mrf.mxu0
        %v2779 = vadd.f32 %v2727, %v2778
        %v2780 = vand.u32 %v2567, 4294901760
        %v2781 = vsub.f32 %v2567, %v2780
        %v2782 = vand.u32 %v2781, 4294901760
        %2783 = vmatmul.f32.gmra.mxu0 %v2782
        %v2784 = vpop.f32.mrf.mxu0
        %v2785 = vadd.f32 %v2732, %v2784
        %v2786 = vand.u32 %v2570, 4294901760
        %v2787 = vsub.f32 %v2570, %v2786
        %v2788 = vand.u32 %v2787, 4294901760
        %2789 = vmatmul.f32.gmra.mxu0 %v2788
        %v2790 = vpop.f32.mrf.mxu0
        %v2791 = vadd.f32 %v2737, %v2790
        %v2792 = vand.u32 %v2573, 4294901760
        %v2793 = vsub.f32 %v2573, %v2792
        %v2794 = vand.u32 %v2793, 4294901760
        %2795 = vmatmul.f32.gmra.mxu0 %v2794
        %v2796 = vpop.f32.mrf.mxu0
        %v2797 = vadd.f32 %v2742, %v2796
        %2798 = vdwg.mxu0
        %2799 = vmatpush.msra.mxu0 0.0
        %2800 = vmatpush.msra.mxu0 0.0
        %2801 = vmatpush.msra.mxu0 0.0
        %2802 = vmatpush.msra.mxu0 0.0
        %2803 = vmatpush.msra.mxu0 0.0
        %2804 = vmatpush.msra.mxu0 0.0
        %2805 = vmatpush.msra.mxu0 0.0
        %2806 = vmatpush.msra.mxu0 0.0
        %2807 = vmatpush.msra.mxu0 0.0
        %2808 = vmatpush.msra.mxu0 0.0
        %2809 = vmatpush.msra.mxu0 0.0
        %2810 = vmatpush.msra.mxu0 0.0
        %2811 = vmatpush.msra.mxu0 0.0
        %2812 = vmatpush.msra.mxu0 0.0
        %v2813 = vand.u32 %v1877, 4294901760
        %v2814 = vsub.f32 %v1877, %v2813
        %v2815 = vand.u32 %v2814, 4294901760
        %2816 = vmatpush.msra.mxu0 %v2815
        %v2817 = vand.u32 %v1875, 4294901760
        %v2818 = vsub.f32 %v1875, %v2817
        %v2819 = vand.u32 %v2818, 4294901760
        %2820 = vmatpush.msra.mxu0 %v2819
        %v2821 = vand.u32 %v2558, 4294901760
        %2822 = vmatmul.f32.gmra.mxu0 %v2821
        %v2823 = vpop.f32.mrf.mxu0
        %v2824 = vadd.f32 %v2767, %v2823
        %v2825 = vand.u32 %v2561, 4294901760
        %2826 = vmatmul.f32.gmra.mxu0 %v2825
        %v2827 = vpop.f32.mrf.mxu0
        %v2828 = vadd.f32 %v2773, %v2827
        %v2829 = vand.u32 %v2564, 4294901760
        %2830 = vmatmul.f32.gmra.mxu0 %v2829
        %v2831 = vpop.f32.mrf.mxu0
        %v2832 = vadd.f32 %v2779, %v2831
        %v2833 = vand.u32 %v2567, 4294901760
        %2834 = vmatmul.f32.gmra.mxu0 %v2833
        %v2835 = vpop.f32.mrf.mxu0
        %v2836 = vadd.f32 %v2785, %v2835
        %v2837 = vand.u32 %v2570, 4294901760
        %2838 = vmatmul.f32.gmra.mxu0 %v2837
        %v2839 = vpop.f32.mrf.mxu0
        %v2840 = vadd.f32 %v2791, %v2839
        %v2841 = vand.u32 %v2573, 4294901760
        %2842 = vmatmul.f32.gmra.mxu0 %v2841
        %v2843 = vpop.f32.mrf.mxu0
        %v2844 = vadd.f32 %v2797, %v2843
        %2845 = vdwg.mxu0
        %2846 = vmatpush.msra.mxu0 0.0
        %2847 = vmatpush.msra.mxu0 0.0
        %2848 = vmatpush.msra.mxu0 0.0
        %2849 = vmatpush.msra.mxu0 0.0
        %2850 = vmatpush.msra.mxu0 0.0
        %2851 = vmatpush.msra.mxu0 0.0
        %2852 = vmatpush.msra.mxu0 0.0
        %2853 = vmatpush.msra.mxu0 0.0
        %2854 = vmatpush.msra.mxu0 0.0
        %2855 = vmatpush.msra.mxu0 0.0
        %2856 = vmatpush.msra.mxu0 0.0
        %2857 = vmatpush.msra.mxu0 0.0
        %2858 = vmatpush.msra.mxu0 0.0
        %2859 = vmatpush.msra.mxu0 0.0
        %v2860 = vand.u32 %v1877, 4294901760
        %2861 = vmatpush.msra.mxu0 %v2860
        %v2862 = vand.u32 %v1875, 4294901760
        %2863 = vmatpush.msra.mxu0 %v2862
        %v2864 = vand.u32 %v2558, 4294901760
        %2865 = vmatmul.f32.gmra.mxu0 %v2864
        %v2866 = vpop.f32.mrf.mxu0
        %v2867 = vadd.f32 %v2824, %v2866
        %v2868 = vand.u32 %v2561, 4294901760
        %2869 = vmatmul.f32.gmra.mxu0 %v2868
        %v2870 = vpop.f32.mrf.mxu0
        %v2871 = vadd.f32 %v2828, %v2870
        %v2872 = vand.u32 %v2564, 4294901760
        %2873 = vmatmul.f32.gmra.mxu0 %v2872
        %v2874 = vpop.f32.mrf.mxu0
        %v2875 = vadd.f32 %v2832, %v2874
        %v2876 = vand.u32 %v2567, 4294901760
        %2877 = vmatmul.f32.gmra.mxu0 %v2876
        %v2878 = vpop.f32.mrf.mxu0
        %v2879 = vadd.f32 %v2836, %v2878
        %v2880 = vand.u32 %v2570, 4294901760
        %2881 = vmatmul.f32.gmra.mxu0 %v2880
        %v2882 = vpop.f32.mrf.mxu0
        %v2883 = vadd.f32 %v2840, %v2882
        %v2884 = vand.u32 %v2573, 4294901760
        %2885 = vmatmul.f32.gmra.mxu0 %v2884
        %v2886 = vpop.f32.mrf.mxu0
        %v2887 = vadd.f32 %v2844, %v2886
        %2888 = vdwg.mxu0
        %2889 = vmatpush.msra.mxu0 0.0
        %2890 = vmatpush.msra.mxu0 0.0
        %2891 = vmatpush.msra.mxu0 0.0
        %2892 = vmatpush.msra.mxu0 0.0
        %2893 = vmatpush.msra.mxu0 0.0
        %2894 = vmatpush.msra.mxu0 0.0
        %2895 = vmatpush.msra.mxu0 0.0
        %2896 = vmatpush.msra.mxu0 0.0
        %2897 = vmatpush.msra.mxu0 0.0
        %2898 = vmatpush.msra.mxu0 0.0
        %2899 = vmatpush.msra.mxu0 0.0
        %2900 = vmatpush.msra.mxu0 0.0
        %2901 = vmatpush.msra.mxu0 0.0
        %2902 = vmatpush.msra.mxu0 0.0
        %v2903 = vand.u32 %v1878, 4294901760
        %2904 = vmatpush.msra.mxu0 %v2903
        %v2905 = vand.u32 %v1876, 4294901760
        %2906 = vmatpush.msra.mxu0 %v2905
        %v2907 = vand.u32 %v2558, 4294901760
        %v2908 = vsub.f32 %v2558, %v2907
        %v2909 = vand.u32 %v2908, 4294901760
        %v2910 = vsub.f32 %v2908, %v2909
        %v2911 = vand.u32 %v2910, 4294901760
        %2912 = vmatmul.f32.gmra.mxu0 %v2911
        %v2913 = vpop.f32.mrf.mxu0
        %v2914 = vadd.f32 %v2535, %v2913
        %v2915 = vand.u32 %v2561, 4294901760
        %v2916 = vsub.f32 %v2561, %v2915
        %v2917 = vand.u32 %v2916, 4294901760
        %v2918 = vsub.f32 %v2916, %v2917
        %v2919 = vand.u32 %v2918, 4294901760
        %2920 = vmatmul.f32.gmra.mxu0 %v2919
        %v2921 = vpop.f32.mrf.mxu0
        %v2922 = vadd.f32 %v2539, %v2921
        %v2923 = vand.u32 %v2564, 4294901760
        %v2924 = vsub.f32 %v2564, %v2923
        %v2925 = vand.u32 %v2924, 4294901760
        %v2926 = vsub.f32 %v2924, %v2925
        %v2927 = vand.u32 %v2926, 4294901760
        %2928 = vmatmul.f32.gmra.mxu0 %v2927
        %v2929 = vpop.f32.mrf.mxu0
        %v2930 = vadd.f32 %v2543, %v2929
        %v2931 = vand.u32 %v2567, 4294901760
        %v2932 = vsub.f32 %v2567, %v2931
        %v2933 = vand.u32 %v2932, 4294901760
        %v2934 = vsub.f32 %v2932, %v2933
        %v2935 = vand.u32 %v2934, 4294901760
        %2936 = vmatmul.f32.gmra.mxu0 %v2935
        %v2937 = vpop.f32.mrf.mxu0
        %v2938 = vadd.f32 %v2547, %v2937
        %v2939 = vand.u32 %v2570, 4294901760
        %v2940 = vsub.f32 %v2570, %v2939
        %v2941 = vand.u32 %v2940, 4294901760
        %v2942 = vsub.f32 %v2940, %v2941
        %v2943 = vand.u32 %v2942, 4294901760
        %2944 = vmatmul.f32.gmra.mxu0 %v2943
        %v2945 = vpop.f32.mrf.mxu0
        %v2946 = vadd.f32 %v2551, %v2945
        %v2947 = vand.u32 %v2573, 4294901760
        %v2948 = vsub.f32 %v2573, %v2947
        %v2949 = vand.u32 %v2948, 4294901760
        %v2950 = vsub.f32 %v2948, %v2949
        %v2951 = vand.u32 %v2950, 4294901760
        %2952 = vmatmul.f32.gmra.mxu0 %v2951
        %v2953 = vpop.f32.mrf.mxu0
        %v2954 = vadd.f32 %v2555, %v2953
        %2955 = vdwg.mxu0
        %2956 = vmatpush.msra.mxu0 0.0
        %2957 = vmatpush.msra.mxu0 0.0
        %2958 = vmatpush.msra.mxu0 0.0
        %2959 = vmatpush.msra.mxu0 0.0
        %2960 = vmatpush.msra.mxu0 0.0
        %2961 = vmatpush.msra.mxu0 0.0
        %2962 = vmatpush.msra.mxu0 0.0
        %2963 = vmatpush.msra.mxu0 0.0
        %2964 = vmatpush.msra.mxu0 0.0
        %2965 = vmatpush.msra.mxu0 0.0
        %2966 = vmatpush.msra.mxu0 0.0
        %2967 = vmatpush.msra.mxu0 0.0
        %2968 = vmatpush.msra.mxu0 0.0
        %2969 = vmatpush.msra.mxu0 0.0
        %v2970 = vand.u32 %v1878, 4294901760
        %v2971 = vsub.f32 %v1878, %v2970
        %v2972 = vand.u32 %v2971, 4294901760
        %v2973 = vsub.f32 %v2971, %v2972
        %v2974 = vand.u32 %v2973, 4294901760
        %2975 = vmatpush.msra.mxu0 %v2974
        %v2976 = vand.u32 %v1876, 4294901760
        %v2977 = vsub.f32 %v1876, %v2976
        %v2978 = vand.u32 %v2977, 4294901760
        %v2979 = vsub.f32 %v2977, %v2978
        %v2980 = vand.u32 %v2979, 4294901760
        %2981 = vmatpush.msra.mxu0 %v2980
        %v2982 = vand.u32 %v2558, 4294901760
        %2983 = vmatmul.f32.gmra.mxu0 %v2982
        %v2984 = vpop.f32.mrf.mxu0
        %v2985 = vadd.f32 %v2914, %v2984
        %v2986 = vand.u32 %v2561, 4294901760
        %2987 = vmatmul.f32.gmra.mxu0 %v2986
        %v2988 = vpop.f32.mrf.mxu0
        %v2989 = vadd.f32 %v2922, %v2988
        %v2990 = vand.u32 %v2564, 4294901760
        %2991 = vmatmul.f32.gmra.mxu0 %v2990
        %v2992 = vpop.f32.mrf.mxu0
        %v2993 = vadd.f32 %v2930, %v2992
        %v2994 = vand.u32 %v2567, 4294901760
        %2995 = vmatmul.f32.gmra.mxu0 %v2994
        %v2996 = vpop.f32.mrf.mxu0
        %v2997 = vadd.f32 %v2938, %v2996
        %v2998 = vand.u32 %v2570, 4294901760
        %2999 = vmatmul.f32.gmra.mxu0 %v2998
        %v3000 = vpop.f32.mrf.mxu0
        %v3001 = vadd.f32 %v2946, %v3000
        %v3002 = vand.u32 %v2573, 4294901760
        %3003 = vmatmul.f32.gmra.mxu0 %v3002
        %v3004 = vpop.f32.mrf.mxu0
        %v3005 = vadd.f32 %v2954, %v3004
        %3006 = vdwg.mxu0
        %3007 = vmatpush.msra.mxu0 0.0
        %3008 = vmatpush.msra.mxu0 0.0
        %3009 = vmatpush.msra.mxu0 0.0
        %3010 = vmatpush.msra.mxu0 0.0
        %3011 = vmatpush.msra.mxu0 0.0
        %3012 = vmatpush.msra.mxu0 0.0
        %3013 = vmatpush.msra.mxu0 0.0
        %3014 = vmatpush.msra.mxu0 0.0
        %3015 = vmatpush.msra.mxu0 0.0
        %3016 = vmatpush.msra.mxu0 0.0
        %3017 = vmatpush.msra.mxu0 0.0
        %3018 = vmatpush.msra.mxu0 0.0
        %3019 = vmatpush.msra.mxu0 0.0
        %3020 = vmatpush.msra.mxu0 0.0
        %v3021 = vand.u32 %v1878, 4294901760
        %v3022 = vsub.f32 %v1878, %v3021
        %3023 = vmatpush.msra.mxu0 %v3022
        %v3024 = vand.u32 %v1876, 4294901760
        %v3025 = vsub.f32 %v1876, %v3024
        %3026 = vmatpush.msra.mxu0 %v3025
        %v3027 = vand.u32 %v2558, 4294901760
        %v3028 = vsub.f32 %v2558, %v3027
        %3029 = vmatmul.f32.gmra.mxu0 %v3028
        %v3030 = vpop.f32.mrf.mxu0
        %v3031 = vadd.f32 %v2985, %v3030
        %v3032 = vand.u32 %v2561, 4294901760
        %v3033 = vsub.f32 %v2561, %v3032
        %3034 = vmatmul.f32.gmra.mxu0 %v3033
        %v3035 = vpop.f32.mrf.mxu0
        %v3036 = vadd.f32 %v2989, %v3035
        %v3037 = vand.u32 %v2564, 4294901760
        %v3038 = vsub.f32 %v2564, %v3037
        %3039 = vmatmul.f32.gmra.mxu0 %v3038
        %v3040 = vpop.f32.mrf.mxu0
        %v3041 = vadd.f32 %v2993, %v3040
        %v3042 = vand.u32 %v2567, 4294901760
        %v3043 = vsub.f32 %v2567, %v3042
        %3044 = vmatmul.f32.gmra.mxu0 %v3043
        %v3045 = vpop.f32.mrf.mxu0
        %v3046 = vadd.f32 %v2997, %v3045
        %v3047 = vand.u32 %v2570, 4294901760
        %v3048 = vsub.f32 %v2570, %v3047
        %3049 = vmatmul.f32.gmra.mxu0 %v3048
        %v3050 = vpop.f32.mrf.mxu0
        %v3051 = vadd.f32 %v3001, %v3050
        %v3052 = vand.u32 %v2573, 4294901760
        %v3053 = vsub.f32 %v2573, %v3052
        %3054 = vmatmul.f32.gmra.mxu0 %v3053
        %v3055 = vpop.f32.mrf.mxu0
        %v3056 = vadd.f32 %v3005, %v3055
        %3057 = vdwg.mxu0
        %3058 = vmatpush.msra.mxu0 0.0
        %3059 = vmatpush.msra.mxu0 0.0
        %3060 = vmatpush.msra.mxu0 0.0
        %3061 = vmatpush.msra.mxu0 0.0
        %3062 = vmatpush.msra.mxu0 0.0
        %3063 = vmatpush.msra.mxu0 0.0
        %3064 = vmatpush.msra.mxu0 0.0
        %3065 = vmatpush.msra.mxu0 0.0
        %3066 = vmatpush.msra.mxu0 0.0
        %3067 = vmatpush.msra.mxu0 0.0
        %3068 = vmatpush.msra.mxu0 0.0
        %3069 = vmatpush.msra.mxu0 0.0
        %3070 = vmatpush.msra.mxu0 0.0
        %3071 = vmatpush.msra.mxu0 0.0
        %v3072 = vand.u32 %v1878, 4294901760
        %3073 = vmatpush.msra.mxu0 %v3072
        %v3074 = vand.u32 %v1876, 4294901760
        %3075 = vmatpush.msra.mxu0 %v3074
        %v3076 = vand.u32 %v2558, 4294901760
        %v3077 = vsub.f32 %v2558, %v3076
        %v3078 = vand.u32 %v3077, 4294901760
        %3079 = vmatmul.f32.gmra.mxu0 %v3078
        %v3080 = vpop.f32.mrf.mxu0
        %v3081 = vadd.f32 %v3031, %v3080
        %v3082 = vand.u32 %v2561, 4294901760
        %v3083 = vsub.f32 %v2561, %v3082
        %v3084 = vand.u32 %v3083, 4294901760
        %3085 = vmatmul.f32.gmra.mxu0 %v3084
        %v3086 = vpop.f32.mrf.mxu0
        %v3087 = vadd.f32 %v3036, %v3086
        %v3088 = vand.u32 %v2564, 4294901760
        %v3089 = vsub.f32 %v2564, %v3088
        %v3090 = vand.u32 %v3089, 4294901760
        %3091 = vmatmul.f32.gmra.mxu0 %v3090
        %v3092 = vpop.f32.mrf.mxu0
        %v3093 = vadd.f32 %v3041, %v3092
        %v3094 = vand.u32 %v2567, 4294901760
        %v3095 = vsub.f32 %v2567, %v3094
        %v3096 = vand.u32 %v3095, 4294901760
        %3097 = vmatmul.f32.gmra.mxu0 %v3096
        %v3098 = vpop.f32.mrf.mxu0
        %v3099 = vadd.f32 %v3046, %v3098
        %v3100 = vand.u32 %v2570, 4294901760
        %v3101 = vsub.f32 %v2570, %v3100
        %v3102 = vand.u32 %v3101, 4294901760
        %3103 = vmatmul.f32.gmra.mxu0 %v3102
        %v3104 = vpop.f32.mrf.mxu0
        %v3105 = vadd.f32 %v3051, %v3104
        %v3106 = vand.u32 %v2573, 4294901760
        %v3107 = vsub.f32 %v2573, %v3106
        %v3108 = vand.u32 %v3107, 4294901760
        %3109 = vmatmul.f32.gmra.mxu0 %v3108
        %v3110 = vpop.f32.mrf.mxu0
        %v3111 = vadd.f32 %v3056, %v3110
        %3112 = vdwg.mxu0
        %3113 = vmatpush.msra.mxu0 0.0
        %3114 = vmatpush.msra.mxu0 0.0
        %3115 = vmatpush.msra.mxu0 0.0
        %3116 = vmatpush.msra.mxu0 0.0
        %3117 = vmatpush.msra.mxu0 0.0
        %3118 = vmatpush.msra.mxu0 0.0
        %3119 = vmatpush.msra.mxu0 0.0
        %3120 = vmatpush.msra.mxu0 0.0
        %3121 = vmatpush.msra.mxu0 0.0
        %3122 = vmatpush.msra.mxu0 0.0
        %3123 = vmatpush.msra.mxu0 0.0
        %3124 = vmatpush.msra.mxu0 0.0
        %3125 = vmatpush.msra.mxu0 0.0
        %3126 = vmatpush.msra.mxu0 0.0
        %v3127 = vand.u32 %v1878, 4294901760
        %v3128 = vsub.f32 %v1878, %v3127
        %v3129 = vand.u32 %v3128, 4294901760
        %3130 = vmatpush.msra.mxu0 %v3129
        %v3131 = vand.u32 %v1876, 4294901760
        %v3132 = vsub.f32 %v1876, %v3131
        %v3133 = vand.u32 %v3132, 4294901760
        %3134 = vmatpush.msra.mxu0 %v3133
        %v3135 = vand.u32 %v2558, 4294901760
        %3136 = vmatmul.f32.gmra.mxu0 %v3135
        %v3137 = vpop.f32.mrf.mxu0
        %v3138 = vadd.f32 %v3081, %v3137
        %v3139 = vand.u32 %v2561, 4294901760
        %3140 = vmatmul.f32.gmra.mxu0 %v3139
        %v3141 = vpop.f32.mrf.mxu0
        %v3142 = vadd.f32 %v3087, %v3141
        %v3143 = vand.u32 %v2564, 4294901760
        %3144 = vmatmul.f32.gmra.mxu0 %v3143
        %v3145 = vpop.f32.mrf.mxu0
        %v3146 = vadd.f32 %v3093, %v3145
        %v3147 = vand.u32 %v2567, 4294901760
        %3148 = vmatmul.f32.gmra.mxu0 %v3147
        %v3149 = vpop.f32.mrf.mxu0
        %v3150 = vadd.f32 %v3099, %v3149
        %v3151 = vand.u32 %v2570, 4294901760
        %3152 = vmatmul.f32.gmra.mxu0 %v3151
        %v3153 = vpop.f32.mrf.mxu0
        %v3154 = vadd.f32 %v3105, %v3153
        %v3155 = vand.u32 %v2573, 4294901760
        %3156 = vmatmul.f32.gmra.mxu0 %v3155
        %v3157 = vpop.f32.mrf.mxu0
        %v3158 = vadd.f32 %v3111, %v3157
        %3159 = vdwg.mxu0
        %3160 = vmatpush.msra.mxu0 0.0
        %3161 = vmatpush.msra.mxu0 0.0
        %3162 = vmatpush.msra.mxu0 0.0
        %3163 = vmatpush.msra.mxu0 0.0
        %3164 = vmatpush.msra.mxu0 0.0
        %3165 = vmatpush.msra.mxu0 0.0
        %3166 = vmatpush.msra.mxu0 0.0
        %3167 = vmatpush.msra.mxu0 0.0
        %3168 = vmatpush.msra.mxu0 0.0
        %3169 = vmatpush.msra.mxu0 0.0
        %3170 = vmatpush.msra.mxu0 0.0
        %3171 = vmatpush.msra.mxu0 0.0
        %3172 = vmatpush.msra.mxu0 0.0
        %3173 = vmatpush.msra.mxu0 0.0
        %v3174 = vand.u32 %v1878, 4294901760
        %3175 = vmatpush.msra.mxu0 %v3174
        %v3176 = vand.u32 %v1876, 4294901760
        %3177 = vmatpush.msra.mxu0 %v3176
        %v3178 = vand.u32 %v2558, 4294901760
        %3179 = vmatmul.f32.gmra.mxu0 %v3178
        %v3180 = vpop.f32.mrf.mxu0
        %v3181 = vadd.f32 %v3138, %v3180
        %v3182 = vand.u32 %v2561, 4294901760
        %3183 = vmatmul.f32.gmra.mxu0 %v3182
        %v3184 = vpop.f32.mrf.mxu0
        %v3185 = vadd.f32 %v3142, %v3184
        %v3186 = vand.u32 %v2564, 4294901760
        %3187 = vmatmul.f32.gmra.mxu0 %v3186
        %v3188 = vpop.f32.mrf.mxu0
        %v3189 = vadd.f32 %v3146, %v3188
        %v3190 = vand.u32 %v2567, 4294901760
        %3191 = vmatmul.f32.gmra.mxu0 %v3190
        %v3192 = vpop.f32.mrf.mxu0
        %v3193 = vadd.f32 %v3150, %v3192
        %v3194 = vand.u32 %v2570, 4294901760
        %3195 = vmatmul.f32.gmra.mxu0 %v3194
        %v3196 = vpop.f32.mrf.mxu0
        %v3197 = vadd.f32 %v3154, %v3196
        %v3198 = vand.u32 %v2573, 4294901760
        %3199 = vmatmul.f32.gmra.mxu0 %v3198
        %v3200 = vpop.f32.mrf.mxu0
        %v3201 = vadd.f32 %v3158, %v3200
        %3202 = vdwg.mxu0
        %s3203 = scalar_lea.vmem %s3, 48
        %v3204 = vld [vmem:[%s3203] sm:$0xff]
        %v3205 = vld [vmem:[%s3203 + $0x8] sm:$0xff]
        %v3206 = vld [vmem:[%s3203 + $0x10] sm:$0xff]
        %v3207 = vld [vmem:[%s3203 + $0x18] sm:$0xff]
        %v3208 = vld [vmem:[%s3203 + $0x20] sm:$0xff]
        %v3209 = vld [vmem:[%s3203 + $0x28] sm:$0xff]
        %3211 = vset.pattern.permute.xlu0 0
        %3212 = vperm.xlu0 %3211, %v3204
        %v3213 = vpop.permute.xlu0 %3212
        %3216 = vset.pattern.permute.xlu0 0
        %3217 = vperm.xlu0 %3216, %v3205
        %v3218 = vpop.permute.xlu0 %3217
        %3221 = vset.pattern.permute.xlu0 0
        %3222 = vperm.xlu0 %3221, %v3206
        %v3223 = vpop.permute.xlu0 %3222
        %3226 = vset.pattern.permute.xlu0 0
        %3227 = vperm.xlu0 %3226, %v3207
        %v3228 = vpop.permute.xlu0 %3227
        %3231 = vset.pattern.permute.xlu0 0
        %3232 = vperm.xlu0 %3231, %v3208
        %v3233 = vpop.permute.xlu0 %3232
        %3236 = vset.pattern.permute.xlu0 0
        %3237 = vperm.xlu0 %3236, %v3209
        %v3238 = vpop.permute.xlu0 %3237
        %v3240 = vadd.f32 %v2867, %v3213
        %v3241 = vadd.f32 %v3181, %v3213
        %v3242 = vadd.f32 %v2871, %v3218
        %v3243 = vadd.f32 %v3185, %v3218
        %v3244 = vadd.f32 %v2875, %v3223
        %v3245 = vadd.f32 %v3189, %v3223
        %v3246 = vadd.f32 %v2879, %v3228
        %v3247 = vadd.f32 %v3193, %v3228
        %v3248 = vadd.f32 %v2883, %v3233
        %v3249 = vadd.f32 %v3197, %v3233
        %v3250 = vadd.f32 %v2887, %v3238
        %v3251 = vadd.f32 %v3201, %v3238
        %v3252 = vtanh.pop %v3240
        %v3253 = vtanh.pop %v3241
        %v3254 = vtanh.pop %v3242
        %v3255 = vtanh.pop %v3243
        %v3256 = vxor.u32 %v3244, 2147483648
        %v3257 = vxor.u32 %v3245, 2147483648
        %v3258 = vxor.u32 %v3246, 2147483648
        %v3259 = vxor.u32 %v3247, 2147483648
        %v3260 = vmul.f32 %v3256, 1.442695
        %v3261 = vpow.pop %v3260
        %v3262 = vmul.f32 %v3257, 1.442695
        %v3263 = vpow.pop %v3262
        %v3264 = vmul.f32 %v3258, 1.442695
        %v3265 = vpow.pop %v3264
        %v3266 = vmul.f32 %v3259, 1.442695
        %v3267 = vpow.pop %v3266
        %v3268 = vadd.f32 %v3261, 1.0
        %v3269 = vadd.f32 %v3263, 1.0
        %v3270 = vadd.f32 %v3265, 1.0
        %v3271 = vadd.f32 %v3267, 1.0
        %v3272 = vrcp.pop %v3268
        %v3273 = vmul.f32 %v3268, %v3272
        %v3274 = vsub.f32 1.0, %v3273
        %v3275 = vmul.f32 %v3272, %v3274
        %v3276 = vadd.f32 %v3272, %v3275
        %vm3277 = vweird.f32 %v3268
        %vm3278 = vweird.f32 %v3272
        %vm3279 = vmor %vm3277, %vm3278
        %v3280 = vsel %vm3279, %v3272, %v3276
        %v3281 = vand.u32 2147483647, %v3268
        %vm3282 = vcmp.eq.f32.partialorder %v3281, 8.507059e+37
        %v3283 = vand.u32 %v3268, 2147483648
        %v3284 = vor.u32 1.1754944e-38, %v3283
        %v3285 = vsel %vm3282, %v3284, %v3280
        %v3286 = vmul.f32 1.0, %v3285
        %v3287 = vrcp.pop %v3269
        %v3288 = vmul.f32 %v3269, %v3287
        %v3289 = vsub.f32 1.0, %v3288
        %v3290 = vmul.f32 %v3287, %v3289
        %v3291 = vadd.f32 %v3287, %v3290
        %vm3292 = vweird.f32 %v3269
        %vm3293 = vweird.f32 %v3287
        %vm3294 = vmor %vm3292, %vm3293
        %v3295 = vsel %vm3294, %v3287, %v3291
        %v3296 = vand.u32 2147483647, %v3269
        %vm3297 = vcmp.eq.f32.partialorder %v3296, 8.507059e+37
        %v3298 = vand.u32 %v3269, 2147483648
        %v3299 = vor.u32 1.1754944e-38, %v3298
        %v3300 = vsel %vm3297, %v3299, %v3295
        %v3301 = vmul.f32 1.0, %v3300
        %v3302 = vrcp.pop %v3270
        %v3303 = vmul.f32 %v3270, %v3302
        %v3304 = vsub.f32 1.0, %v3303
        %v3305 = vmul.f32 %v3302, %v3304
        %v3306 = vadd.f32 %v3302, %v3305
        %vm3307 = vweird.f32 %v3270
        %vm3308 = vweird.f32 %v3302
        %vm3309 = vmor %vm3307, %vm3308
        %v3310 = vsel %vm3309, %v3302, %v3306
        %v3311 = vand.u32 2147483647, %v3270
        %vm3312 = vcmp.eq.f32.partialorder %v3311, 8.507059e+37
        %v3313 = vand.u32 %v3270, 2147483648
        %v3314 = vor.u32 1.1754944e-38, %v3313
        %v3315 = vsel %vm3312, %v3314, %v3310
        %v3316 = vmul.f32 1.0, %v3315
        %v3317 = vrcp.pop %v3271
        %v3318 = vmul.f32 %v3271, %v3317
        %v3319 = vsub.f32 1.0, %v3318
        %v3320 = vmul.f32 %v3317, %v3319
        %v3321 = vadd.f32 %v3317, %v3320
        %vm3322 = vweird.f32 %v3271
        %vm3323 = vweird.f32 %v3317
        %vm3324 = vmor %vm3322, %vm3323
        %v3325 = vsel %vm3324, %v3317, %v3321
        %v3326 = vand.u32 2147483647, %v3271
        %vm3327 = vcmp.eq.f32.partialorder %v3326, 8.507059e+37
        %v3328 = vand.u32 %v3271, 2147483648
        %v3329 = vor.u32 1.1754944e-38, %v3328
        %v3330 = vsel %vm3327, %v3329, %v3325
        %v3331 = vmul.f32 1.0, %v3330
        %v3332 = vmul.f32 %v3252, %v3286
        %v3333 = vmul.f32 %v3253, %v3301
        %v3334 = vmul.f32 %v3254, %v3316
        %v3335 = vmul.f32 %v3255, %v3331
        %v3336 = vadd.f32 %v3332, %v3248
        %v3337 = vadd.f32 %v3333, %v3249
        %v3338 = vadd.f32 %v3334, %v3250
        %v3339 = vadd.f32 %v3335, %v3251
        %3340 = vst [vmem:[%s405] sm:$0xff] %v3336
        %3341 = vst [vmem:[%s405 + $0x8] sm:$0xff] %v3338
        %v3342 = vld [vmem:[%s4] sm:$0xff]
        %v3343 = vld [vmem:[%s4 + $0x8] sm:$0xff]
        %v3344 = vld [vmem:[%s4 + $0x10] sm:$0xff]
        %s3345 = scalar_lea.vmem %s4, 24
        %v3346 = vld [vmem:[%s3345] sm:$0xff]
        %v3347 = vld [vmem:[%s3345 + $0x8] sm:$0xff]
        %v3348 = vld [vmem:[%s3345 + $0x10] sm:$0xff]
        %3353 = vrot.lane.b32.xlu0 %v3336, 127
        %v3354 = vpop.permute.xlu0 %3353
        %3355 = vrot.lane.b32.xlu0 %v3337, 127
        %v3356 = vpop.permute.xlu0 %3355
        %3357 = vrot.lane.b32.xlu0 %v3338, 127
        %v3358 = vpop.permute.xlu0 %3357
        %3359 = vrot.lane.b32.xlu0 %v3339, 127
        %v3360 = vpop.permute.xlu0 %3359
        %v3361 = vsel %vm443, %v3354, %v3356
        %v3362 = vsel %vm443, %v3358, %v3360
        %v3366 = vsel %vm450, %v3346, 0
        %v3369 = vsel %vm450, %v3347, 0
        %v3372 = vsel %vm450, %v3348, 0
        %3374 = vmatpush.msra.mxu0 0.0
        %3375 = vmatpush.msra.mxu0 0.0
        %3376 = vmatpush.msra.mxu0 0.0
        %3377 = vmatpush.msra.mxu0 0.0
        %3378 = vmatpush.msra.mxu0 0.0
        %3379 = vmatpush.msra.mxu0 0.0
        %3380 = vmatpush.msra.mxu0 0.0
        %3381 = vmatpush.msra.mxu0 0.0
        %3382 = vmatpush.msra.mxu0 0.0
        %3383 = vmatpush.msra.mxu0 0.0
        %3384 = vmatpush.msra.mxu0 0.0
        %3385 = vmatpush.msra.mxu0 0.0
        %3386 = vmatpush.msra.mxu0 0.0
        %3387 = vmatpush.msra.mxu0 0.0
        %v3388 = vand.u32 %v3362, 4294901760
        %3389 = vmatpush.msra.mxu0 %v3388
        %v3390 = vand.u32 %v3361, 4294901760
        %3391 = vmatpush.msra.mxu0 %v3390
        %v3392 = vand.u32 %v3366, 4294901760
        %v3393 = vsub.f32 %v3366, %v3392
        %v3394 = vand.u32 %v3393, 4294901760
        %v3395 = vsub.f32 %v3393, %v3394
        %v3396 = vand.u32 %v3395, 4294901760
        %3397 = vmatmul.f32.gmra.mxu0 %v3396
        %v3398 = vpop.f32.mrf.mxu0
        %v3399 = vadd.f32 0.0, %v3398
        %v3400 = vand.u32 %v3369, 4294901760
        %v3401 = vsub.f32 %v3369, %v3400
        %v3402 = vand.u32 %v3401, 4294901760
        %v3403 = vsub.f32 %v3401, %v3402
        %v3404 = vand.u32 %v3403, 4294901760
        %3405 = vmatmul.f32.gmra.mxu0 %v3404
        %v3406 = vpop.f32.mrf.mxu0
        %v3407 = vadd.f32 0.0, %v3406
        %v3408 = vand.u32 %v3372, 4294901760
        %v3409 = vsub.f32 %v3372, %v3408
        %v3410 = vand.u32 %v3409, 4294901760
        %v3411 = vsub.f32 %v3409, %v3410
        %v3412 = vand.u32 %v3411, 4294901760
        %3413 = vmatmul.f32.gmra.mxu0 %v3412
        %v3414 = vpop.f32.mrf.mxu0
        %v3415 = vadd.f32 0.0, %v3414
        %3416 = vdwg.mxu0
        %3417 = vmatpush.msra.mxu0 0.0
        %3418 = vmatpush.msra.mxu0 0.0
        %3419 = vmatpush.msra.mxu0 0.0
        %3420 = vmatpush.msra.mxu0 0.0
        %3421 = vmatpush.msra.mxu0 0.0
        %3422 = vmatpush.msra.mxu0 0.0
        %3423 = vmatpush.msra.mxu0 0.0
        %3424 = vmatpush.msra.mxu0 0.0
        %3425 = vmatpush.msra.mxu0 0.0
        %3426 = vmatpush.msra.mxu0 0.0
        %3427 = vmatpush.msra.mxu0 0.0
        %3428 = vmatpush.msra.mxu0 0.0
        %3429 = vmatpush.msra.mxu0 0.0
        %3430 = vmatpush.msra.mxu0 0.0
        %v3431 = vand.u32 %v3362, 4294901760
        %v3432 = vsub.f32 %v3362, %v3431
        %v3433 = vand.u32 %v3432, 4294901760
        %v3434 = vsub.f32 %v3432, %v3433
        %v3435 = vand.u32 %v3434, 4294901760
        %3436 = vmatpush.msra.mxu0 %v3435
        %v3437 = vand.u32 %v3361, 4294901760
        %v3438 = vsub.f32 %v3361, %v3437
        %v3439 = vand.u32 %v3438, 4294901760
        %v3440 = vsub.f32 %v3438, %v3439
        %v3441 = vand.u32 %v3440, 4294901760
        %3442 = vmatpush.msra.mxu0 %v3441
        %v3443 = vand.u32 %v3366, 4294901760
        %3444 = vmatmul.f32.gmra.mxu0 %v3443
        %v3445 = vpop.f32.mrf.mxu0
        %v3446 = vadd.f32 %v3399, %v3445
        %v3447 = vand.u32 %v3369, 4294901760
        %3448 = vmatmul.f32.gmra.mxu0 %v3447
        %v3449 = vpop.f32.mrf.mxu0
        %v3450 = vadd.f32 %v3407, %v3449
        %v3451 = vand.u32 %v3372, 4294901760
        %3452 = vmatmul.f32.gmra.mxu0 %v3451
        %v3453 = vpop.f32.mrf.mxu0
        %v3454 = vadd.f32 %v3415, %v3453
        %3455 = vdwg.mxu0
        %3456 = vmatpush.msra.mxu0 0.0
        %3457 = vmatpush.msra.mxu0 0.0
        %3458 = vmatpush.msra.mxu0 0.0
        %3459 = vmatpush.msra.mxu0 0.0
        %3460 = vmatpush.msra.mxu0 0.0
        %3461 = vmatpush.msra.mxu0 0.0
        %3462 = vmatpush.msra.mxu0 0.0
        %3463 = vmatpush.msra.mxu0 0.0
        %3464 = vmatpush.msra.mxu0 0.0
        %3465 = vmatpush.msra.mxu0 0.0
        %3466 = vmatpush.msra.mxu0 0.0
        %3467 = vmatpush.msra.mxu0 0.0
        %3468 = vmatpush.msra.mxu0 0.0
        %3469 = vmatpush.msra.mxu0 0.0
        %v3470 = vand.u32 %v3362, 4294901760
        %v3471 = vsub.f32 %v3362, %v3470
        %3472 = vmatpush.msra.mxu0 %v3471
        %v3473 = vand.u32 %v3361, 4294901760
        %v3474 = vsub.f32 %v3361, %v3473
        %3475 = vmatpush.msra.mxu0 %v3474
        %v3476 = vand.u32 %v3366, 4294901760
        %v3477 = vsub.f32 %v3366, %v3476
        %3478 = vmatmul.f32.gmra.mxu0 %v3477
        %v3479 = vpop.f32.mrf.mxu0
        %v3480 = vadd.f32 %v3446, %v3479
        %v3481 = vand.u32 %v3369, 4294901760
        %v3482 = vsub.f32 %v3369, %v3481
        %3483 = vmatmul.f32.gmra.mxu0 %v3482
        %v3484 = vpop.f32.mrf.mxu0
        %v3485 = vadd.f32 %v3450, %v3484
        %v3486 = vand.u32 %v3372, 4294901760
        %v3487 = vsub.f32 %v3372, %v3486
        %3488 = vmatmul.f32.gmra.mxu0 %v3487
        %v3489 = vpop.f32.mrf.mxu0
        %v3490 = vadd.f32 %v3454, %v3489
        %3491 = vdwg.mxu0
        %3492 = vmatpush.msra.mxu0 0.0
        %3493 = vmatpush.msra.mxu0 0.0
        %3494 = vmatpush.msra.mxu0 0.0
        %3495 = vmatpush.msra.mxu0 0.0
        %3496 = vmatpush.msra.mxu0 0.0
        %3497 = vmatpush.msra.mxu0 0.0
        %3498 = vmatpush.msra.mxu0 0.0
        %3499 = vmatpush.msra.mxu0 0.0
        %3500 = vmatpush.msra.mxu0 0.0
        %3501 = vmatpush.msra.mxu0 0.0
        %3502 = vmatpush.msra.mxu0 0.0
        %3503 = vmatpush.msra.mxu0 0.0
        %3504 = vmatpush.msra.mxu0 0.0
        %3505 = vmatpush.msra.mxu0 0.0
        %v3506 = vand.u32 %v3362, 4294901760
        %3507 = vmatpush.msra.mxu0 %v3506
        %v3508 = vand.u32 %v3361, 4294901760
        %3509 = vmatpush.msra.mxu0 %v3508
        %v3510 = vand.u32 %v3366, 4294901760
        %v3511 = vsub.f32 %v3366, %v3510
        %v3512 = vand.u32 %v3511, 4294901760
        %3513 = vmatmul.f32.gmra.mxu0 %v3512
        %v3514 = vpop.f32.mrf.mxu0
        %v3515 = vadd.f32 %v3480, %v3514
        %v3516 = vand.u32 %v3369, 4294901760
        %v3517 = vsub.f32 %v3369, %v3516
        %v3518 = vand.u32 %v3517, 4294901760
        %3519 = vmatmul.f32.gmra.mxu0 %v3518
        %v3520 = vpop.f32.mrf.mxu0
        %v3521 = vadd.f32 %v3485, %v3520
        %v3522 = vand.u32 %v3372, 4294901760
        %v3523 = vsub.f32 %v3372, %v3522
        %v3524 = vand.u32 %v3523, 4294901760
        %3525 = vmatmul.f32.gmra.mxu0 %v3524
        %v3526 = vpop.f32.mrf.mxu0
        %v3527 = vadd.f32 %v3490, %v3526
        %3528 = vdwg.mxu0
        %3529 = vmatpush.msra.mxu0 0.0
        %3530 = vmatpush.msra.mxu0 0.0
        %3531 = vmatpush.msra.mxu0 0.0
        %3532 = vmatpush.msra.mxu0 0.0
        %3533 = vmatpush.msra.mxu0 0.0
        %3534 = vmatpush.msra.mxu0 0.0
        %3535 = vmatpush.msra.mxu0 0.0
        %3536 = vmatpush.msra.mxu0 0.0
        %3537 = vmatpush.msra.mxu0 0.0
        %3538 = vmatpush.msra.mxu0 0.0
        %3539 = vmatpush.msra.mxu0 0.0
        %3540 = vmatpush.msra.mxu0 0.0
        %3541 = vmatpush.msra.mxu0 0.0
        %3542 = vmatpush.msra.mxu0 0.0
        %v3543 = vand.u32 %v3362, 4294901760
        %v3544 = vsub.f32 %v3362, %v3543
        %v3545 = vand.u32 %v3544, 4294901760
        %3546 = vmatpush.msra.mxu0 %v3545
        %v3547 = vand.u32 %v3361, 4294901760
        %v3548 = vsub.f32 %v3361, %v3547
        %v3549 = vand.u32 %v3548, 4294901760
        %3550 = vmatpush.msra.mxu0 %v3549
        %v3551 = vand.u32 %v3366, 4294901760
        %3552 = vmatmul.f32.gmra.mxu0 %v3551
        %v3553 = vpop.f32.mrf.mxu0
        %v3554 = vadd.f32 %v3515, %v3553
        %v3555 = vand.u32 %v3369, 4294901760
        %3556 = vmatmul.f32.gmra.mxu0 %v3555
        %v3557 = vpop.f32.mrf.mxu0
        %v3558 = vadd.f32 %v3521, %v3557
        %v3559 = vand.u32 %v3372, 4294901760
        %3560 = vmatmul.f32.gmra.mxu0 %v3559
        %v3561 = vpop.f32.mrf.mxu0
        %v3562 = vadd.f32 %v3527, %v3561
        %3563 = vdwg.mxu0
        %3564 = vmatpush.msra.mxu0 0.0
        %3565 = vmatpush.msra.mxu0 0.0
        %3566 = vmatpush.msra.mxu0 0.0
        %3567 = vmatpush.msra.mxu0 0.0
        %3568 = vmatpush.msra.mxu0 0.0
        %3569 = vmatpush.msra.mxu0 0.0
        %3570 = vmatpush.msra.mxu0 0.0
        %3571 = vmatpush.msra.mxu0 0.0
        %3572 = vmatpush.msra.mxu0 0.0
        %3573 = vmatpush.msra.mxu0 0.0
        %3574 = vmatpush.msra.mxu0 0.0
        %3575 = vmatpush.msra.mxu0 0.0
        %3576 = vmatpush.msra.mxu0 0.0
        %3577 = vmatpush.msra.mxu0 0.0
        %v3578 = vand.u32 %v3362, 4294901760
        %3579 = vmatpush.msra.mxu0 %v3578
        %v3580 = vand.u32 %v3361, 4294901760
        %3581 = vmatpush.msra.mxu0 %v3580
        %v3582 = vand.u32 %v3366, 4294901760
        %3583 = vmatmul.f32.gmra.mxu0 %v3582
        %v3584 = vpop.f32.mrf.mxu0
        %v3585 = vadd.f32 %v3554, %v3584
        %v3586 = vand.u32 %v3369, 4294901760
        %3587 = vmatmul.f32.gmra.mxu0 %v3586
        %v3588 = vpop.f32.mrf.mxu0
        %v3589 = vadd.f32 %v3558, %v3588
        %v3590 = vand.u32 %v3372, 4294901760
        %3591 = vmatmul.f32.gmra.mxu0 %v3590
        %v3592 = vpop.f32.mrf.mxu0
        %v3593 = vadd.f32 %v3562, %v3592
        %3594 = vdwg.mxu0
        %v3596 = vsel %vm450, %v3342, 0
        %v3599 = vsel %vm450, %v3343, 0
        %v3602 = vsel %vm450, %v3344, 0
        %3604 = vmatpush.msra.mxu0 0.0
        %3605 = vmatpush.msra.mxu0 0.0
        %3606 = vmatpush.msra.mxu0 0.0
        %3607 = vmatpush.msra.mxu0 0.0
        %3608 = vmatpush.msra.mxu0 0.0
        %3609 = vmatpush.msra.mxu0 0.0
        %3610 = vmatpush.msra.mxu0 0.0
        %3611 = vmatpush.msra.mxu0 0.0
        %3612 = vmatpush.msra.mxu0 0.0
        %3613 = vmatpush.msra.mxu0 0.0
        %3614 = vmatpush.msra.mxu0 0.0
        %3615 = vmatpush.msra.mxu0 0.0
        %3616 = vmatpush.msra.mxu0 0.0
        %3617 = vmatpush.msra.mxu0 0.0
        %v3618 = vand.u32 %v3338, 4294901760
        %3619 = vmatpush.msra.mxu0 %v3618
        %v3620 = vand.u32 %v3336, 4294901760
        %3621 = vmatpush.msra.mxu0 %v3620
        %v3622 = vand.u32 %v3596, 4294901760
        %v3623 = vsub.f32 %v3596, %v3622
        %v3624 = vand.u32 %v3623, 4294901760
        %v3625 = vsub.f32 %v3623, %v3624
        %v3626 = vand.u32 %v3625, 4294901760
        %3627 = vmatmul.f32.gmra.mxu0 %v3626
        %v3628 = vpop.f32.mrf.mxu0
        %v3629 = vadd.f32 %v3585, %v3628
        %v3630 = vand.u32 %v3599, 4294901760
        %v3631 = vsub.f32 %v3599, %v3630
        %v3632 = vand.u32 %v3631, 4294901760
        %v3633 = vsub.f32 %v3631, %v3632
        %v3634 = vand.u32 %v3633, 4294901760
        %3635 = vmatmul.f32.gmra.mxu0 %v3634
        %v3636 = vpop.f32.mrf.mxu0
        %v3637 = vadd.f32 %v3589, %v3636
        %v3638 = vand.u32 %v3602, 4294901760
        %v3639 = vsub.f32 %v3602, %v3638
        %v3640 = vand.u32 %v3639, 4294901760
        %v3641 = vsub.f32 %v3639, %v3640
        %v3642 = vand.u32 %v3641, 4294901760
        %3643 = vmatmul.f32.gmra.mxu0 %v3642
        %v3644 = vpop.f32.mrf.mxu0
        %v3645 = vadd.f32 %v3593, %v3644
        %3646 = vdwg.mxu0
        %3647 = vmatpush.msra.mxu0 0.0
        %3648 = vmatpush.msra.mxu0 0.0
        %3649 = vmatpush.msra.mxu0 0.0
        %3650 = vmatpush.msra.mxu0 0.0
        %3651 = vmatpush.msra.mxu0 0.0
        %3652 = vmatpush.msra.mxu0 0.0
        %3653 = vmatpush.msra.mxu0 0.0
        %3654 = vmatpush.msra.mxu0 0.0
        %3655 = vmatpush.msra.mxu0 0.0
        %3656 = vmatpush.msra.mxu0 0.0
        %3657 = vmatpush.msra.mxu0 0.0
        %3658 = vmatpush.msra.mxu0 0.0
        %3659 = vmatpush.msra.mxu0 0.0
        %3660 = vmatpush.msra.mxu0 0.0
        %v3661 = vand.u32 %v3338, 4294901760
        %v3662 = vsub.f32 %v3338, %v3661
        %v3663 = vand.u32 %v3662, 4294901760
        %v3664 = vsub.f32 %v3662, %v3663
        %v3665 = vand.u32 %v3664, 4294901760
        %3666 = vmatpush.msra.mxu0 %v3665
        %v3667 = vand.u32 %v3336, 4294901760
        %v3668 = vsub.f32 %v3336, %v3667
        %v3669 = vand.u32 %v3668, 4294901760
        %v3670 = vsub.f32 %v3668, %v3669
        %v3671 = vand.u32 %v3670, 4294901760
        %3672 = vmatpush.msra.mxu0 %v3671
        %v3673 = vand.u32 %v3596, 4294901760
        %3674 = vmatmul.f32.gmra.mxu0 %v3673
        %v3675 = vpop.f32.mrf.mxu0
        %v3676 = vadd.f32 %v3629, %v3675
        %v3677 = vand.u32 %v3599, 4294901760
        %3678 = vmatmul.f32.gmra.mxu0 %v3677
        %v3679 = vpop.f32.mrf.mxu0
        %v3680 = vadd.f32 %v3637, %v3679
        %v3681 = vand.u32 %v3602, 4294901760
        %3682 = vmatmul.f32.gmra.mxu0 %v3681
        %v3683 = vpop.f32.mrf.mxu0
        %v3684 = vadd.f32 %v3645, %v3683
        %3685 = vdwg.mxu0
        %3686 = vmatpush.msra.mxu0 0.0
        %3687 = vmatpush.msra.mxu0 0.0
        %3688 = vmatpush.msra.mxu0 0.0
        %3689 = vmatpush.msra.mxu0 0.0
        %3690 = vmatpush.msra.mxu0 0.0
        %3691 = vmatpush.msra.mxu0 0.0
        %3692 = vmatpush.msra.mxu0 0.0
        %3693 = vmatpush.msra.mxu0 0.0
        %3694 = vmatpush.msra.mxu0 0.0
        %3695 = vmatpush.msra.mxu0 0.0
        %3696 = vmatpush.msra.mxu0 0.0
        %3697 = vmatpush.msra.mxu0 0.0
        %3698 = vmatpush.msra.mxu0 0.0
        %3699 = vmatpush.msra.mxu0 0.0
        %v3700 = vand.u32 %v3338, 4294901760
        %v3701 = vsub.f32 %v3338, %v3700
        %3702 = vmatpush.msra.mxu0 %v3701
        %v3703 = vand.u32 %v3336, 4294901760
        %v3704 = vsub.f32 %v3336, %v3703
        %3705 = vmatpush.msra.mxu0 %v3704
        %v3706 = vand.u32 %v3596, 4294901760
        %v3707 = vsub.f32 %v3596, %v3706
        %3708 = vmatmul.f32.gmra.mxu0 %v3707
        %v3709 = vpop.f32.mrf.mxu0
        %v3710 = vadd.f32 %v3676, %v3709
        %v3711 = vand.u32 %v3599, 4294901760
        %v3712 = vsub.f32 %v3599, %v3711
        %3713 = vmatmul.f32.gmra.mxu0 %v3712
        %v3714 = vpop.f32.mrf.mxu0
        %v3715 = vadd.f32 %v3680, %v3714
        %v3716 = vand.u32 %v3602, 4294901760
        %v3717 = vsub.f32 %v3602, %v3716
        %3718 = vmatmul.f32.gmra.mxu0 %v3717
        %v3719 = vpop.f32.mrf.mxu0
        %v3720 = vadd.f32 %v3684, %v3719
        %3721 = vdwg.mxu0
        %3722 = vmatpush.msra.mxu0 0.0
        %3723 = vmatpush.msra.mxu0 0.0
        %3724 = vmatpush.msra.mxu0 0.0
        %3725 = vmatpush.msra.mxu0 0.0
        %3726 = vmatpush.msra.mxu0 0.0
        %3727 = vmatpush.msra.mxu0 0.0
        %3728 = vmatpush.msra.mxu0 0.0
        %3729 = vmatpush.msra.mxu0 0.0
        %3730 = vmatpush.msra.mxu0 0.0
        %3731 = vmatpush.msra.mxu0 0.0
        %3732 = vmatpush.msra.mxu0 0.0
        %3733 = vmatpush.msra.mxu0 0.0
        %3734 = vmatpush.msra.mxu0 0.0
        %3735 = vmatpush.msra.mxu0 0.0
        %v3736 = vand.u32 %v3338, 4294901760
        %3737 = vmatpush.msra.mxu0 %v3736
        %v3738 = vand.u32 %v3336, 4294901760
        %3739 = vmatpush.msra.mxu0 %v3738
        %v3740 = vand.u32 %v3596, 4294901760
        %v3741 = vsub.f32 %v3596, %v3740
        %v3742 = vand.u32 %v3741, 4294901760
        %3743 = vmatmul.f32.gmra.mxu0 %v3742
        %v3744 = vpop.f32.mrf.mxu0
        %v3745 = vadd.f32 %v3710, %v3744
        %v3746 = vand.u32 %v3599, 4294901760
        %v3747 = vsub.f32 %v3599, %v3746
        %v3748 = vand.u32 %v3747, 4294901760
        %3749 = vmatmul.f32.gmra.mxu0 %v3748
        %v3750 = vpop.f32.mrf.mxu0
        %v3751 = vadd.f32 %v3715, %v3750
        %v3752 = vand.u32 %v3602, 4294901760
        %v3753 = vsub.f32 %v3602, %v3752
        %v3754 = vand.u32 %v3753, 4294901760
        %3755 = vmatmul.f32.gmra.mxu0 %v3754
        %v3756 = vpop.f32.mrf.mxu0
        %v3757 = vadd.f32 %v3720, %v3756
        %3758 = vdwg.mxu0
        %3759 = vmatpush.msra.mxu0 0.0
        %3760 = vmatpush.msra.mxu0 0.0
        %3761 = vmatpush.msra.mxu0 0.0
        %3762 = vmatpush.msra.mxu0 0.0
        %3763 = vmatpush.msra.mxu0 0.0
        %3764 = vmatpush.msra.mxu0 0.0
        %3765 = vmatpush.msra.mxu0 0.0
        %3766 = vmatpush.msra.mxu0 0.0
        %3767 = vmatpush.msra.mxu0 0.0
        %3768 = vmatpush.msra.mxu0 0.0
        %3769 = vmatpush.msra.mxu0 0.0
        %3770 = vmatpush.msra.mxu0 0.0
        %3771 = vmatpush.msra.mxu0 0.0
        %3772 = vmatpush.msra.mxu0 0.0
        %v3773 = vand.u32 %v3338, 4294901760
        %v3774 = vsub.f32 %v3338, %v3773
        %v3775 = vand.u32 %v3774, 4294901760
        %3776 = vmatpush.msra.mxu0 %v3775
        %v3777 = vand.u32 %v3336, 4294901760
        %v3778 = vsub.f32 %v3336, %v3777
        %v3779 = vand.u32 %v3778, 4294901760
        %3780 = vmatpush.msra.mxu0 %v3779
        %v3781 = vand.u32 %v3596, 4294901760
        %3782 = vmatmul.f32.gmra.mxu0 %v3781
        %v3783 = vpop.f32.mrf.mxu0
        %v3784 = vadd.f32 %v3745, %v3783
        %v3785 = vand.u32 %v3599, 4294901760
        %3786 = vmatmul.f32.gmra.mxu0 %v3785
        %v3787 = vpop.f32.mrf.mxu0
        %v3788 = vadd.f32 %v3751, %v3787
        %v3789 = vand.u32 %v3602, 4294901760
        %3790 = vmatmul.f32.gmra.mxu0 %v3789
        %v3791 = vpop.f32.mrf.mxu0
        %v3792 = vadd.f32 %v3757, %v3791
        %3793 = vdwg.mxu0
        %3794 = vmatpush.msra.mxu0 0.0
        %3795 = vmatpush.msra.mxu0 0.0
        %3796 = vmatpush.msra.mxu0 0.0
        %3797 = vmatpush.msra.mxu0 0.0
        %3798 = vmatpush.msra.mxu0 0.0
        %3799 = vmatpush.msra.mxu0 0.0
        %3800 = vmatpush.msra.mxu0 0.0
        %3801 = vmatpush.msra.mxu0 0.0
        %3802 = vmatpush.msra.mxu0 0.0
        %3803 = vmatpush.msra.mxu0 0.0
        %3804 = vmatpush.msra.mxu0 0.0
        %3805 = vmatpush.msra.mxu0 0.0
        %3806 = vmatpush.msra.mxu0 0.0
        %3807 = vmatpush.msra.mxu0 0.0
        %v3808 = vand.u32 %v3338, 4294901760
        %3809 = vmatpush.msra.mxu0 %v3808
        %v3810 = vand.u32 %v3336, 4294901760
        %3811 = vmatpush.msra.mxu0 %v3810
        %v3812 = vand.u32 %v3596, 4294901760
        %3813 = vmatmul.f32.gmra.mxu0 %v3812
        %v3814 = vpop.f32.mrf.mxu0
        %v3815 = vadd.f32 %v3784, %v3814
        %v3816 = vand.u32 %v3599, 4294901760
        %3817 = vmatmul.f32.gmra.mxu0 %v3816
        %v3818 = vpop.f32.mrf.mxu0
        %v3819 = vadd.f32 %v3788, %v3818
        %v3820 = vand.u32 %v3602, 4294901760
        %3821 = vmatmul.f32.gmra.mxu0 %v3820
        %v3822 = vpop.f32.mrf.mxu0
        %v3823 = vadd.f32 %v3792, %v3822
        %3824 = vdwg.mxu0
        %v3825 = vld [vmem:[%s5] sm:$0xff]
        %v3826 = vld [vmem:[%s5 + $0x8] sm:$0xff]
        %v3827 = vld [vmem:[%s5 + $0x10] sm:$0xff]
        %3829 = vset.pattern.permute.xlu0 0
        %3830 = vperm.xlu0 %3829, %v3825
        %v3831 = vpop.permute.xlu0 %3830
        %3834 = vset.pattern.permute.xlu0 0
        %3835 = vperm.xlu0 %3834, %v3826
        %v3836 = vpop.permute.xlu0 %3835
        %3839 = vset.pattern.permute.xlu0 0
        %3840 = vperm.xlu0 %3839, %v3827
        %v3841 = vpop.permute.xlu0 %3840
        %v3843 = vadd.f32 %v3815, %v3831
        %v3844 = vadd.f32 %v3819, %v3836
        %v3845 = vadd.f32 %v3823, %v3841
        %v3846 = vtanh.pop %v3843
        %v3847 = vxor.u32 %v3844, 2147483648
        %v3848 = vmul.f32 %v3847, 1.442695
        %v3849 = vpow.pop %v3848
        %v3850 = vadd.f32 %v3849, 1.0
        %v3851 = vrcp.pop %v3850
        %v3852 = vmul.f32 %v3850, %v3851
        %v3853 = vsub.f32 1.0, %v3852
        %v3854 = vmul.f32 %v3851, %v3853
        %v3855 = vadd.f32 %v3851, %v3854
        %vm3856 = vweird.f32 %v3850
        %vm3857 = vweird.f32 %v3851
        %vm3858 = vmor %vm3856, %vm3857
        %v3859 = vsel %vm3858, %v3851, %v3855
        %v3860 = vand.u32 2147483647, %v3850
        %vm3861 = vcmp.eq.f32.partialorder %v3860, 8.507059e+37
        %v3862 = vand.u32 %v3850, 2147483648
        %v3863 = vor.u32 1.1754944e-38, %v3862
        %v3864 = vsel %vm3861, %v3863, %v3859
        %v3865 = vmul.f32 1.0, %v3864
        %v3866 = vmul.f32 %v3846, %v3865
        %v3867 = vadd.f32 %v3866, %v3845
        %3868 = vst [vmem:[%s412] sm:$0xff] %v3867
        %s3869 = sand.u32 %s189, 1
        %s3870 = scalar_lea.sflag [#allocation5], %s3869
        %s3871 = sand.u32 %s189, 1
        %s3872 = smul.addr %s3871, 16
        %s3873 = scalar_lea.vmem [#allocation4], %s3872
        %s3874 = sand.u32 %s217, 1
        %s3875 = scalar_lea.sflag [#allocation7], %s3874
        %s3876 = sand.u32 %s217, 1
        %s3877 = smul.addr %s3876, 8
        %s3878 = scalar_lea.vmem [#allocation6], %s3877
        // Predicated region
        $region121: #{tpu_custom_call.1} parent=111 // pred_check
          %p3879 = pneg %p199
        $region122: #{tpu_custom_call.1} parent=111 // pred_check_branch
          %3881 = sbr.rel (%p3879) target = $region124
        $region123: #{tpu_custom_call.1} parent=111 // pred_region
          %3883 = vsyncadd %s3870, 0
          %s3884 = smul.addr %s29, 2
          %s3885 = sadd.s32 %s30, %s3884
          %s3886 = smul.addr %s3885, 8
          %s3887 = scalar_lea.hbm %s6, %s3886
          %s3888 = sshll.u32 %s3873, 4
          %s3889 = int_to_ptr.vmem [resolvable:$true] %s3888
          %s3890 = sshll.u32 %s3887, 4
          %s3891 = int_to_ptr.hbm [resolvable:$true] %s3890
          %3896 = dma.vmem_to_hbm [thread:$0]  %s3889, 256, %s3891, %s3870, 128, 128, 8
        $region124: #{tpu_custom_call.1} parent=111 // pred_fallthru
          _
        // Predicated region
        $region125: #{tpu_custom_call.1} parent=111 // pred_check
          %p3897 = pneg %p227
        $region126: #{tpu_custom_call.1} parent=111 // pred_check_branch
          %3899 = sbr.rel (%p3897) target = $region128
        $region127: #{tpu_custom_call.1} parent=111 // pred_region
          %3901 = vsyncadd %s3875, 0
          %s3902 = sadd.s32 %s30, %s29
          %s3903 = smul.addr %s3902, 8
          %s3904 = scalar_lea.hbm %s7, %s3903
          %s3906 = sshll.u32 %s3878, 4
          %s3907 = int_to_ptr.vmem [resolvable:$true] %s3906
          %s3908 = sshll.u32 %s3904, 4
          %s3909 = int_to_ptr.hbm [resolvable:$true] %s3908
          %3911 = dma.vmem_to_hbm [thread:$0]  %s3907, 128, %s3909, %s3875
        $region128: #{tpu_custom_call.1} parent=111 // pred_fallthru
          _
      $region112: #{tpu_custom_call.1} parent=5 // pred_fallthru
        _
      %p3912 = scmp.le.s32.totalorder 2, %s20
      // Predicated region
      $region129: #{tpu_custom_call.1} parent=5 // pred_check
        %p3913 = pneg %p3912
      $region130: #{tpu_custom_call.1} parent=5 // pred_check_branch
        %3915 = sbr.rel (%p3913) target = $region132
      $region131: #{tpu_custom_call.1} parent=5 // pred_region
        %s3916 = ssub.s32 %s20, 2
        // Predicated region
        $region133: #{tpu_custom_call.1} parent=131 // pred_check
          %p3917 = pneg %p205
        $region134: #{tpu_custom_call.1} parent=131 // pred_check_branch
          %3919 = sbr.rel (%p3917) target = $region136
        $region135: #{tpu_custom_call.1} parent=131 // pred_region
          %s3920 = sand.u32 %s190, 1
          %s3921 = scalar_lea.sflag [#allocation5], %s3920
          %s3922 = sand.u32 %s190, 1
          %s3923 = smul.addr %s3922, 16
          %s3924 = scalar_lea.vmem [#allocation4], %s3923
          %3926 = dma.done %s3921, 256
        $region136: #{tpu_custom_call.1} parent=131 // pred_fallthru
          _
        // Predicated region
        $region137: #{tpu_custom_call.1} parent=131 // pred_check
          %p3927 = pneg %p233
        $region138: #{tpu_custom_call.1} parent=131 // pred_check_branch
          %3929 = sbr.rel (%p3927) target = $region140
        $region139: #{tpu_custom_call.1} parent=131 // pred_region
          %s3930 = sand.u32 %s218, 1
          %s3931 = scalar_lea.sflag [#allocation7], %s3930
          %s3932 = sand.u32 %s218, 1
          %s3933 = smul.addr %s3932, 8
          %s3934 = scalar_lea.vmem [#allocation6], %s3933
          %3936 = dma.done %s3931, 128
        $region140: #{tpu_custom_call.1} parent=131 // pred_fallthru
          _
      $region132: #{tpu_custom_call.1} parent=5 // pred_fallthru
        _
    $region6: #{tpu_custom_call.1} parent=1 // loop_footer
      %s24 = sadd.s32 1, %s20
    $region7: #{tpu_custom_call.1} parent=1 // loop_footer_branch
      %19 = sbr.rel target = $region3
    $region8: #{tpu_custom_call.1} parent=1 // loop_exit
      _
    %3937 = vsyncpa [#allocation5], 1
    %s3938 = scalar_lea.sflag [#allocation5], 1
    %3939 = vsyncpa %s3938, 1
    %3940 = vsyncpa [#allocation7], 1
    %s3941 = scalar_lea.sflag [#allocation7], 1
    %3942 = vsyncpa %s3941, 1

</llo_original>
